<compile_context>
chip_gen: v5e
topology: v5e:2x2
jax: 0.10.0
libtpu: 0.0.40
codegen_flags: <defaults>
</compile_context>

<pallas_src>
import functools
import itertools

import jax
import jax.numpy as jnp
import numpy as np
from jax import lax
from jax.experimental import pallas as pl
from jax.experimental.pallas import tpu as pltpu


# ----------------------------- fused kernel ----------------------------------
def _fully_con3d_kernel(x_ref, sel_ref, wfc_ref, hid_ref, wblk_ref, mask_ref,
                        b_ref, o_ref, *, taps, nb, c_out, kin, cdt):
    """One batch group (nb rows) per grid step; all math on 2-D lane-dense tiles.

    x_ref   : (1, nb, K)                this group's rows of x
    sel_ref : (nb*C_out, C_out*K)       0/1 mask keeping the co-th K lane block
    wfc_ref : (C_out*K, DHW)            fc weight, lane-dense, rows (co, k)
    hid_ref : (1, nb*C_in, DHW)         hidden, spatial flattened on lanes
    wblk_ref: (k^3, nb*C_out, nb*C_in)  conv weight per tap, block-diag over nb
    mask_ref: (k^3, DHW)                1.0 where a tap reads a real voxel
    b_ref   : (nb*C_out, 1)             fc_bias per output row
    o_ref   : (1, nb*C_out, DHW)
    """
    hid = hid_ref[0]                                           # (nb*C_in, DHW)  f32
    x = x_ref[0]                                               # (nb, K)         f32

    # ---- fc(x): one lane-dense MXU matmul straight into the output layout ----
    # Xrep[(n,co), (co2,k)] = x[n,k] * delta(co,co2); rows ordered (n, co) to match
    # the conv / output row layout, so no per-channel slice/concat relayout later.
    x_t = jnp.concatenate([x] * c_out, axis=1)                 # (nb, C_out*K)
    rows = [jnp.broadcast_to(x_t[i:i + 1, :], (c_out, c_out * kin))
            for i in range(nb)]                                # sublane broadcasts
    x_rep = rows[0] if nb == 1 else jnp.concatenate(rows, axis=0)
    x_rep = x_rep * sel_ref[...]                               # keep co-th K block
    acc = jnp.dot(x_rep.astype(cdt), wfc_ref[...],
                  preferred_element_type=jnp.float32)          # (nb*C_out, DHW)
    acc = acc + b_ref[...]                                     # bias lane-broadcast

    # ---- conv3d: k^3 taps = XLU roll + border mask + tiny MXU matmul ---------
    for t, (shift, needs_mask) in enumerate(taps):             # static unroll
        win = hid if shift == 0 else pltpu.roll(hid, shift=shift, axis=1)
        if needs_mask:
            win = win * mask_ref[pl.ds(t, 1), :]               # zero out-of-volume taps
        acc = acc + jnp.dot(wblk_ref[t], win.astype(cdt),
                            preferred_element_type=jnp.float32)

    o_ref[0] = acc.astype(o_ref.dtype)


# ------------------------- static tap tables (numpy) --------------------------
def _tap_tables(d, h, w, ksz):
    """Per-tap (lane-roll shift, needs-border-mask) and validity masks (trace-time)."""
    pad = (ksz - 1) // 2
    dhw = d * h * w
    di, hi, wi = np.meshgrid(np.arange(d), np.arange(h), np.arange(w), indexing="ij")
    taps, masks = [], []
    for kd, kh, kw in itertools.product(range(ksz), repeat=3):
        off = (kd - pad) * h * w + (kh - pad) * w + (kw - pad)
        valid = ((di + kd - pad >= 0) & (di + kd - pad < d) &
                 (hi + kh - pad >= 0) & (hi + kh - pad < h) &
                 (wi + kw - pad >= 0) & (wi + kw - pad < w)).reshape(-1)
        # pltpu.roll(x, shift)[s] == x[(s - shift) % dhw] (jnp.roll semantics), so
        # shift = (-off) % dhw gives win[s] = hid[(s + off) % dhw].
        taps.append((int((-off) % dhw), not bool(valid.all())))
        masks.append(valid)
    return tuple(taps), np.stack(masks).astype(np.float32)      # (k^3, DHW)


# --------------------- generation-aware batch grouping ------------------------
def _default_batch_block(n, c_in, dhw):
    """Batch rows handled per grid step.

    v7x has two TensorCores per chip: keep the batch on a "parallel" grid so both
    cores get work.  v5e/v6e are single-core: collapse the grid to one step and
    fold the whole batch into the matmul M dimension (the ~0.35us per-step fixed
    overhead dominates at this kernel size).
    """
    try:
        kind = jax.devices()[0].device_kind.lower()
    except Exception:
        kind = ""
    nb = max(1, n // 2) if ("v7" in kind or "7x" in kind) else n
    # VMEM safety for large batches: keep the per-step hidden block modest.
    nb = min(nb, max(1, (4 << 20) // max(1, c_in * dhw * 4)))
    while n % nb:                                               # integral grid
        nb -= 1
    return nb


# ----------------------------- FullyCon3D forward ----------------------------
def fully_con3d_forward(x, hidden, params, output_shape, ksz, *,
                        batch_block=None, matmul_dtype=jnp.bfloat16):
    # Only odd conv kernels (PyTorch "same"-style padding (k-1)//2) are supported,
    # matching nn.Conv3d(C_in, C_out, k) in the spec.
    assert ksz % 2 == 1, "odd conv kernel sizes only"
    n, c_in, d, h, w = hidden.shape
    c_out = output_shape[1]
    dhw = d * h * w
    k3 = ksz ** 3
    f, kin = params["fc_w"].shape
    assert f == c_out * dhw

    nb = batch_block if batch_block is not None else _default_batch_block(n, c_in, dhw)
    assert n % nb == 0
    g = n // nb                                                  # grid size
    r_in, r_out = nb * c_in, nb * c_out

    taps, mask_np = _tap_tables(d, h, w, ksz)
    mask = jnp.asarray(mask_np)                                  # (k^3, DHW) f32

    # 0/1 constant selecting the co-th K lane block for output row (n, co).
    sel = jnp.asarray(np.tile(np.kron(np.eye(c_out, dtype=np.float32),
                                      np.ones((1, kin), np.float32)),
                              (nb, 1)))                          # (r_out, C_out*K)

    # Cheap wrapper glue: small weight permutes + contiguous (free) reshapes.
    w_taps = params["conv_w"].transpose(2, 3, 4, 0, 1).reshape(k3, c_out, c_in)
    wblk = jnp.einsum("tij,ab->taibj", w_taps, jnp.eye(nb, dtype=w_taps.dtype))
    wblk = wblk.reshape(k3, r_out, r_in).astype(matmul_dtype)    # block-diag taps
    wfc = (params["fc_w"].reshape(c_out, dhw, kin).transpose(0, 2, 1)
           .reshape(c_out * kin, dhw).astype(matmul_dtype))      # lane-dense fc weight
    bias = jnp.tile(params["fc_bias"].reshape(c_out, 1), (nb, 1))  # (r_out, 1)

    x3 = x.reshape(g, nb, kin)
    hid3 = hidden.reshape(g, r_in, dhw)                          # lane-dense hidden

    kern = functools.partial(_fully_con3d_kernel, taps=taps, nb=nb,
                             c_out=c_out, kin=kin, cdt=matmul_dtype)
    out = pl.pallas_call(
        kern,
        out_shape=jax.ShapeDtypeStruct((g, r_out, dhw), jnp.float32),
        grid=(g,),
        in_specs=[
            pl.BlockSpec((1, nb, kin), lambda b: (b, 0, 0)),         # x rows
            pl.BlockSpec((r_out, c_out * kin), lambda b: (0, 0)),    # channel select
            pl.BlockSpec((c_out * kin, dhw), lambda b: (0, 0)),      # fc weight (resident)
            pl.BlockSpec((1, r_in, dhw), lambda b: (b, 0, 0)),       # hidden rows
            pl.BlockSpec((k3, r_out, r_in), lambda b: (0, 0, 0)),    # conv taps (resident)
            pl.BlockSpec((k3, dhw), lambda b: (0, 0)),               # tap masks
            pl.BlockSpec((r_out, 1), lambda b: (0, 0)),              # fc_bias rows
        ],
        out_specs=pl.BlockSpec((1, r_out, dhw), lambda b: (b, 0, 0)),
        compiler_params=pltpu.CompilerParams(
            dimension_semantics=("parallel",)),                      # v7x: both TCs
    )(x3, sel, wfc, hid3, wblk, mask, bias)
    return out.reshape(n, c_out, d, h, w)


if __name__ == "__main__":
    # module config: FullyCon3D(input_shape=32, kernel_size=(4, 4, 3),
    #                           output_shape=[2, 4, 8, 8, 8])
    N, IN_FEAT = 2, 32
    C_IN, C_OUT, KSZ = 4, 4, 3
    D = H = W = 8
    output_shape = [N, C_OUT, D, H, W]
    fc_out = C_OUT * D * H * W

    key = jax.random.PRNGKey(0)
    key1, key2, key3, key4 = jax.random.split(key, 4)
    params = {
        # nn.Linear(input_shape, fc_out, bias=False): weight (fc_out, in)
        "fc_w": jax.random.normal(key1, (fc_out, IN_FEAT), jnp.float32) * 0.05,
        # nn.Parameter(torch.ones(1, C_out, 1, 1, 1))
        "fc_bias": jnp.ones((1, C_OUT, 1, 1, 1), jnp.float32),
        # nn.Conv3d(C_in, C_out, k, padding=(k-1)//2, bias=False): (O, I, k, k, k)
        "conv_w": jax.random.normal(key2, (C_OUT, C_IN, KSZ, KSZ, KSZ),
                                    jnp.float32) * 0.1,
    }
    x = jax.random.normal(key3, (N, IN_FEAT), jnp.float32)
    hidden = jax.random.normal(key4, (N, C_IN, D, H, W), jnp.float32)

    fwd = jax.jit(functools.partial(fully_con3d_forward,
                                    output_shape=output_shape, ksz=KSZ))
    out = jax.block_until_ready(fwd(x, hidden, params))

    # pure-JAX f32 reference check
    conv_ref = lax.conv_general_dilated(
        hidden, params["conv_w"], window_strides=(1, 1, 1),
        padding=[((KSZ - 1) // 2, (KSZ - 1) // 2)] * 3,
        dimension_numbers=("NCDHW", "OIDHW", "NCDHW"))
    fc_ref = (x @ params["fc_w"].T).reshape(-1, C_OUT, D, H, W)
    ref = conv_ref + fc_ref + params["fc_bias"]

    assert out.shape == tuple(output_shape)
    np.testing.assert_allclose(np.asarray(out), np.asarray(ref),
                               atol=1e-2, rtol=1e-2)
    print("KERNEL_OK")
</pallas_src>

<mosaic_0001>
module attributes {stable_mosaic.version = 11 : i64} {
  func.func @_fully_con3d_kernel(%arg0: i32, %arg1: memref<1x2x32xf32, #tpu.memory_space<vmem>>, %arg2: memref<8x128xf32, #tpu.memory_space<vmem>>, %arg3: memref<128x512xbf16, #tpu.memory_space<vmem>>, %arg4: memref<1x8x512xf32, #tpu.memory_space<vmem>>, %arg5: memref<27x8x8xbf16, #tpu.memory_space<vmem>>, %arg6: memref<27x512xf32, #tpu.memory_space<vmem>>, %arg7: memref<8x1xf32, #tpu.memory_space<vmem>>, %arg8: memref<1x8x512xf32, #tpu.memory_space<vmem>>) attributes {dimension_semantics = [#tpu.dimension_semantics<parallel>], iteration_bounds = array<i64: 1>, scalar_prefetch = 0 : i64, scratch_operands = 0 : i64, tpu.core_type = #tpu.core_type<tc>, window_params = [{transform_indices = @transform_0, window_bounds = array<i64: 1, 2, 32>}, {pipeline_mode = #tpu.pipeline_mode<synchronous>, transform_indices = @transform_1, window_bounds = array<i64: 8, 128>}, {pipeline_mode = #tpu.pipeline_mode<synchronous>, transform_indices = @transform_2, window_bounds = array<i64: 128, 512>}, {transform_indices = @transform_3, window_bounds = array<i64: 1, 8, 512>}, {pipeline_mode = #tpu.pipeline_mode<synchronous>, transform_indices = @transform_4, window_bounds = array<i64: 27, 8, 8>}, {pipeline_mode = #tpu.pipeline_mode<synchronous>, transform_indices = @transform_5, window_bounds = array<i64: 27, 512>}, {pipeline_mode = #tpu.pipeline_mode<synchronous>, transform_indices = @transform_6, window_bounds = array<i64: 8, 1>}, {transform_indices = @transform_7, window_bounds = array<i64: 1, 8, 512>}]} {
    %c0 = arith.constant 0 : index
    %c0_0 = arith.constant 0 : index
    %c0_1 = arith.constant 0 : index
    %0 = vector.load %arg4[%c0, %c0_0, %c0_1] : memref<1x8x512xf32, #tpu.memory_space<vmem>>, vector<1x8x512xf32>
    %1 = vector.shape_cast %0 : vector<1x8x512xf32> to vector<8x512xf32>
    %c0_2 = arith.constant 0 : index
    %c0_3 = arith.constant 0 : index
    %c0_4 = arith.constant 0 : index
    %2 = vector.load %arg1[%c0_2, %c0_3, %c0_4] : memref<1x2x32xf32, #tpu.memory_space<vmem>>, vector<1x2x32xf32>
    %3 = vector.shape_cast %2 : vector<1x2x32xf32> to vector<2x32xf32>
    %4 = tpu.concatenate %3, %3, %3, %3 in 1 : vector<2x32xf32>, vector<2x32xf32>, vector<2x32xf32>, vector<2x32xf32> -> vector<2x128xf32>
    %5 = vector.extract_strided_slice %4 {offsets = [0, 0], sizes = [1, 128], strides = [1, 1]} : vector<2x128xf32> to vector<1x128xf32>
    %6 = vector.shape_cast %5 : vector<1x128xf32> to vector<1x128xf32>
    %7 = vector.broadcast %6 : vector<1x128xf32> to vector<4x128xf32>
    %8 = vector.extract_strided_slice %4 {offsets = [1, 0], sizes = [1, 128], strides = [1, 1]} : vector<2x128xf32> to vector<1x128xf32>
    %9 = vector.shape_cast %8 : vector<1x128xf32> to vector<1x128xf32>
    %10 = vector.broadcast %9 : vector<1x128xf32> to vector<4x128xf32>
    %11 = tpu.concatenate %7, %10 in 0 : vector<4x128xf32>, vector<4x128xf32> -> vector<8x128xf32>
    %c0_5 = arith.constant 0 : index
    %c0_6 = arith.constant 0 : index
    %12 = vector.load %arg2[%c0_5, %c0_6] : memref<8x128xf32, #tpu.memory_space<vmem>>, vector<8x128xf32>
    %13 = arith.mulf %11, %12 : vector<8x128xf32>
    %14 = arith.truncf %13 : vector<8x128xf32> to vector<8x128xbf16>
    %c0_7 = arith.constant 0 : index
    %c0_8 = arith.constant 0 : index
    %15 = vector.load %arg3[%c0_7, %c0_8] : memref<128x512xbf16, #tpu.memory_space<vmem>>, vector<128x512xbf16>
    %cst = arith.constant dense<0.000000e+00> : vector<8x512xf32>
    %16 = tpu.matmul %14, %15, %cst {dimension_numbers = #tpu.dot_dimension_numbers<[1], [0], [0], [1], [0, 0, 1, 1], [], []>} : vector<8x128xbf16>, vector<128x512xbf16>, vector<8x512xf32> -> vector<8x512xf32>
    %c0_9 = arith.constant 0 : index
    %c0_10 = arith.constant 0 : index
    %17 = vector.load %arg7[%c0_9, %c0_10] : memref<8x1xf32, #tpu.memory_space<vmem>>, vector<8x1xf32>
    %18 = vector.broadcast %17 : vector<8x1xf32> to vector<8x512xf32>
    %19 = arith.addf %16, %18 : vector<8x512xf32>
    %c73_i32 = arith.constant 73 : i32
    %20 = tpu.dynamic_rotate %1 by %c73_i32 dim 1 : vector<8x512xf32>, i32 -> vector<8x512xf32>
    %c0_11 = arith.constant 0 : index
    %c0_12 = arith.constant 0 : index
    %21 = vector.load %arg6[%c0_11, %c0_12] : memref<27x512xf32, #tpu.memory_space<vmem>>, vector<1x512xf32>
    %22 = vector.broadcast %21 : vector<1x512xf32> to vector<8x512xf32>
    %23 = arith.mulf %20, %22 : vector<8x512xf32>
    %c0_13 = arith.constant 0 : index
    %c0_14 = arith.constant 0 : index
    %c0_15 = arith.constant 0 : index
    %24 = vector.load %arg5[%c0_13, %c0_14, %c0_15] : memref<27x8x8xbf16, #tpu.memory_space<vmem>>, vector<1x8x8xbf16>
    %25 = vector.shape_cast %24 : vector<1x8x8xbf16> to vector<8x8xbf16>
    %26 = arith.truncf %23 : vector<8x512xf32> to vector<8x512xbf16>
    %cst_16 = arith.constant dense<0.000000e+00> : vector<8x512xf32>
    %27 = tpu.matmul %25, %26, %cst_16 {dimension_numbers = #tpu.dot_dimension_numbers<[1], [0], [0], [1], [0, 0, 1, 1], [], []>} : vector<8x8xbf16>, vector<8x512xbf16>, vector<8x512xf32> -> vector<8x512xf32>
    %28 = arith.addf %19, %27 : vector<8x512xf32>
    %c72_i32 = arith.constant 72 : i32
    %29 = tpu.dynamic_rotate %1 by %c72_i32 dim 1 : vector<8x512xf32>, i32 -> vector<8x512xf32>
    %c1 = arith.constant 1 : index
    %c0_17 = arith.constant 0 : index
    %30 = vector.load %arg6[%c1, %c0_17] : memref<27x512xf32, #tpu.memory_space<vmem>>, vector<1x512xf32>
    %31 = vector.broadcast %30 : vector<1x512xf32> to vector<8x512xf32>
    %32 = arith.mulf %29, %31 : vector<8x512xf32>
    %c1_18 = arith.constant 1 : index
    %c0_19 = arith.constant 0 : index
    %c0_20 = arith.constant 0 : index
    %33 = vector.load %arg5[%c1_18, %c0_19, %c0_20] : memref<27x8x8xbf16, #tpu.memory_space<vmem>>, vector<1x8x8xbf16>
    %34 = vector.shape_cast %33 : vector<1x8x8xbf16> to vector<8x8xbf16>
    %35 = arith.truncf %32 : vector<8x512xf32> to vector<8x512xbf16>
    %cst_21 = arith.constant dense<0.000000e+00> : vector<8x512xf32>
    %36 = tpu.matmul %34, %35, %cst_21 {dimension_numbers = #tpu.dot_dimension_numbers<[1], [0], [0], [1], [0, 0, 1, 1], [], []>} : vector<8x8xbf16>, vector<8x512xbf16>, vector<8x512xf32> -> vector<8x512xf32>
    %37 = arith.addf %28, %36 : vector<8x512xf32>
    %c71_i32 = arith.constant 71 : i32
    %38 = tpu.dynamic_rotate %1 by %c71_i32 dim 1 : vector<8x512xf32>, i32 -> vector<8x512xf32>
    %c2 = arith.constant 2 : index
    %c0_22 = arith.constant 0 : index
    %39 = vector.load %arg6[%c2, %c0_22] : memref<27x512xf32, #tpu.memory_space<vmem>>, vector<1x512xf32>
    %40 = vector.broadcast %39 : vector<1x512xf32> to vector<8x512xf32>
    %41 = arith.mulf %38, %40 : vector<8x512xf32>
    %c2_23 = arith.constant 2 : index
    %c0_24 = arith.constant 0 : index
    %c0_25 = arith.constant 0 : index
    %42 = vector.load %arg5[%c2_23, %c0_24, %c0_25] : memref<27x8x8xbf16, #tpu.memory_space<vmem>>, vector<1x8x8xbf16>
    %43 = vector.shape_cast %42 : vector<1x8x8xbf16> to vector<8x8xbf16>
    %44 = arith.truncf %41 : vector<8x512xf32> to vector<8x512xbf16>
    %cst_26 = arith.constant dense<0.000000e+00> : vector<8x512xf32>
    %45 = tpu.matmul %43, %44, %cst_26 {dimension_numbers = #tpu.dot_dimension_numbers<[1], [0], [0], [1], [0, 0, 1, 1], [], []>} : vector<8x8xbf16>, vector<8x512xbf16>, vector<8x512xf32> -> vector<8x512xf32>
    %46 = arith.addf %37, %45 : vector<8x512xf32>
    %c65_i32 = arith.constant 65 : i32
    %47 = tpu.dynamic_rotate %1 by %c65_i32 dim 1 : vector<8x512xf32>, i32 -> vector<8x512xf32>
    %c3 = arith.constant 3 : index
    %c0_27 = arith.constant 0 : index
    %48 = vector.load %arg6[%c3, %c0_27] : memref<27x512xf32, #tpu.memory_space<vmem>>, vector<1x512xf32>
    %49 = vector.broadcast %48 : vector<1x512xf32> to vector<8x512xf32>
    %50 = arith.mulf %47, %49 : vector<8x512xf32>
    %c3_28 = arith.constant 3 : index
    %c0_29 = arith.constant 0 : index
    %c0_30 = arith.constant 0 : index
    %51 = vector.load %arg5[%c3_28, %c0_29, %c0_30] : memref<27x8x8xbf16, #tpu.memory_space<vmem>>, vector<1x8x8xbf16>
    %52 = vector.shape_cast %51 : vector<1x8x8xbf16> to vector<8x8xbf16>
    %53 = arith.truncf %50 : vector<8x512xf32> to vector<8x512xbf16>
    %cst_31 = arith.constant dense<0.000000e+00> : vector<8x512xf32>
    %54 = tpu.matmul %52, %53, %cst_31 {dimension_numbers = #tpu.dot_dimension_numbers<[1], [0], [0], [1], [0, 0, 1, 1], [], []>} : vector<8x8xbf16>, vector<8x512xbf16>, vector<8x512xf32> -> vector<8x512xf32>
    %55 = arith.addf %46, %54 : vector<8x512xf32>
    %c64_i32 = arith.constant 64 : i32
    %56 = tpu.dynamic_rotate %1 by %c64_i32 dim 1 : vector<8x512xf32>, i32 -> vector<8x512xf32>
    %c4 = arith.constant 4 : index
    %c0_32 = arith.constant 0 : index
    %57 = vector.load %arg6[%c4, %c0_32] : memref<27x512xf32, #tpu.memory_space<vmem>>, vector<1x512xf32>
    %58 = vector.broadcast %57 : vector<1x512xf32> to vector<8x512xf32>
    %59 = arith.mulf %56, %58 : vector<8x512xf32>
    %c4_33 = arith.constant 4 : index
    %c0_34 = arith.constant 0 : index
    %c0_35 = arith.constant 0 : index
    %60 = vector.load %arg5[%c4_33, %c0_34, %c0_35] : memref<27x8x8xbf16, #tpu.memory_space<vmem>>, vector<1x8x8xbf16>
    %61 = vector.shape_cast %60 : vector<1x8x8xbf16> to vector<8x8xbf16>
    %62 = arith.truncf %59 : vector<8x512xf32> to vector<8x512xbf16>
    %cst_36 = arith.constant dense<0.000000e+00> : vector<8x512xf32>
    %63 = tpu.matmul %61, %62, %cst_36 {dimension_numbers = #tpu.dot_dimension_numbers<[1], [0], [0], [1], [0, 0, 1, 1], [], []>} : vector<8x8xbf16>, vector<8x512xbf16>, vector<8x512xf32> -> vector<8x512xf32>
    %64 = arith.addf %55, %63 : vector<8x512xf32>
    %c63_i32 = arith.constant 63 : i32
    %65 = tpu.dynamic_rotate %1 by %c63_i32 dim 1 : vector<8x512xf32>, i32 -> vector<8x512xf32>
    %c5 = arith.constant 5 : index
    %c0_37 = arith.constant 0 : index
    %66 = vector.load %arg6[%c5, %c0_37] : memref<27x512xf32, #tpu.memory_space<vmem>>, vector<1x512xf32>
    %67 = vector.broadcast %66 : vector<1x512xf32> to vector<8x512xf32>
    %68 = arith.mulf %65, %67 : vector<8x512xf32>
    %c5_38 = arith.constant 5 : index
    %c0_39 = arith.constant 0 : index
    %c0_40 = arith.constant 0 : index
    %69 = vector.load %arg5[%c5_38, %c0_39, %c0_40] : memref<27x8x8xbf16, #tpu.memory_space<vmem>>, vector<1x8x8xbf16>
    %70 = vector.shape_cast %69 : vector<1x8x8xbf16> to vector<8x8xbf16>
    %71 = arith.truncf %68 : vector<8x512xf32> to vector<8x512xbf16>
    %cst_41 = arith.constant dense<0.000000e+00> : vector<8x512xf32>
    %72 = tpu.matmul %70, %71, %cst_41 {dimension_numbers = #tpu.dot_dimension_numbers<[1], [0], [0], [1], [0, 0, 1, 1], [], []>} : vector<8x8xbf16>, vector<8x512xbf16>, vector<8x512xf32> -> vector<8x512xf32>
    %73 = arith.addf %64, %72 : vector<8x512xf32>
    %c57_i32 = arith.constant 57 : i32
    %74 = tpu.dynamic_rotate %1 by %c57_i32 dim 1 : vector<8x512xf32>, i32 -> vector<8x512xf32>
    %c6 = arith.constant 6 : index
    %c0_42 = arith.constant 0 : index
    %75 = vector.load %arg6[%c6, %c0_42] : memref<27x512xf32, #tpu.memory_space<vmem>>, vector<1x512xf32>
    %76 = vector.broadcast %75 : vector<1x512xf32> to vector<8x512xf32>
    %77 = arith.mulf %74, %76 : vector<8x512xf32>
    %c6_43 = arith.constant 6 : index
    %c0_44 = arith.constant 0 : index
    %c0_45 = arith.constant 0 : index
    %78 = vector.load %arg5[%c6_43, %c0_44, %c0_45] : memref<27x8x8xbf16, #tpu.memory_space<vmem>>, vector<1x8x8xbf16>
    %79 = vector.shape_cast %78 : vector<1x8x8xbf16> to vector<8x8xbf16>
    %80 = arith.truncf %77 : vector<8x512xf32> to vector<8x512xbf16>
    %cst_46 = arith.constant dense<0.000000e+00> : vector<8x512xf32>
    %81 = tpu.matmul %79, %80, %cst_46 {dimension_numbers = #tpu.dot_dimension_numbers<[1], [0], [0], [1], [0, 0, 1, 1], [], []>} : vector<8x8xbf16>, vector<8x512xbf16>, vector<8x512xf32> -> vector<8x512xf32>
    %82 = arith.addf %73, %81 : vector<8x512xf32>
    %c56_i32 = arith.constant 56 : i32
    %83 = tpu.dynamic_rotate %1 by %c56_i32 dim 1 : vector<8x512xf32>, i32 -> vector<8x512xf32>
    %c7 = arith.constant 7 : index
    %c0_47 = arith.constant 0 : index
    %84 = vector.load %arg6[%c7, %c0_47] : memref<27x512xf32, #tpu.memory_space<vmem>>, vector<1x512xf32>
    %85 = vector.broadcast %84 : vector<1x512xf32> to vector<8x512xf32>
    %86 = arith.mulf %83, %85 : vector<8x512xf32>
    %c7_48 = arith.constant 7 : index
    %c0_49 = arith.constant 0 : index
    %c0_50 = arith.constant 0 : index
    %87 = vector.load %arg5[%c7_48, %c0_49, %c0_50] : memref<27x8x8xbf16, #tpu.memory_space<vmem>>, vector<1x8x8xbf16>
    %88 = vector.shape_cast %87 : vector<1x8x8xbf16> to vector<8x8xbf16>
    %89 = arith.truncf %86 : vector<8x512xf32> to vector<8x512xbf16>
    %cst_51 = arith.constant dense<0.000000e+00> : vector<8x512xf32>
    %90 = tpu.matmul %88, %89, %cst_51 {dimension_numbers = #tpu.dot_dimension_numbers<[1], [0], [0], [1], [0, 0, 1, 1], [], []>} : vector<8x8xbf16>, vector<8x512xbf16>, vector<8x512xf32> -> vector<8x512xf32>
    %91 = arith.addf %82, %90 : vector<8x512xf32>
    %c55_i32 = arith.constant 55 : i32
    %92 = tpu.dynamic_rotate %1 by %c55_i32 dim 1 : vector<8x512xf32>, i32 -> vector<8x512xf32>
    %c8 = arith.constant 8 : index
    %c0_52 = arith.constant 0 : index
    %93 = vector.load %arg6[%c8, %c0_52] : memref<27x512xf32, #tpu.memory_space<vmem>>, vector<1x512xf32>
    %94 = vector.broadcast %93 : vector<1x512xf32> to vector<8x512xf32>
    %95 = arith.mulf %92, %94 : vector<8x512xf32>
    %c8_53 = arith.constant 8 : index
    %c0_54 = arith.constant 0 : index
    %c0_55 = arith.constant 0 : index
    %96 = vector.load %arg5[%c8_53, %c0_54, %c0_55] : memref<27x8x8xbf16, #tpu.memory_space<vmem>>, vector<1x8x8xbf16>
    %97 = vector.shape_cast %96 : vector<1x8x8xbf16> to vector<8x8xbf16>
    %98 = arith.truncf %95 : vector<8x512xf32> to vector<8x512xbf16>
    %cst_56 = arith.constant dense<0.000000e+00> : vector<8x512xf32>
    %99 = tpu.matmul %97, %98, %cst_56 {dimension_numbers = #tpu.dot_dimension_numbers<[1], [0], [0], [1], [0, 0, 1, 1], [], []>} : vector<8x8xbf16>, vector<8x512xbf16>, vector<8x512xf32> -> vector<8x512xf32>
    %100 = arith.addf %91, %99 : vector<8x512xf32>
    %c9_i32 = arith.constant 9 : i32
    %101 = tpu.dynamic_rotate %1 by %c9_i32 dim 1 : vector<8x512xf32>, i32 -> vector<8x512xf32>
    %c9 = arith.constant 9 : index
    %c0_57 = arith.constant 0 : index
    %102 = vector.load %arg6[%c9, %c0_57] : memref<27x512xf32, #tpu.memory_space<vmem>>, vector<1x512xf32>
    %103 = vector.broadcast %102 : vector<1x512xf32> to vector<8x512xf32>
    %104 = arith.mulf %101, %103 : vector<8x512xf32>
    %c9_58 = arith.constant 9 : index
    %c0_59 = arith.constant 0 : index
    %c0_60 = arith.constant 0 : index
    %105 = vector.load %arg5[%c9_58, %c0_59, %c0_60] : memref<27x8x8xbf16, #tpu.memory_space<vmem>>, vector<1x8x8xbf16>
    %106 = vector.shape_cast %105 : vector<1x8x8xbf16> to vector<8x8xbf16>
    %107 = arith.truncf %104 : vector<8x512xf32> to vector<8x512xbf16>
    %cst_61 = arith.constant dense<0.000000e+00> : vector<8x512xf32>
    %108 = tpu.matmul %106, %107, %cst_61 {dimension_numbers = #tpu.dot_dimension_numbers<[1], [0], [0], [1], [0, 0, 1, 1], [], []>} : vector<8x8xbf16>, vector<8x512xbf16>, vector<8x512xf32> -> vector<8x512xf32>
    %109 = arith.addf %100, %108 : vector<8x512xf32>
    %c8_i32 = arith.constant 8 : i32
    %110 = tpu.dynamic_rotate %1 by %c8_i32 dim 1 : vector<8x512xf32>, i32 -> vector<8x512xf32>
    %c10 = arith.constant 10 : index
    %c0_62 = arith.constant 0 : index
    %111 = vector.load %arg6[%c10, %c0_62] : memref<27x512xf32, #tpu.memory_space<vmem>>, vector<1x512xf32>
    %112 = vector.broadcast %111 : vector<1x512xf32> to vector<8x512xf32>
    %113 = arith.mulf %110, %112 : vector<8x512xf32>
    %c10_63 = arith.constant 10 : index
    %c0_64 = arith.constant 0 : index
    %c0_65 = arith.constant 0 : index
    %114 = vector.load %arg5[%c10_63, %c0_64, %c0_65] : memref<27x8x8xbf16, #tpu.memory_space<vmem>>, vector<1x8x8xbf16>
    %115 = vector.shape_cast %114 : vector<1x8x8xbf16> to vector<8x8xbf16>
    %116 = arith.truncf %113 : vector<8x512xf32> to vector<8x512xbf16>
    %cst_66 = arith.constant dense<0.000000e+00> : vector<8x512xf32>
    %117 = tpu.matmul %115, %116, %cst_66 {dimension_numbers = #tpu.dot_dimension_numbers<[1], [0], [0], [1], [0, 0, 1, 1], [], []>} : vector<8x8xbf16>, vector<8x512xbf16>, vector<8x512xf32> -> vector<8x512xf32>
    %118 = arith.addf %109, %117 : vector<8x512xf32>
    %c7_i32 = arith.constant 7 : i32
    %119 = tpu.dynamic_rotate %1 by %c7_i32 dim 1 : vector<8x512xf32>, i32 -> vector<8x512xf32>
    %c11 = arith.constant 11 : index
    %c0_67 = arith.constant 0 : index
    %120 = vector.load %arg6[%c11, %c0_67] : memref<27x512xf32, #tpu.memory_space<vmem>>, vector<1x512xf32>
    %121 = vector.broadcast %120 : vector<1x512xf32> to vector<8x512xf32>
    %122 = arith.mulf %119, %121 : vector<8x512xf32>
    %c11_68 = arith.constant 11 : index
    %c0_69 = arith.constant 0 : index
    %c0_70 = arith.constant 0 : index
    %123 = vector.load %arg5[%c11_68, %c0_69, %c0_70] : memref<27x8x8xbf16, #tpu.memory_space<vmem>>, vector<1x8x8xbf16>
    %124 = vector.shape_cast %123 : vector<1x8x8xbf16> to vector<8x8xbf16>
    %125 = arith.truncf %122 : vector<8x512xf32> to vector<8x512xbf16>
    %cst_71 = arith.constant dense<0.000000e+00> : vector<8x512xf32>
    %126 = tpu.matmul %124, %125, %cst_71 {dimension_numbers = #tpu.dot_dimension_numbers<[1], [0], [0], [1], [0, 0, 1, 1], [], []>} : vector<8x8xbf16>, vector<8x512xbf16>, vector<8x512xf32> -> vector<8x512xf32>
    %127 = arith.addf %118, %126 : vector<8x512xf32>
    %c1_i32 = arith.constant 1 : i32
    %128 = tpu.dynamic_rotate %1 by %c1_i32 dim 1 : vector<8x512xf32>, i32 -> vector<8x512xf32>
    %c12 = arith.constant 12 : index
    %c0_72 = arith.constant 0 : index
    %129 = vector.load %arg6[%c12, %c0_72] : memref<27x512xf32, #tpu.memory_space<vmem>>, vector<1x512xf32>
    %130 = vector.broadcast %129 : vector<1x512xf32> to vector<8x512xf32>
    %131 = arith.mulf %128, %130 : vector<8x512xf32>
    %c12_73 = arith.constant 12 : index
    %c0_74 = arith.constant 0 : index
    %c0_75 = arith.constant 0 : index
    %132 = vector.load %arg5[%c12_73, %c0_74, %c0_75] : memref<27x8x8xbf16, #tpu.memory_space<vmem>>, vector<1x8x8xbf16>
    %133 = vector.shape_cast %132 : vector<1x8x8xbf16> to vector<8x8xbf16>
    %134 = arith.truncf %131 : vector<8x512xf32> to vector<8x512xbf16>
    %cst_76 = arith.constant dense<0.000000e+00> : vector<8x512xf32>
    %135 = tpu.matmul %133, %134, %cst_76 {dimension_numbers = #tpu.dot_dimension_numbers<[1], [0], [0], [1], [0, 0, 1, 1], [], []>} : vector<8x8xbf16>, vector<8x512xbf16>, vector<8x512xf32> -> vector<8x512xf32>
    %136 = arith.addf %127, %135 : vector<8x512xf32>
    %c13 = arith.constant 13 : index
    %c0_77 = arith.constant 0 : index
    %c0_78 = arith.constant 0 : index
    %137 = vector.load %arg5[%c13, %c0_77, %c0_78] : memref<27x8x8xbf16, #tpu.memory_space<vmem>>, vector<1x8x8xbf16>
    %138 = vector.shape_cast %137 : vector<1x8x8xbf16> to vector<8x8xbf16>
    %139 = arith.truncf %1 : vector<8x512xf32> to vector<8x512xbf16>
    %cst_79 = arith.constant dense<0.000000e+00> : vector<8x512xf32>
    %140 = tpu.matmul %138, %139, %cst_79 {dimension_numbers = #tpu.dot_dimension_numbers<[1], [0], [0], [1], [0, 0, 1, 1], [], []>} : vector<8x8xbf16>, vector<8x512xbf16>, vector<8x512xf32> -> vector<8x512xf32>
    %141 = arith.addf %136, %140 : vector<8x512xf32>
    %c511_i32 = arith.constant 511 : i32
    %142 = tpu.dynamic_rotate %1 by %c511_i32 dim 1 : vector<8x512xf32>, i32 -> vector<8x512xf32>
    %c14 = arith.constant 14 : index
    %c0_80 = arith.constant 0 : index
    %143 = vector.load %arg6[%c14, %c0_80] : memref<27x512xf32, #tpu.memory_space<vmem>>, vector<1x512xf32>
    %144 = vector.broadcast %143 : vector<1x512xf32> to vector<8x512xf32>
    %145 = arith.mulf %142, %144 : vector<8x512xf32>
    %c14_81 = arith.constant 14 : index
    %c0_82 = arith.constant 0 : index
    %c0_83 = arith.constant 0 : index
    %146 = vector.load %arg5[%c14_81, %c0_82, %c0_83] : memref<27x8x8xbf16, #tpu.memory_space<vmem>>, vector<1x8x8xbf16>
    %147 = vector.shape_cast %146 : vector<1x8x8xbf16> to vector<8x8xbf16>
    %148 = arith.truncf %145 : vector<8x512xf32> to vector<8x512xbf16>
    %cst_84 = arith.constant dense<0.000000e+00> : vector<8x512xf32>
    %149 = tpu.matmul %147, %148, %cst_84 {dimension_numbers = #tpu.dot_dimension_numbers<[1], [0], [0], [1], [0, 0, 1, 1], [], []>} : vector<8x8xbf16>, vector<8x512xbf16>, vector<8x512xf32> -> vector<8x512xf32>
    %150 = arith.addf %141, %149 : vector<8x512xf32>
    %c505_i32 = arith.constant 505 : i32
    %151 = tpu.dynamic_rotate %1 by %c505_i32 dim 1 : vector<8x512xf32>, i32 -> vector<8x512xf32>
    %c15 = arith.constant 15 : index
    %c0_85 = arith.constant 0 : index
    %152 = vector.load %arg6[%c15, %c0_85] : memref<27x512xf32, #tpu.memory_space<vmem>>, vector<1x512xf32>
    %153 = vector.broadcast %152 : vector<1x512xf32> to vector<8x512xf32>
    %154 = arith.mulf %151, %153 : vector<8x512xf32>
    %c15_86 = arith.constant 15 : index
    %c0_87 = arith.constant 0 : index
    %c0_88 = arith.constant 0 : index
    %155 = vector.load %arg5[%c15_86, %c0_87, %c0_88] : memref<27x8x8xbf16, #tpu.memory_space<vmem>>, vector<1x8x8xbf16>
    %156 = vector.shape_cast %155 : vector<1x8x8xbf16> to vector<8x8xbf16>
    %157 = arith.truncf %154 : vector<8x512xf32> to vector<8x512xbf16>
    %cst_89 = arith.constant dense<0.000000e+00> : vector<8x512xf32>
    %158 = tpu.matmul %156, %157, %cst_89 {dimension_numbers = #tpu.dot_dimension_numbers<[1], [0], [0], [1], [0, 0, 1, 1], [], []>} : vector<8x8xbf16>, vector<8x512xbf16>, vector<8x512xf32> -> vector<8x512xf32>
    %159 = arith.addf %150, %158 : vector<8x512xf32>
    %c504_i32 = arith.constant 504 : i32
    %160 = tpu.dynamic_rotate %1 by %c504_i32 dim 1 : vector<8x512xf32>, i32 -> vector<8x512xf32>
    %c16 = arith.constant 16 : index
    %c0_90 = arith.constant 0 : index
    %161 = vector.load %arg6[%c16, %c0_90] : memref<27x512xf32, #tpu.memory_space<vmem>>, vector<1x512xf32>
    %162 = vector.broadcast %161 : vector<1x512xf32> to vector<8x512xf32>
    %163 = arith.mulf %160, %162 : vector<8x512xf32>
    %c16_91 = arith.constant 16 : index
    %c0_92 = arith.constant 0 : index
    %c0_93 = arith.constant 0 : index
    %164 = vector.load %arg5[%c16_91, %c0_92, %c0_93] : memref<27x8x8xbf16, #tpu.memory_space<vmem>>, vector<1x8x8xbf16>
    %165 = vector.shape_cast %164 : vector<1x8x8xbf16> to vector<8x8xbf16>
    %166 = arith.truncf %163 : vector<8x512xf32> to vector<8x512xbf16>
    %cst_94 = arith.constant dense<0.000000e+00> : vector<8x512xf32>
    %167 = tpu.matmul %165, %166, %cst_94 {dimension_numbers = #tpu.dot_dimension_numbers<[1], [0], [0], [1], [0, 0, 1, 1], [], []>} : vector<8x8xbf16>, vector<8x512xbf16>, vector<8x512xf32> -> vector<8x512xf32>
    %168 = arith.addf %159, %167 : vector<8x512xf32>
    %c503_i32 = arith.constant 503 : i32
    %169 = tpu.dynamic_rotate %1 by %c503_i32 dim 1 : vector<8x512xf32>, i32 -> vector<8x512xf32>
    %c17 = arith.constant 17 : index
    %c0_95 = arith.constant 0 : index
    %170 = vector.load %arg6[%c17, %c0_95] : memref<27x512xf32, #tpu.memory_space<vmem>>, vector<1x512xf32>
    %171 = vector.broadcast %170 : vector<1x512xf32> to vector<8x512xf32>
    %172 = arith.mulf %169, %171 : vector<8x512xf32>
    %c17_96 = arith.constant 17 : index
    %c0_97 = arith.constant 0 : index
    %c0_98 = arith.constant 0 : index
    %173 = vector.load %arg5[%c17_96, %c0_97, %c0_98] : memref<27x8x8xbf16, #tpu.memory_space<vmem>>, vector<1x8x8xbf16>
    %174 = vector.shape_cast %173 : vector<1x8x8xbf16> to vector<8x8xbf16>
    %175 = arith.truncf %172 : vector<8x512xf32> to vector<8x512xbf16>
    %cst_99 = arith.constant dense<0.000000e+00> : vector<8x512xf32>
    %176 = tpu.matmul %174, %175, %cst_99 {dimension_numbers = #tpu.dot_dimension_numbers<[1], [0], [0], [1], [0, 0, 1, 1], [], []>} : vector<8x8xbf16>, vector<8x512xbf16>, vector<8x512xf32> -> vector<8x512xf32>
    %177 = arith.addf %168, %176 : vector<8x512xf32>
    %c457_i32 = arith.constant 457 : i32
    %178 = tpu.dynamic_rotate %1 by %c457_i32 dim 1 : vector<8x512xf32>, i32 -> vector<8x512xf32>
    %c18 = arith.constant 18 : index
    %c0_100 = arith.constant 0 : index
    %179 = vector.load %arg6[%c18, %c0_100] : memref<27x512xf32, #tpu.memory_space<vmem>>, vector<1x512xf32>
    %180 = vector.broadcast %179 : vector<1x512xf32> to vector<8x512xf32>
    %181 = arith.mulf %178, %180 : vector<8x512xf32>
    %c18_101 = arith.constant 18 : index
    %c0_102 = arith.constant 0 : index
    %c0_103 = arith.constant 0 : index
    %182 = vector.load %arg5[%c18_101, %c0_102, %c0_103] : memref<27x8x8xbf16, #tpu.memory_space<vmem>>, vector<1x8x8xbf16>
    %183 = vector.shape_cast %182 : vector<1x8x8xbf16> to vector<8x8xbf16>
    %184 = arith.truncf %181 : vector<8x512xf32> to vector<8x512xbf16>
    %cst_104 = arith.constant dense<0.000000e+00> : vector<8x512xf32>
    %185 = tpu.matmul %183, %184, %cst_104 {dimension_numbers = #tpu.dot_dimension_numbers<[1], [0], [0], [1], [0, 0, 1, 1], [], []>} : vector<8x8xbf16>, vector<8x512xbf16>, vector<8x512xf32> -> vector<8x512xf32>
    %186 = arith.addf %177, %185 : vector<8x512xf32>
    %c456_i32 = arith.constant 456 : i32
    %187 = tpu.dynamic_rotate %1 by %c456_i32 dim 1 : vector<8x512xf32>, i32 -> vector<8x512xf32>
    %c19 = arith.constant 19 : index
    %c0_105 = arith.constant 0 : index
    %188 = vector.load %arg6[%c19, %c0_105] : memref<27x512xf32, #tpu.memory_space<vmem>>, vector<1x512xf32>
    %189 = vector.broadcast %188 : vector<1x512xf32> to vector<8x512xf32>
    %190 = arith.mulf %187, %189 : vector<8x512xf32>
    %c19_106 = arith.constant 19 : index
    %c0_107 = arith.constant 0 : index
    %c0_108 = arith.constant 0 : index
    %191 = vector.load %arg5[%c19_106, %c0_107, %c0_108] : memref<27x8x8xbf16, #tpu.memory_space<vmem>>, vector<1x8x8xbf16>
    %192 = vector.shape_cast %191 : vector<1x8x8xbf16> to vector<8x8xbf16>
    %193 = arith.truncf %190 : vector<8x512xf32> to vector<8x512xbf16>
    %cst_109 = arith.constant dense<0.000000e+00> : vector<8x512xf32>
    %194 = tpu.matmul %192, %193, %cst_109 {dimension_numbers = #tpu.dot_dimension_numbers<[1], [0], [0], [1], [0, 0, 1, 1], [], []>} : vector<8x8xbf16>, vector<8x512xbf16>, vector<8x512xf32> -> vector<8x512xf32>
    %195 = arith.addf %186, %194 : vector<8x512xf32>
    %c455_i32 = arith.constant 455 : i32
    %196 = tpu.dynamic_rotate %1 by %c455_i32 dim 1 : vector<8x512xf32>, i32 -> vector<8x512xf32>
    %c20 = arith.constant 20 : index
    %c0_110 = arith.constant 0 : index
    %197 = vector.load %arg6[%c20, %c0_110] : memref<27x512xf32, #tpu.memory_space<vmem>>, vector<1x512xf32>
    %198 = vector.broadcast %197 : vector<1x512xf32> to vector<8x512xf32>
    %199 = arith.mulf %196, %198 : vector<8x512xf32>
    %c20_111 = arith.constant 20 : index
    %c0_112 = arith.constant 0 : index
    %c0_113 = arith.constant 0 : index
    %200 = vector.load %arg5[%c20_111, %c0_112, %c0_113] : memref<27x8x8xbf16, #tpu.memory_space<vmem>>, vector<1x8x8xbf16>
    %201 = vector.shape_cast %200 : vector<1x8x8xbf16> to vector<8x8xbf16>
    %202 = arith.truncf %199 : vector<8x512xf32> to vector<8x512xbf16>
    %cst_114 = arith.constant dense<0.000000e+00> : vector<8x512xf32>
    %203 = tpu.matmul %201, %202, %cst_114 {dimension_numbers = #tpu.dot_dimension_numbers<[1], [0], [0], [1], [0, 0, 1, 1], [], []>} : vector<8x8xbf16>, vector<8x512xbf16>, vector<8x512xf32> -> vector<8x512xf32>
    %204 = arith.addf %195, %203 : vector<8x512xf32>
    %c449_i32 = arith.constant 449 : i32
    %205 = tpu.dynamic_rotate %1 by %c449_i32 dim 1 : vector<8x512xf32>, i32 -> vector<8x512xf32>
    %c21 = arith.constant 21 : index
    %c0_115 = arith.constant 0 : index
    %206 = vector.load %arg6[%c21, %c0_115] : memref<27x512xf32, #tpu.memory_space<vmem>>, vector<1x512xf32>
    %207 = vector.broadcast %206 : vector<1x512xf32> to vector<8x512xf32>
    %208 = arith.mulf %205, %207 : vector<8x512xf32>
    %c21_116 = arith.constant 21 : index
    %c0_117 = arith.constant 0 : index
    %c0_118 = arith.constant 0 : index
    %209 = vector.load %arg5[%c21_116, %c0_117, %c0_118] : memref<27x8x8xbf16, #tpu.memory_space<vmem>>, vector<1x8x8xbf16>
    %210 = vector.shape_cast %209 : vector<1x8x8xbf16> to vector<8x8xbf16>
    %211 = arith.truncf %208 : vector<8x512xf32> to vector<8x512xbf16>
    %cst_119 = arith.constant dense<0.000000e+00> : vector<8x512xf32>
    %212 = tpu.matmul %210, %211, %cst_119 {dimension_numbers = #tpu.dot_dimension_numbers<[1], [0], [0], [1], [0, 0, 1, 1], [], []>} : vector<8x8xbf16>, vector<8x512xbf16>, vector<8x512xf32> -> vector<8x512xf32>
    %213 = arith.addf %204, %212 : vector<8x512xf32>
    %c448_i32 = arith.constant 448 : i32
    %214 = tpu.dynamic_rotate %1 by %c448_i32 dim 1 : vector<8x512xf32>, i32 -> vector<8x512xf32>
    %c22 = arith.constant 22 : index
    %c0_120 = arith.constant 0 : index
    %215 = vector.load %arg6[%c22, %c0_120] : memref<27x512xf32, #tpu.memory_space<vmem>>, vector<1x512xf32>
    %216 = vector.broadcast %215 : vector<1x512xf32> to vector<8x512xf32>
    %217 = arith.mulf %214, %216 : vector<8x512xf32>
    %c22_121 = arith.constant 22 : index
    %c0_122 = arith.constant 0 : index
    %c0_123 = arith.constant 0 : index
    %218 = vector.load %arg5[%c22_121, %c0_122, %c0_123] : memref<27x8x8xbf16, #tpu.memory_space<vmem>>, vector<1x8x8xbf16>
    %219 = vector.shape_cast %218 : vector<1x8x8xbf16> to vector<8x8xbf16>
    %220 = arith.truncf %217 : vector<8x512xf32> to vector<8x512xbf16>
    %cst_124 = arith.constant dense<0.000000e+00> : vector<8x512xf32>
    %221 = tpu.matmul %219, %220, %cst_124 {dimension_numbers = #tpu.dot_dimension_numbers<[1], [0], [0], [1], [0, 0, 1, 1], [], []>} : vector<8x8xbf16>, vector<8x512xbf16>, vector<8x512xf32> -> vector<8x512xf32>
    %222 = arith.addf %213, %221 : vector<8x512xf32>
    %c447_i32 = arith.constant 447 : i32
    %223 = tpu.dynamic_rotate %1 by %c447_i32 dim 1 : vector<8x512xf32>, i32 -> vector<8x512xf32>
    %c23 = arith.constant 23 : index
    %c0_125 = arith.constant 0 : index
    %224 = vector.load %arg6[%c23, %c0_125] : memref<27x512xf32, #tpu.memory_space<vmem>>, vector<1x512xf32>
    %225 = vector.broadcast %224 : vector<1x512xf32> to vector<8x512xf32>
    %226 = arith.mulf %223, %225 : vector<8x512xf32>
    %c23_126 = arith.constant 23 : index
    %c0_127 = arith.constant 0 : index
    %c0_128 = arith.constant 0 : index
    %227 = vector.load %arg5[%c23_126, %c0_127, %c0_128] : memref<27x8x8xbf16, #tpu.memory_space<vmem>>, vector<1x8x8xbf16>
    %228 = vector.shape_cast %227 : vector<1x8x8xbf16> to vector<8x8xbf16>
    %229 = arith.truncf %226 : vector<8x512xf32> to vector<8x512xbf16>
    %cst_129 = arith.constant dense<0.000000e+00> : vector<8x512xf32>
    %230 = tpu.matmul %228, %229, %cst_129 {dimension_numbers = #tpu.dot_dimension_numbers<[1], [0], [0], [1], [0, 0, 1, 1], [], []>} : vector<8x8xbf16>, vector<8x512xbf16>, vector<8x512xf32> -> vector<8x512xf32>
    %231 = arith.addf %222, %230 : vector<8x512xf32>
    %c441_i32 = arith.constant 441 : i32
    %232 = tpu.dynamic_rotate %1 by %c441_i32 dim 1 : vector<8x512xf32>, i32 -> vector<8x512xf32>
    %c24 = arith.constant 24 : index
    %c0_130 = arith.constant 0 : index
    %233 = vector.load %arg6[%c24, %c0_130] : memref<27x512xf32, #tpu.memory_space<vmem>>, vector<1x512xf32>
    %234 = vector.broadcast %233 : vector<1x512xf32> to vector<8x512xf32>
    %235 = arith.mulf %232, %234 : vector<8x512xf32>
    %c24_131 = arith.constant 24 : index
    %c0_132 = arith.constant 0 : index
    %c0_133 = arith.constant 0 : index
    %236 = vector.load %arg5[%c24_131, %c0_132, %c0_133] : memref<27x8x8xbf16, #tpu.memory_space<vmem>>, vector<1x8x8xbf16>
    %237 = vector.shape_cast %236 : vector<1x8x8xbf16> to vector<8x8xbf16>
    %238 = arith.truncf %235 : vector<8x512xf32> to vector<8x512xbf16>
    %cst_134 = arith.constant dense<0.000000e+00> : vector<8x512xf32>
    %239 = tpu.matmul %237, %238, %cst_134 {dimension_numbers = #tpu.dot_dimension_numbers<[1], [0], [0], [1], [0, 0, 1, 1], [], []>} : vector<8x8xbf16>, vector<8x512xbf16>, vector<8x512xf32> -> vector<8x512xf32>
    %240 = arith.addf %231, %239 : vector<8x512xf32>
    %c440_i32 = arith.constant 440 : i32
    %241 = tpu.dynamic_rotate %1 by %c440_i32 dim 1 : vector<8x512xf32>, i32 -> vector<8x512xf32>
    %c25 = arith.constant 25 : index
    %c0_135 = arith.constant 0 : index
    %242 = vector.load %arg6[%c25, %c0_135] : memref<27x512xf32, #tpu.memory_space<vmem>>, vector<1x512xf32>
    %243 = vector.broadcast %242 : vector<1x512xf32> to vector<8x512xf32>
    %244 = arith.mulf %241, %243 : vector<8x512xf32>
    %c25_136 = arith.constant 25 : index
    %c0_137 = arith.constant 0 : index
    %c0_138 = arith.constant 0 : index
    %245 = vector.load %arg5[%c25_136, %c0_137, %c0_138] : memref<27x8x8xbf16, #tpu.memory_space<vmem>>, vector<1x8x8xbf16>
    %246 = vector.shape_cast %245 : vector<1x8x8xbf16> to vector<8x8xbf16>
    %247 = arith.truncf %244 : vector<8x512xf32> to vector<8x512xbf16>
    %cst_139 = arith.constant dense<0.000000e+00> : vector<8x512xf32>
    %248 = tpu.matmul %246, %247, %cst_139 {dimension_numbers = #tpu.dot_dimension_numbers<[1], [0], [0], [1], [0, 0, 1, 1], [], []>} : vector<8x8xbf16>, vector<8x512xbf16>, vector<8x512xf32> -> vector<8x512xf32>
    %249 = arith.addf %240, %248 : vector<8x512xf32>
    %c439_i32 = arith.constant 439 : i32
    %250 = tpu.dynamic_rotate %1 by %c439_i32 dim 1 : vector<8x512xf32>, i32 -> vector<8x512xf32>
    %c26 = arith.constant 26 : index
    %c0_140 = arith.constant 0 : index
    %251 = vector.load %arg6[%c26, %c0_140] : memref<27x512xf32, #tpu.memory_space<vmem>>, vector<1x512xf32>
    %252 = vector.broadcast %251 : vector<1x512xf32> to vector<8x512xf32>
    %253 = arith.mulf %250, %252 : vector<8x512xf32>
    %c26_141 = arith.constant 26 : index
    %c0_142 = arith.constant 0 : index
    %c0_143 = arith.constant 0 : index
    %254 = vector.load %arg5[%c26_141, %c0_142, %c0_143] : memref<27x8x8xbf16, #tpu.memory_space<vmem>>, vector<1x8x8xbf16>
    %255 = vector.shape_cast %254 : vector<1x8x8xbf16> to vector<8x8xbf16>
    %256 = arith.truncf %253 : vector<8x512xf32> to vector<8x512xbf16>
    %cst_144 = arith.constant dense<0.000000e+00> : vector<8x512xf32>
    %257 = tpu.matmul %255, %256, %cst_144 {dimension_numbers = #tpu.dot_dimension_numbers<[1], [0], [0], [1], [0, 0, 1, 1], [], []>} : vector<8x8xbf16>, vector<8x512xbf16>, vector<8x512xf32> -> vector<8x512xf32>
    %258 = arith.addf %249, %257 : vector<8x512xf32>
    %c0_145 = arith.constant 0 : index
    %c0_146 = arith.constant 0 : index
    %c0_147 = arith.constant 0 : index
    %259 = vector.load %arg8[%c0_145, %c0_146, %c0_147] : memref<1x8x512xf32, #tpu.memory_space<vmem>>, vector<1x8x512xf32>
    %260 = vector.shape_cast %259 : vector<1x8x512xf32> to vector<8x512xf32>
    %261 = vector.shape_cast %258 : vector<8x512xf32> to vector<1x8x512xf32>
    tpu.vector_store %arg8[%c0_145, %c0_146, %c0_147], %261 {strides = array<i32>} : memref<1x8x512xf32, #tpu.memory_space<vmem>>, vector<1x8x512xf32>,
    return
  }
  func.func @transform_0(%arg0: i32) -> (i32, i32, i32) {
    %c0_i32 = arith.constant 0 : i32
    %c0_i32_0 = arith.constant 0 : i32
    %c0_i32_1 = arith.constant 0 : i32
    return %arg0, %c0_i32, %c0_i32_0 : i32, i32, i32
  }
  func.func @transform_1(%arg0: i32) -> (i32, i32) {
    %c0_i32 = arith.constant 0 : i32
    %c0_i32_0 = arith.constant 0 : i32
    %c0_i32_1 = arith.constant 0 : i32
    return %c0_i32, %c0_i32_0 : i32, i32
  }
  func.func @transform_2(%arg0: i32) -> (i32, i32) {
    %c0_i32 = arith.constant 0 : i32
    %c0_i32_0 = arith.constant 0 : i32
    %c0_i32_1 = arith.constant 0 : i32
    return %c0_i32, %c0_i32_0 : i32, i32
  }
  func.func @transform_3(%arg0: i32) -> (i32, i32, i32) {
    %c0_i32 = arith.constant 0 : i32
    %c0_i32_0 = arith.constant 0 : i32
    %c0_i32_1 = arith.constant 0 : i32
    return %arg0, %c0_i32, %c0_i32_0 : i32, i32, i32
  }
  func.func @transform_4(%arg0: i32) -> (i32, i32, i32) {
    %c0_i32 = arith.constant 0 : i32
    %c0_i32_0 = arith.constant 0 : i32
    %c0_i32_1 = arith.constant 0 : i32
    %c0_i32_2 = arith.constant 0 : i32
    return %c0_i32, %c0_i32_0, %c0_i32_1 : i32, i32, i32
  }
  func.func @transform_5(%arg0: i32) -> (i32, i32) {
    %c0_i32 = arith.constant 0 : i32
    %c0_i32_0 = arith.constant 0 : i32
    %c0_i32_1 = arith.constant 0 : i32
    return %c0_i32, %c0_i32_0 : i32, i32
  }
  func.func @transform_6(%arg0: i32) -> (i32, i32) {
    %c0_i32 = arith.constant 0 : i32
    %c0_i32_0 = arith.constant 0 : i32
    %c0_i32_1 = arith.constant 0 : i32
    return %c0_i32, %c0_i32_0 : i32, i32
  }
  func.func @transform_7(%arg0: i32) -> (i32, i32, i32) {
    %c0_i32 = arith.constant 0 : i32
    %c0_i32_0 = arith.constant 0 : i32
    %c0_i32_1 = arith.constant 0 : i32
    return %arg0, %c0_i32, %c0_i32_0 : i32, i32, i32
  }
}

</mosaic_0001>

<llo_original>
// kernel: fully_con3d_forward.1
$region0: #{fully_con3d_forward.1}
  #allocation0 [shape = 'u32[]', space=smem, size = 0x4, offset = 0x4, fixed_abs, tag = 'smem constant byte address 0x4 - core index']
  #allocation1 [shape = 'u32[72,128]{1,0:T(1,128)}', space=vmem, size = 0x9000, scoped, tag = 'internal scratch']
  %s0 = inlined_call_operand.vmem [shape: f32[1,2,32], index: 0, kind: input, shape index: {}]
  %s1 = inlined_call_operand.vmem [shape: f32[8,128], index: 1, kind: input, shape index: {}]
  %s2 = inlined_call_operand.vmem [shape: bf16[128,512], index: 2, kind: input, shape index: {}]
  %s3 = inlined_call_operand.vmem [shape: f32[1,8,512], index: 3, kind: input, shape index: {}]
  %s4 = inlined_call_operand.vmem [shape: bf16[27,8,8], index: 4, kind: input, shape index: {}]
  %s5 = inlined_call_operand.vmem [shape: f32[27,512], index: 5, kind: input, shape index: {}]
  %s6 = inlined_call_operand.vmem [shape: f32[8,1], index: 6, kind: input, shape index: {}]
  %s7 = inlined_call_operand.vmem [shape: f32[1,8,512], index: 7, kind: output, shape index: {}]
  %s8 = sld [smem:[#allocation0]]
  $region38: #{fully_con3d_forward.1} parent=0
    _
  %s10 = ssub.s32 1, %s8
  %s11 = scalar_select 0, %s10, %s8
  // Predicated region
  $region2: #{fully_con3d_forward.1} parent=0 // pred_check
    _
  $region3: #{fully_con3d_forward.1} parent=0 // pred_check_branch
    %13 = sbr.rel (0) target = $region5
  $region4: #{fully_con3d_forward.1} parent=0 // pred_region
    _
  $region5: #{fully_con3d_forward.1} parent=0 // pred_fallthru
    _
  // Predicated region
  $region6: #{fully_con3d_forward.1} parent=0 // pred_check
    _
  $region7: #{fully_con3d_forward.1} parent=0 // pred_check_branch
    %15 = sbr.rel (0) target = $region9
  $region8: #{fully_con3d_forward.1} parent=0 // pred_region
    _
  $region9: #{fully_con3d_forward.1} parent=0 // pred_fallthru
    _
  // Predicated region
  $region10: #{fully_con3d_forward.1} parent=0 // pred_check
    _
  $region11: #{fully_con3d_forward.1} parent=0 // pred_check_branch
    %17 = sbr.rel (0) target = $region13
  $region12: #{fully_con3d_forward.1} parent=0 // pred_region
    _
  $region13: #{fully_con3d_forward.1} parent=0 // pred_fallthru
    _
  // Predicated region
  $region14: #{fully_con3d_forward.1} parent=0 // pred_check
    _
  $region15: #{fully_con3d_forward.1} parent=0 // pred_check_branch
    %19 = sbr.rel (0) target = $region17
  $region16: #{fully_con3d_forward.1} parent=0 // pred_region
    _
  $region17: #{fully_con3d_forward.1} parent=0 // pred_fallthru
    _
  // Predicated region
  $region18: #{fully_con3d_forward.1} parent=0 // pred_check
    _
  $region19: #{fully_con3d_forward.1} parent=0 // pred_check_branch
    %21 = sbr.rel (0) target = $region21
  $region20: #{fully_con3d_forward.1} parent=0 // pred_region
    _
  $region21: #{fully_con3d_forward.1} parent=0 // pred_fallthru
    _
  // Predicated region
  $region22: #{fully_con3d_forward.1} parent=0 // pred_check
    _
  $region23: #{fully_con3d_forward.1} parent=0 // pred_check_branch
    %23 = sbr.rel (0) target = $region25
  $region24: #{fully_con3d_forward.1} parent=0 // pred_region
    _
  $region25: #{fully_con3d_forward.1} parent=0 // pred_fallthru
    _
  // Predicated region
  $region26: #{fully_con3d_forward.1} parent=0 // pred_check
    _
  $region27: #{fully_con3d_forward.1} parent=0 // pred_check_branch
    %25 = sbr.rel (0) target = $region29
  $region28: #{fully_con3d_forward.1} parent=0 // pred_region
    _
  $region29: #{fully_con3d_forward.1} parent=0 // pred_fallthru
    _
  %v27 = vld [vmem:[%s3] sm:$0xff]
  %v28 = vld [vmem:[%s3 + $0x8] sm:$0xff]
  %v29 = vld [vmem:[%s3 + $0x10] sm:$0xff]
  %v30 = vld [vmem:[%s3 + $0x18] sm:$0xff]
  %v31 = vld [vmem:[%s0] sm:$0x3]
  %33 = vrot.lane.b32.xlu0 %v31, 32
  %v34 = vpop.permute.xlu0 %33
  %36 = vrot.lane.b32.xlu0 %v31, 64
  %v37 = vpop.permute.xlu0 %36
  %39 = vrot.lane.b32.xlu0 %v31, 96
  %v40 = vpop.permute.xlu0 %39
  %vm42 = vcmask 261120
  %v43 = vsel %vm42, %v31, %v34
  %vm44 = vcmask 523264
  %v45 = vsel %vm44, %v43, %v37
  %vm46 = vcmask 785408
  %v47 = vsel %vm46, %v45, %v40
  %v48 = vperm.slane %v47, 0
  %v49 = vperm.slane %v47, 1
  %vm50 = vcmask 1043456
  %v51 = vsel %vm50, %v48, %v49
  %v52 = vld [vmem:[%s1] sm:$0xff]
  %v53 = vmul.f32 %v51, %v52
  %v54 = vpack.c.bf16 %v53, %v53
  %v55 = vld [vmem:[%s2] sm:$0xff]
  %v56 = vld [vmem:[%s2 + $0x8] sm:$0xff]
  %v57 = vld [vmem:[%s2 + $0x10] sm:$0xff]
  %v58 = vld [vmem:[%s2 + $0x18] sm:$0xff]
  %v59 = vld [vmem:[%s2 + $0x20] sm:$0xff]
  %v60 = vld [vmem:[%s2 + $0x28] sm:$0xff]
  %v61 = vld [vmem:[%s2 + $0x30] sm:$0xff]
  %v62 = vld [vmem:[%s2 + $0x38] sm:$0xff]
  %v63 = vld [vmem:[%s2 + $0x40] sm:$0xff]
  %v64 = vld [vmem:[%s2 + $0x48] sm:$0xff]
  %v65 = vld [vmem:[%s2 + $0x50] sm:$0xff]
  %v66 = vld [vmem:[%s2 + $0x58] sm:$0xff]
  %v67 = vld [vmem:[%s2 + $0x60] sm:$0xff]
  %v68 = vld [vmem:[%s2 + $0x68] sm:$0xff]
  %v69 = vld [vmem:[%s2 + $0x70] sm:$0xff]
  %v70 = vld [vmem:[%s2 + $0x78] sm:$0xff]
  %v71 = vld [vmem:[%s2 + $0x80] sm:$0xff]
  %v72 = vld [vmem:[%s2 + $0x88] sm:$0xff]
  %v73 = vld [vmem:[%s2 + $0x90] sm:$0xff]
  %v74 = vld [vmem:[%s2 + $0x98] sm:$0xff]
  %v75 = vld [vmem:[%s2 + $0xa0] sm:$0xff]
  %v76 = vld [vmem:[%s2 + $0xa8] sm:$0xff]
  %v77 = vld [vmem:[%s2 + $0xb0] sm:$0xff]
  %v78 = vld [vmem:[%s2 + $0xb8] sm:$0xff]
  %v79 = vld [vmem:[%s2 + $0xc0] sm:$0xff]
  %v80 = vld [vmem:[%s2 + $0xc8] sm:$0xff]
  %v81 = vld [vmem:[%s2 + $0xd0] sm:$0xff]
  %v82 = vld [vmem:[%s2 + $0xd8] sm:$0xff]
  %v83 = vld [vmem:[%s2 + $0xe0] sm:$0xff]
  %v84 = vld [vmem:[%s2 + $0xe8] sm:$0xff]
  %v85 = vld [vmem:[%s2 + $0xf0] sm:$0xff]
  %v86 = vld [vmem:[%s2 + $0xf8] sm:$0xff]
  %v87 = vld [vmem:[%s6] sm:$0xff]
  %89 = vset.pattern.permute.xlu0 0
  %90 = vperm.xlu0 %89, %v87
  %v91 = vpop.permute.xlu0 %90
  %v125 = vunpack.c.l.b16 %v55
  %v126 = vunpack.c.h.b16 %v55
  %v127 = vunpack.c.l.b16 %v56
  %v128 = vunpack.c.h.b16 %v56
  %v129 = vunpack.c.l.b16 %v57
  %v130 = vunpack.c.h.b16 %v57
  %v131 = vunpack.c.l.b16 %v58
  %v132 = vunpack.c.h.b16 %v58
  %v133 = vunpack.c.l.b16 %v59
  %v134 = vunpack.c.h.b16 %v59
  %v135 = vunpack.c.l.b16 %v60
  %v136 = vunpack.c.h.b16 %v60
  %v137 = vunpack.c.l.b16 %v61
  %v138 = vunpack.c.h.b16 %v61
  %v139 = vunpack.c.l.b16 %v62
  %v140 = vunpack.c.h.b16 %v62
  %v141 = vunpack.c.l.b16 %v63
  %v142 = vunpack.c.h.b16 %v63
  %v143 = vunpack.c.l.b16 %v64
  %v144 = vunpack.c.h.b16 %v64
  %v145 = vunpack.c.l.b16 %v65
  %v146 = vunpack.c.h.b16 %v65
  %v147 = vunpack.c.l.b16 %v66
  %v148 = vunpack.c.h.b16 %v66
  %v149 = vunpack.c.l.b16 %v67
  %v150 = vunpack.c.h.b16 %v67
  %v151 = vunpack.c.l.b16 %v68
  %v152 = vunpack.c.h.b16 %v68
  %v153 = vunpack.c.l.b16 %v69
  %v154 = vunpack.c.h.b16 %v69
  %v155 = vunpack.c.l.b16 %v70
  %v156 = vunpack.c.h.b16 %v70
  %v157 = vunpack.c.l.b16 %v71
  %v158 = vunpack.c.h.b16 %v71
  %v159 = vunpack.c.l.b16 %v72
  %v160 = vunpack.c.h.b16 %v72
  %v161 = vunpack.c.l.b16 %v73
  %v162 = vunpack.c.h.b16 %v73
  %v163 = vunpack.c.l.b16 %v74
  %v164 = vunpack.c.h.b16 %v74
  %v165 = vunpack.c.l.b16 %v75
  %v166 = vunpack.c.h.b16 %v75
  %v167 = vunpack.c.l.b16 %v76
  %v168 = vunpack.c.h.b16 %v76
  %v169 = vunpack.c.l.b16 %v77
  %v170 = vunpack.c.h.b16 %v77
  %v171 = vunpack.c.l.b16 %v78
  %v172 = vunpack.c.h.b16 %v78
  %v173 = vunpack.c.l.b16 %v79
  %v174 = vunpack.c.h.b16 %v79
  %v175 = vunpack.c.l.b16 %v80
  %v176 = vunpack.c.h.b16 %v80
  %v177 = vunpack.c.l.b16 %v81
  %v178 = vunpack.c.h.b16 %v81
  %v179 = vunpack.c.l.b16 %v82
  %v180 = vunpack.c.h.b16 %v82
  %v181 = vunpack.c.l.b16 %v83
  %v182 = vunpack.c.h.b16 %v83
  %v183 = vunpack.c.l.b16 %v84
  %v184 = vunpack.c.h.b16 %v84
  %v185 = vunpack.c.l.b16 %v85
  %v186 = vunpack.c.h.b16 %v85
  %v187 = vunpack.c.l.b16 %v86
  %v188 = vunpack.c.h.b16 %v86
  %v189 = vpack.c.b16 %v129, %v125
  %v190 = vpack.c.b16 %v130, %v126
  %v191 = vpack.c.b16 %v131, %v127
  %v192 = vpack.c.b16 %v132, %v128
  %v193 = vpack.c.b16 %v137, %v133
  %v194 = vpack.c.b16 %v138, %v134
  %v195 = vpack.c.b16 %v139, %v135
  %v196 = vpack.c.b16 %v140, %v136
  %v197 = vpack.c.b16 %v145, %v141
  %v198 = vpack.c.b16 %v146, %v142
  %v199 = vpack.c.b16 %v147, %v143
  %v200 = vpack.c.b16 %v148, %v144
  %v201 = vpack.c.b16 %v153, %v149
  %v202 = vpack.c.b16 %v154, %v150
  %v203 = vpack.c.b16 %v155, %v151
  %v204 = vpack.c.b16 %v156, %v152
  %v205 = vpack.c.b16 %v161, %v157
  %v206 = vpack.c.b16 %v162, %v158
  %v207 = vpack.c.b16 %v163, %v159
  %v208 = vpack.c.b16 %v164, %v160
  %v209 = vpack.c.b16 %v169, %v165
  %v210 = vpack.c.b16 %v170, %v166
  %v211 = vpack.c.b16 %v171, %v167
  %v212 = vpack.c.b16 %v172, %v168
  %v213 = vpack.c.b16 %v177, %v173
  %v214 = vpack.c.b16 %v178, %v174
  %v215 = vpack.c.b16 %v179, %v175
  %v216 = vpack.c.b16 %v180, %v176
  %v217 = vpack.c.b16 %v185, %v181
  %v218 = vpack.c.b16 %v186, %v182
  %v219 = vpack.c.b16 %v187, %v183
  %v220 = vpack.c.b16 %v188, %v184
  %253 = vmatpush.bf16.msra.mxu0 %v217
  %254 = vmatpush.bf16.msra.mxu0 %v213
  %255 = vmatpush.bf16.msra.mxu0 %v209
  %256 = vmatpush.bf16.msra.mxu0 %v205
  %257 = vmatpush.bf16.msra.mxu0 %v201
  %258 = vmatpush.bf16.msra.mxu0 %v197
  %259 = vmatpush.bf16.msra.mxu0 %v193
  %260 = vmatpush.bf16.msra.mxu0 %v189
  %261 = vmatmul.bf16.gmra.mxu0 %v54
  %v262 = vpop.f32.mrf.mxu0
  %v263 = vadd.f32 %v91, %v262
  %v264 = vpop.f32.mrf.mxu0
  %265 = vdwg.mxu0
  %266 = vmatpush.bf16.msra.mxu0 %v218
  %267 = vmatpush.bf16.msra.mxu0 %v214
  %268 = vmatpush.bf16.msra.mxu0 %v210
  %269 = vmatpush.bf16.msra.mxu0 %v206
  %270 = vmatpush.bf16.msra.mxu0 %v202
  %271 = vmatpush.bf16.msra.mxu0 %v198
  %272 = vmatpush.bf16.msra.mxu0 %v194
  %273 = vmatpush.bf16.msra.mxu0 %v190
  %274 = vmatmul.bf16.gmra.mxu0 %v54
  %v275 = vpop.f32.mrf.mxu0
  %v276 = vadd.f32 %v91, %v275
  %v277 = vpop.f32.mrf.mxu0
  %278 = vdwg.mxu0
  %279 = vmatpush.bf16.msra.mxu0 %v219
  %280 = vmatpush.bf16.msra.mxu0 %v215
  %281 = vmatpush.bf16.msra.mxu0 %v211
  %282 = vmatpush.bf16.msra.mxu0 %v207
  %283 = vmatpush.bf16.msra.mxu0 %v203
  %284 = vmatpush.bf16.msra.mxu0 %v199
  %285 = vmatpush.bf16.msra.mxu0 %v195
  %286 = vmatpush.bf16.msra.mxu0 %v191
  %287 = vmatmul.bf16.gmra.mxu0 %v54
  %v288 = vpop.f32.mrf.mxu0
  %v289 = vadd.f32 %v91, %v288
  %v290 = vpop.f32.mrf.mxu0
  %291 = vdwg.mxu0
  %292 = vmatpush.bf16.msra.mxu0 %v220
  %293 = vmatpush.bf16.msra.mxu0 %v216
  %294 = vmatpush.bf16.msra.mxu0 %v212
  %295 = vmatpush.bf16.msra.mxu0 %v208
  %296 = vmatpush.bf16.msra.mxu0 %v204
  %297 = vmatpush.bf16.msra.mxu0 %v200
  %298 = vmatpush.bf16.msra.mxu0 %v196
  %299 = vmatpush.bf16.msra.mxu0 %v192
  %300 = vmatmul.bf16.gmra.mxu0 %v54
  %v301 = vpop.f32.mrf.mxu0
  %v302 = vadd.f32 %v91, %v301
  %v303 = vpop.f32.mrf.mxu0
  %304 = vdwg.mxu0
  %305 = vrot.lane.b32.xlu0 %v27, 73
  %v306 = vpop.permute.xlu0 %305
  %307 = vrot.lane.b32.xlu0 %v28, 73
  %v308 = vpop.permute.xlu0 %307
  %309 = vrot.lane.b32.xlu0 %v29, 73
  %v310 = vpop.permute.xlu0 %309
  %311 = vrot.lane.b32.xlu0 %v30, 73
  %v312 = vpop.permute.xlu0 %311
  %v313 = vlaneseq
  %v314 = vand.u32 %v313, 127
  %vm315 = vcmp.lt.s32.totalorder %v314, 73
  %v316 = vsel %vm315, %v310, %v312
  %v317 = vsel %vm315, %v308, %v310
  %v318 = vsel %vm315, %v306, %v308
  %v319 = vsel %vm315, %v312, %v306
  %v320 = vld [vmem:[%s5] ss:$8 sm:$0xf]
  %v322 = vperm.slane %v320, 0
  %v323 = vperm.slane %v320, 1
  %v324 = vperm.slane %v320, 2
  %v325 = vperm.slane %v320, 3
  %v330 = vmul.f32 %v319, %v322
  %v331 = vmul.f32 %v318, %v323
  %v332 = vmul.f32 %v317, %v324
  %v333 = vmul.f32 %v316, %v325
  %v334 = vld [vmem:[%s4] sm:$0xf]
  %v335 = vpack.c.bf16 %v330, %v330
  %v336 = vpack.c.bf16 %v331, %v331
  %v337 = vpack.c.bf16 %v332, %v332
  %v338 = vpack.c.bf16 %v333, %v333
  %vm339 = vcmask 64512
  %v341 = vsel %vm339, %v334, 0
  %v344 = vsel %vm50, %v335, 0
  %v347 = vsel %vm50, %v336, 0
  %v350 = vsel %vm50, %v337, 0
  %v353 = vsel %vm50, %v338, 0
  %355 = vmatpush.bf16.msra.mxu0 0
  %356 = vmatpush.bf16.msra.mxu0 0
  %357 = vmatpush.bf16.msra.mxu0 0
  %358 = vmatpush.bf16.msra.mxu0 0
  %359 = vmatpush.bf16.msra.mxu0 0
  %360 = vmatpush.bf16.msra.mxu0 0
  %361 = vmatpush.bf16.msra.mxu0 0
  %362 = vmatpush.bf16.msra.mxu0 %v344
  %363 = vmatmul.bf16.gmra.mxu0 %v341
  %v364 = vpop.f32.mrf.mxu0
  %v365 = vadd.f32 0.0, %v364
  %v366 = vpop.f32.mrf.mxu0
  %367 = vdwg.mxu0
  %368 = vmatpush.bf16.msra.mxu0 0
  %369 = vmatpush.bf16.msra.mxu0 0
  %370 = vmatpush.bf16.msra.mxu0 0
  %371 = vmatpush.bf16.msra.mxu0 0
  %372 = vmatpush.bf16.msra.mxu0 0
  %373 = vmatpush.bf16.msra.mxu0 0
  %374 = vmatpush.bf16.msra.mxu0 0
  %375 = vmatpush.bf16.msra.mxu0 %v347
  %376 = vmatmul.bf16.gmra.mxu0 %v341
  %v377 = vpop.f32.mrf.mxu0
  %v378 = vadd.f32 0.0, %v377
  %v379 = vpop.f32.mrf.mxu0
  %380 = vdwg.mxu0
  %381 = vmatpush.bf16.msra.mxu0 0
  %382 = vmatpush.bf16.msra.mxu0 0
  %383 = vmatpush.bf16.msra.mxu0 0
  %384 = vmatpush.bf16.msra.mxu0 0
  %385 = vmatpush.bf16.msra.mxu0 0
  %386 = vmatpush.bf16.msra.mxu0 0
  %387 = vmatpush.bf16.msra.mxu0 0
  %388 = vmatpush.bf16.msra.mxu0 %v350
  %389 = vmatmul.bf16.gmra.mxu0 %v341
  %v390 = vpop.f32.mrf.mxu0
  %v391 = vadd.f32 0.0, %v390
  %v392 = vpop.f32.mrf.mxu0
  %393 = vdwg.mxu0
  %394 = vmatpush.bf16.msra.mxu0 0
  %395 = vmatpush.bf16.msra.mxu0 0
  %396 = vmatpush.bf16.msra.mxu0 0
  %397 = vmatpush.bf16.msra.mxu0 0
  %398 = vmatpush.bf16.msra.mxu0 0
  %399 = vmatpush.bf16.msra.mxu0 0
  %400 = vmatpush.bf16.msra.mxu0 0
  %401 = vmatpush.bf16.msra.mxu0 %v353
  %402 = vmatmul.bf16.gmra.mxu0 %v341
  %v403 = vpop.f32.mrf.mxu0
  %v404 = vadd.f32 0.0, %v403
  %v405 = vpop.f32.mrf.mxu0
  %406 = vdwg.mxu0
  %v407 = vadd.f32 %v263, %v365
  %v408 = vadd.f32 %v276, %v378
  %v409 = vadd.f32 %v289, %v391
  %v410 = vadd.f32 %v302, %v404
  %411 = vrot.lane.b32.xlu0 %v27, 72
  %v412 = vpop.permute.xlu0 %411
  %413 = vrot.lane.b32.xlu0 %v28, 72
  %v414 = vpop.permute.xlu0 %413
  %415 = vrot.lane.b32.xlu0 %v29, 72
  %v416 = vpop.permute.xlu0 %415
  %417 = vrot.lane.b32.xlu0 %v30, 72
  %v418 = vpop.permute.xlu0 %417
  %vm419 = vcmp.lt.s32.totalorder %v314, 72
  %v420 = vsel %vm419, %v416, %v418
  %v421 = vsel %vm419, %v414, %v416
  %v422 = vsel %vm419, %v412, %v414
  %v423 = vsel %vm419, %v418, %v412
  %s424 = scalar_lea.vmem %s5, 1
  %v425 = vld [vmem:[%s424] ss:$8 sm:$0xf]
  %v427 = vperm.slane %v425, 0
  %v428 = vperm.slane %v425, 1
  %v429 = vperm.slane %v425, 2
  %v430 = vperm.slane %v425, 3
  %v435 = vmul.f32 %v423, %v427
  %v436 = vmul.f32 %v422, %v428
  %v437 = vmul.f32 %v421, %v429
  %v438 = vmul.f32 %v420, %v430
  %s439 = scalar_lea.vmem %s4, 4
  %v440 = vld [vmem:[%s439] sm:$0xf]
  %v441 = vpack.c.bf16 %v435, %v435
  %v442 = vpack.c.bf16 %v436, %v436
  %v443 = vpack.c.bf16 %v437, %v437
  %v444 = vpack.c.bf16 %v438, %v438
  %v446 = vsel %vm339, %v440, 0
  %v449 = vsel %vm50, %v441, 0
  %v452 = vsel %vm50, %v442, 0
  %v455 = vsel %vm50, %v443, 0
  %v458 = vsel %vm50, %v444, 0
  %460 = vmatpush.bf16.msra.mxu0 0
  %461 = vmatpush.bf16.msra.mxu0 0
  %462 = vmatpush.bf16.msra.mxu0 0
  %463 = vmatpush.bf16.msra.mxu0 0
  %464 = vmatpush.bf16.msra.mxu0 0
  %465 = vmatpush.bf16.msra.mxu0 0
  %466 = vmatpush.bf16.msra.mxu0 0
  %467 = vmatpush.bf16.msra.mxu0 %v449
  %468 = vmatmul.bf16.gmra.mxu0 %v446
  %v469 = vpop.f32.mrf.mxu0
  %v470 = vadd.f32 0.0, %v469
  %v471 = vpop.f32.mrf.mxu0
  %472 = vdwg.mxu0
  %473 = vmatpush.bf16.msra.mxu0 0
  %474 = vmatpush.bf16.msra.mxu0 0
  %475 = vmatpush.bf16.msra.mxu0 0
  %476 = vmatpush.bf16.msra.mxu0 0
  %477 = vmatpush.bf16.msra.mxu0 0
  %478 = vmatpush.bf16.msra.mxu0 0
  %479 = vmatpush.bf16.msra.mxu0 0
  %480 = vmatpush.bf16.msra.mxu0 %v452
  %481 = vmatmul.bf16.gmra.mxu0 %v446
  %v482 = vpop.f32.mrf.mxu0
  %v483 = vadd.f32 0.0, %v482
  %v484 = vpop.f32.mrf.mxu0
  %485 = vdwg.mxu0
  %486 = vmatpush.bf16.msra.mxu0 0
  %487 = vmatpush.bf16.msra.mxu0 0
  %488 = vmatpush.bf16.msra.mxu0 0
  %489 = vmatpush.bf16.msra.mxu0 0
  %490 = vmatpush.bf16.msra.mxu0 0
  %491 = vmatpush.bf16.msra.mxu0 0
  %492 = vmatpush.bf16.msra.mxu0 0
  %493 = vmatpush.bf16.msra.mxu0 %v455
  %494 = vmatmul.bf16.gmra.mxu0 %v446
  %v495 = vpop.f32.mrf.mxu0
  %v496 = vadd.f32 0.0, %v495
  %v497 = vpop.f32.mrf.mxu0
  %498 = vdwg.mxu0
  %499 = vmatpush.bf16.msra.mxu0 0
  %500 = vmatpush.bf16.msra.mxu0 0
  %501 = vmatpush.bf16.msra.mxu0 0
  %502 = vmatpush.bf16.msra.mxu0 0
  %503 = vmatpush.bf16.msra.mxu0 0
  %504 = vmatpush.bf16.msra.mxu0 0
  %505 = vmatpush.bf16.msra.mxu0 0
  %506 = vmatpush.bf16.msra.mxu0 %v458
  %507 = vmatmul.bf16.gmra.mxu0 %v446
  %v508 = vpop.f32.mrf.mxu0
  %v509 = vadd.f32 0.0, %v508
  %v510 = vpop.f32.mrf.mxu0
  %511 = vdwg.mxu0
  %v512 = vadd.f32 %v407, %v470
  %v513 = vadd.f32 %v408, %v483
  %v514 = vadd.f32 %v409, %v496
  %v515 = vadd.f32 %v410, %v509
  %516 = vrot.lane.b32.xlu0 %v27, 71
  %v517 = vpop.permute.xlu0 %516
  %518 = vrot.lane.b32.xlu0 %v28, 71
  %v519 = vpop.permute.xlu0 %518
  %520 = vrot.lane.b32.xlu0 %v29, 71
  %v521 = vpop.permute.xlu0 %520
  %522 = vrot.lane.b32.xlu0 %v30, 71
  %v523 = vpop.permute.xlu0 %522
  %vm524 = vcmp.lt.s32.totalorder %v314, 71
  %v525 = vsel %vm524, %v521, %v523
  %v526 = vsel %vm524, %v519, %v521
  %v527 = vsel %vm524, %v517, %v519
  %v528 = vsel %vm524, %v523, %v517
  %s529 = scalar_lea.vmem %s5, 2
  %v530 = vld [vmem:[%s529] ss:$8 sm:$0xf]
  %v532 = vperm.slane %v530, 0
  %v533 = vperm.slane %v530, 1
  %v534 = vperm.slane %v530, 2
  %v535 = vperm.slane %v530, 3
  %v540 = vmul.f32 %v528, %v532
  %v541 = vmul.f32 %v527, %v533
  %v542 = vmul.f32 %v526, %v534
  %v543 = vmul.f32 %v525, %v535
  %s544 = scalar_lea.vmem %s4, 8
  %v545 = vld [vmem:[%s544] sm:$0xf]
  %v546 = vpack.c.bf16 %v540, %v540
  %v547 = vpack.c.bf16 %v541, %v541
  %v548 = vpack.c.bf16 %v542, %v542
  %v549 = vpack.c.bf16 %v543, %v543
  %v551 = vsel %vm339, %v545, 0
  %v554 = vsel %vm50, %v546, 0
  %v557 = vsel %vm50, %v547, 0
  %v560 = vsel %vm50, %v548, 0
  %v563 = vsel %vm50, %v549, 0
  %565 = vmatpush.bf16.msra.mxu0 0
  %566 = vmatpush.bf16.msra.mxu0 0
  %567 = vmatpush.bf16.msra.mxu0 0
  %568 = vmatpush.bf16.msra.mxu0 0
  %569 = vmatpush.bf16.msra.mxu0 0
  %570 = vmatpush.bf16.msra.mxu0 0
  %571 = vmatpush.bf16.msra.mxu0 0
  %572 = vmatpush.bf16.msra.mxu0 %v554
  %573 = vmatmul.bf16.gmra.mxu0 %v551
  %v574 = vpop.f32.mrf.mxu0
  %v575 = vadd.f32 0.0, %v574
  %v576 = vpop.f32.mrf.mxu0
  %577 = vdwg.mxu0
  %578 = vmatpush.bf16.msra.mxu0 0
  %579 = vmatpush.bf16.msra.mxu0 0
  %580 = vmatpush.bf16.msra.mxu0 0
  %581 = vmatpush.bf16.msra.mxu0 0
  %582 = vmatpush.bf16.msra.mxu0 0
  %583 = vmatpush.bf16.msra.mxu0 0
  %584 = vmatpush.bf16.msra.mxu0 0
  %585 = vmatpush.bf16.msra.mxu0 %v557
  %586 = vmatmul.bf16.gmra.mxu0 %v551
  %v587 = vpop.f32.mrf.mxu0
  %v588 = vadd.f32 0.0, %v587
  %v589 = vpop.f32.mrf.mxu0
  %590 = vdwg.mxu0
  %591 = vmatpush.bf16.msra.mxu0 0
  %592 = vmatpush.bf16.msra.mxu0 0
  %593 = vmatpush.bf16.msra.mxu0 0
  %594 = vmatpush.bf16.msra.mxu0 0
  %595 = vmatpush.bf16.msra.mxu0 0
  %596 = vmatpush.bf16.msra.mxu0 0
  %597 = vmatpush.bf16.msra.mxu0 0
  %598 = vmatpush.bf16.msra.mxu0 %v560
  %599 = vmatmul.bf16.gmra.mxu0 %v551
  %v600 = vpop.f32.mrf.mxu0
  %v601 = vadd.f32 0.0, %v600
  %v602 = vpop.f32.mrf.mxu0
  %603 = vdwg.mxu0
  %604 = vmatpush.bf16.msra.mxu0 0
  %605 = vmatpush.bf16.msra.mxu0 0
  %606 = vmatpush.bf16.msra.mxu0 0
  %607 = vmatpush.bf16.msra.mxu0 0
  %608 = vmatpush.bf16.msra.mxu0 0
  %609 = vmatpush.bf16.msra.mxu0 0
  %610 = vmatpush.bf16.msra.mxu0 0
  %611 = vmatpush.bf16.msra.mxu0 %v563
  %612 = vmatmul.bf16.gmra.mxu0 %v551
  %v613 = vpop.f32.mrf.mxu0
  %v614 = vadd.f32 0.0, %v613
  %v615 = vpop.f32.mrf.mxu0
  %616 = vdwg.mxu0
  %v617 = vadd.f32 %v512, %v575
  %v618 = vadd.f32 %v513, %v588
  %v619 = vadd.f32 %v514, %v601
  %v620 = vadd.f32 %v515, %v614
  %621 = vrot.lane.b32.xlu0 %v27, 65
  %v622 = vpop.permute.xlu0 %621
  %623 = vrot.lane.b32.xlu0 %v28, 65
  %v624 = vpop.permute.xlu0 %623
  %625 = vrot.lane.b32.xlu0 %v29, 65
  %v626 = vpop.permute.xlu0 %625
  %627 = vrot.lane.b32.xlu0 %v30, 65
  %v628 = vpop.permute.xlu0 %627
  %vm629 = vcmp.lt.s32.totalorder %v314, 65
  %v630 = vsel %vm629, %v626, %v628
  %v631 = vsel %vm629, %v624, %v626
  %v632 = vsel %vm629, %v622, %v624
  %v633 = vsel %vm629, %v628, %v622
  %s634 = scalar_lea.vmem %s5, 3
  %v635 = vld [vmem:[%s634] ss:$8 sm:$0xf]
  %v637 = vperm.slane %v635, 0
  %v638 = vperm.slane %v635, 1
  %v639 = vperm.slane %v635, 2
  %v640 = vperm.slane %v635, 3
  %v645 = vmul.f32 %v633, %v637
  %v646 = vmul.f32 %v632, %v638
  %v647 = vmul.f32 %v631, %v639
  %v648 = vmul.f32 %v630, %v640
  %s649 = scalar_lea.vmem %s4, 12
  %v650 = vld [vmem:[%s649] sm:$0xf]
  %v651 = vpack.c.bf16 %v645, %v645
  %v652 = vpack.c.bf16 %v646, %v646
  %v653 = vpack.c.bf16 %v647, %v647
  %v654 = vpack.c.bf16 %v648, %v648
  %v656 = vsel %vm339, %v650, 0
  %v659 = vsel %vm50, %v651, 0
  %v662 = vsel %vm50, %v652, 0
  %v665 = vsel %vm50, %v653, 0
  %v668 = vsel %vm50, %v654, 0
  %670 = vmatpush.bf16.msra.mxu0 0
  %671 = vmatpush.bf16.msra.mxu0 0
  %672 = vmatpush.bf16.msra.mxu0 0
  %673 = vmatpush.bf16.msra.mxu0 0
  %674 = vmatpush.bf16.msra.mxu0 0
  %675 = vmatpush.bf16.msra.mxu0 0
  %676 = vmatpush.bf16.msra.mxu0 0
  %677 = vmatpush.bf16.msra.mxu0 %v659
  %678 = vmatmul.bf16.gmra.mxu0 %v656
  %v679 = vpop.f32.mrf.mxu0
  %v680 = vadd.f32 0.0, %v679
  %v681 = vpop.f32.mrf.mxu0
  %682 = vdwg.mxu0
  %683 = vmatpush.bf16.msra.mxu0 0
  %684 = vmatpush.bf16.msra.mxu0 0
  %685 = vmatpush.bf16.msra.mxu0 0
  %686 = vmatpush.bf16.msra.mxu0 0
  %687 = vmatpush.bf16.msra.mxu0 0
  %688 = vmatpush.bf16.msra.mxu0 0
  %689 = vmatpush.bf16.msra.mxu0 0
  %690 = vmatpush.bf16.msra.mxu0 %v662
  %691 = vmatmul.bf16.gmra.mxu0 %v656
  %v692 = vpop.f32.mrf.mxu0
  %v693 = vadd.f32 0.0, %v692
  %v694 = vpop.f32.mrf.mxu0
  %695 = vdwg.mxu0
  %696 = vmatpush.bf16.msra.mxu0 0
  %697 = vmatpush.bf16.msra.mxu0 0
  %698 = vmatpush.bf16.msra.mxu0 0
  %699 = vmatpush.bf16.msra.mxu0 0
  %700 = vmatpush.bf16.msra.mxu0 0
  %701 = vmatpush.bf16.msra.mxu0 0
  %702 = vmatpush.bf16.msra.mxu0 0
  %703 = vmatpush.bf16.msra.mxu0 %v665
  %704 = vmatmul.bf16.gmra.mxu0 %v656
  %v705 = vpop.f32.mrf.mxu0
  %v706 = vadd.f32 0.0, %v705
  %v707 = vpop.f32.mrf.mxu0
  %708 = vdwg.mxu0
  %709 = vmatpush.bf16.msra.mxu0 0
  %710 = vmatpush.bf16.msra.mxu0 0
  %711 = vmatpush.bf16.msra.mxu0 0
  %712 = vmatpush.bf16.msra.mxu0 0
  %713 = vmatpush.bf16.msra.mxu0 0
  %714 = vmatpush.bf16.msra.mxu0 0
  %715 = vmatpush.bf16.msra.mxu0 0
  %716 = vmatpush.bf16.msra.mxu0 %v668
  %717 = vmatmul.bf16.gmra.mxu0 %v656
  %v718 = vpop.f32.mrf.mxu0
  %v719 = vadd.f32 0.0, %v718
  %v720 = vpop.f32.mrf.mxu0
  %721 = vdwg.mxu0
  %v722 = vadd.f32 %v617, %v680
  %v723 = vadd.f32 %v618, %v693
  %v724 = vadd.f32 %v619, %v706
  %v725 = vadd.f32 %v620, %v719
  %726 = vrot.lane.b32.xlu0 %v27, 64
  %v727 = vpop.permute.xlu0 %726
  %728 = vrot.lane.b32.xlu0 %v28, 64
  %v729 = vpop.permute.xlu0 %728
  %730 = vrot.lane.b32.xlu0 %v29, 64
  %v731 = vpop.permute.xlu0 %730
  %732 = vrot.lane.b32.xlu0 %v30, 64
  %v733 = vpop.permute.xlu0 %732
  %vm734 = vcmp.lt.s32.totalorder %v314, 64
  %v735 = vsel %vm734, %v731, %v733
  %v736 = vsel %vm734, %v729, %v731
  %v737 = vsel %vm734, %v727, %v729
  %v738 = vsel %vm734, %v733, %v727
  %s739 = scalar_lea.vmem %s5, 4
  %v740 = vld [vmem:[%s739] ss:$8 sm:$0xf]
  %v742 = vperm.slane %v740, 0
  %v743 = vperm.slane %v740, 1
  %v744 = vperm.slane %v740, 2
  %v745 = vperm.slane %v740, 3
  %v750 = vmul.f32 %v738, %v742
  %v751 = vmul.f32 %v737, %v743
  %v752 = vmul.f32 %v736, %v744
  %v753 = vmul.f32 %v735, %v745
  %s754 = scalar_lea.vmem %s4, 16
  %v755 = vld [vmem:[%s754] sm:$0xf]
  %v756 = vpack.c.bf16 %v750, %v750
  %v757 = vpack.c.bf16 %v751, %v751
  %v758 = vpack.c.bf16 %v752, %v752
  %v759 = vpack.c.bf16 %v753, %v753
  %v761 = vsel %vm339, %v755, 0
  %v764 = vsel %vm50, %v756, 0
  %v767 = vsel %vm50, %v757, 0
  %v770 = vsel %vm50, %v758, 0
  %v773 = vsel %vm50, %v759, 0
  %775 = vmatpush.bf16.msra.mxu0 0
  %776 = vmatpush.bf16.msra.mxu0 0
  %777 = vmatpush.bf16.msra.mxu0 0
  %778 = vmatpush.bf16.msra.mxu0 0
  %779 = vmatpush.bf16.msra.mxu0 0
  %780 = vmatpush.bf16.msra.mxu0 0
  %781 = vmatpush.bf16.msra.mxu0 0
  %782 = vmatpush.bf16.msra.mxu0 %v764
  %783 = vmatmul.bf16.gmra.mxu0 %v761
  %v784 = vpop.f32.mrf.mxu0
  %v785 = vadd.f32 0.0, %v784
  %v786 = vpop.f32.mrf.mxu0
  %787 = vdwg.mxu0
  %788 = vmatpush.bf16.msra.mxu0 0
  %789 = vmatpush.bf16.msra.mxu0 0
  %790 = vmatpush.bf16.msra.mxu0 0
  %791 = vmatpush.bf16.msra.mxu0 0
  %792 = vmatpush.bf16.msra.mxu0 0
  %793 = vmatpush.bf16.msra.mxu0 0
  %794 = vmatpush.bf16.msra.mxu0 0
  %795 = vmatpush.bf16.msra.mxu0 %v767
  %796 = vmatmul.bf16.gmra.mxu0 %v761
  %v797 = vpop.f32.mrf.mxu0
  %v798 = vadd.f32 0.0, %v797
  %v799 = vpop.f32.mrf.mxu0
  %800 = vdwg.mxu0
  %801 = vmatpush.bf16.msra.mxu0 0
  %802 = vmatpush.bf16.msra.mxu0 0
  %803 = vmatpush.bf16.msra.mxu0 0
  %804 = vmatpush.bf16.msra.mxu0 0
  %805 = vmatpush.bf16.msra.mxu0 0
  %806 = vmatpush.bf16.msra.mxu0 0
  %807 = vmatpush.bf16.msra.mxu0 0
  %808 = vmatpush.bf16.msra.mxu0 %v770
  %809 = vmatmul.bf16.gmra.mxu0 %v761
  %v810 = vpop.f32.mrf.mxu0
  %v811 = vadd.f32 0.0, %v810
  %v812 = vpop.f32.mrf.mxu0
  %813 = vdwg.mxu0
  %814 = vmatpush.bf16.msra.mxu0 0
  %815 = vmatpush.bf16.msra.mxu0 0
  %816 = vmatpush.bf16.msra.mxu0 0
  %817 = vmatpush.bf16.msra.mxu0 0
  %818 = vmatpush.bf16.msra.mxu0 0
  %819 = vmatpush.bf16.msra.mxu0 0
  %820 = vmatpush.bf16.msra.mxu0 0
  %821 = vmatpush.bf16.msra.mxu0 %v773
  %822 = vmatmul.bf16.gmra.mxu0 %v761
  %v823 = vpop.f32.mrf.mxu0
  %v824 = vadd.f32 0.0, %v823
  %v825 = vpop.f32.mrf.mxu0
  %826 = vdwg.mxu0
  %v827 = vadd.f32 %v722, %v785
  %v828 = vadd.f32 %v723, %v798
  %v829 = vadd.f32 %v724, %v811
  %v830 = vadd.f32 %v725, %v824
  %831 = vrot.lane.b32.xlu0 %v27, 63
  %v832 = vpop.permute.xlu0 %831
  %833 = vrot.lane.b32.xlu0 %v28, 63
  %v834 = vpop.permute.xlu0 %833
  %835 = vrot.lane.b32.xlu0 %v29, 63
  %v836 = vpop.permute.xlu0 %835
  %837 = vrot.lane.b32.xlu0 %v30, 63
  %v838 = vpop.permute.xlu0 %837
  %vm839 = vcmp.lt.s32.totalorder %v314, 63
  %v840 = vsel %vm839, %v836, %v838
  %v841 = vsel %vm839, %v834, %v836
  %v842 = vsel %vm839, %v832, %v834
  %v843 = vsel %vm839, %v838, %v832
  %s844 = scalar_lea.vmem %s5, 5
  %v845 = vld [vmem:[%s844] ss:$8 sm:$0xf]
  %v847 = vperm.slane %v845, 0
  %v848 = vperm.slane %v845, 1
  %v849 = vperm.slane %v845, 2
  %v850 = vperm.slane %v845, 3
  %v855 = vmul.f32 %v843, %v847
  %v856 = vmul.f32 %v842, %v848
  %v857 = vmul.f32 %v841, %v849
  %v858 = vmul.f32 %v840, %v850
  %s859 = scalar_lea.vmem %s4, 20
  %v860 = vld [vmem:[%s859] sm:$0xf]
  %v861 = vpack.c.bf16 %v855, %v855
  %v862 = vpack.c.bf16 %v856, %v856
  %v863 = vpack.c.bf16 %v857, %v857
  %v864 = vpack.c.bf16 %v858, %v858
  %v866 = vsel %vm339, %v860, 0
  %v869 = vsel %vm50, %v861, 0
  %v872 = vsel %vm50, %v862, 0
  %v875 = vsel %vm50, %v863, 0
  %v878 = vsel %vm50, %v864, 0
  %880 = vmatpush.bf16.msra.mxu0 0
  %881 = vmatpush.bf16.msra.mxu0 0
  %882 = vmatpush.bf16.msra.mxu0 0
  %883 = vmatpush.bf16.msra.mxu0 0
  %884 = vmatpush.bf16.msra.mxu0 0
  %885 = vmatpush.bf16.msra.mxu0 0
  %886 = vmatpush.bf16.msra.mxu0 0
  %887 = vmatpush.bf16.msra.mxu0 %v869
  %888 = vmatmul.bf16.gmra.mxu0 %v866
  %v889 = vpop.f32.mrf.mxu0
  %v890 = vadd.f32 0.0, %v889
  %v891 = vpop.f32.mrf.mxu0
  %892 = vdwg.mxu0
  %893 = vmatpush.bf16.msra.mxu0 0
  %894 = vmatpush.bf16.msra.mxu0 0
  %895 = vmatpush.bf16.msra.mxu0 0
  %896 = vmatpush.bf16.msra.mxu0 0
  %897 = vmatpush.bf16.msra.mxu0 0
  %898 = vmatpush.bf16.msra.mxu0 0
  %899 = vmatpush.bf16.msra.mxu0 0
  %900 = vmatpush.bf16.msra.mxu0 %v872
  %901 = vmatmul.bf16.gmra.mxu0 %v866
  %v902 = vpop.f32.mrf.mxu0
  %v903 = vadd.f32 0.0, %v902
  %v904 = vpop.f32.mrf.mxu0
  %905 = vdwg.mxu0
  %906 = vmatpush.bf16.msra.mxu0 0
  %907 = vmatpush.bf16.msra.mxu0 0
  %908 = vmatpush.bf16.msra.mxu0 0
  %909 = vmatpush.bf16.msra.mxu0 0
  %910 = vmatpush.bf16.msra.mxu0 0
  %911 = vmatpush.bf16.msra.mxu0 0
  %912 = vmatpush.bf16.msra.mxu0 0
  %913 = vmatpush.bf16.msra.mxu0 %v875
  %914 = vmatmul.bf16.gmra.mxu0 %v866
  %v915 = vpop.f32.mrf.mxu0
  %v916 = vadd.f32 0.0, %v915
  %v917 = vpop.f32.mrf.mxu0
  %918 = vdwg.mxu0
  %919 = vmatpush.bf16.msra.mxu0 0
  %920 = vmatpush.bf16.msra.mxu0 0
  %921 = vmatpush.bf16.msra.mxu0 0
  %922 = vmatpush.bf16.msra.mxu0 0
  %923 = vmatpush.bf16.msra.mxu0 0
  %924 = vmatpush.bf16.msra.mxu0 0
  %925 = vmatpush.bf16.msra.mxu0 0
  %926 = vmatpush.bf16.msra.mxu0 %v878
  %927 = vmatmul.bf16.gmra.mxu0 %v866
  %v928 = vpop.f32.mrf.mxu0
  %v929 = vadd.f32 0.0, %v928
  %v930 = vpop.f32.mrf.mxu0
  %931 = vdwg.mxu0
  %v932 = vadd.f32 %v827, %v890
  %v933 = vadd.f32 %v828, %v903
  %v934 = vadd.f32 %v829, %v916
  %v935 = vadd.f32 %v830, %v929
  %936 = vrot.lane.b32.xlu0 %v27, 57
  %v937 = vpop.permute.xlu0 %936
  %938 = vrot.lane.b32.xlu0 %v28, 57
  %v939 = vpop.permute.xlu0 %938
  %940 = vrot.lane.b32.xlu0 %v29, 57
  %v941 = vpop.permute.xlu0 %940
  %942 = vrot.lane.b32.xlu0 %v30, 57
  %v943 = vpop.permute.xlu0 %942
  %vm944 = vcmp.lt.s32.totalorder %v314, 57
  %v945 = vsel %vm944, %v941, %v943
  %v946 = vsel %vm944, %v939, %v941
  %v947 = vsel %vm944, %v937, %v939
  %v948 = vsel %vm944, %v943, %v937
  %s949 = scalar_lea.vmem %s5, 6
  %v950 = vld [vmem:[%s949] ss:$8 sm:$0xf]
  %v952 = vperm.slane %v950, 0
  %v953 = vperm.slane %v950, 1
  %v954 = vperm.slane %v950, 2
  %v955 = vperm.slane %v950, 3
  %v960 = vmul.f32 %v948, %v952
  %v961 = vmul.f32 %v947, %v953
  %v962 = vmul.f32 %v946, %v954
  %v963 = vmul.f32 %v945, %v955
  %s964 = scalar_lea.vmem %s4, 24
  %v965 = vld [vmem:[%s964] sm:$0xf]
  %v966 = vpack.c.bf16 %v960, %v960
  %v967 = vpack.c.bf16 %v961, %v961
  %v968 = vpack.c.bf16 %v962, %v962
  %v969 = vpack.c.bf16 %v963, %v963
  %v971 = vsel %vm339, %v965, 0
  %v974 = vsel %vm50, %v966, 0
  %v977 = vsel %vm50, %v967, 0
  %v980 = vsel %vm50, %v968, 0
  %v983 = vsel %vm50, %v969, 0
  %985 = vmatpush.bf16.msra.mxu0 0
  %986 = vmatpush.bf16.msra.mxu0 0
  %987 = vmatpush.bf16.msra.mxu0 0
  %988 = vmatpush.bf16.msra.mxu0 0
  %989 = vmatpush.bf16.msra.mxu0 0
  %990 = vmatpush.bf16.msra.mxu0 0
  %991 = vmatpush.bf16.msra.mxu0 0
  %992 = vmatpush.bf16.msra.mxu0 %v974
  %993 = vmatmul.bf16.gmra.mxu0 %v971
  %v994 = vpop.f32.mrf.mxu0
  %v995 = vadd.f32 0.0, %v994
  %v996 = vpop.f32.mrf.mxu0
  %997 = vdwg.mxu0
  %998 = vmatpush.bf16.msra.mxu0 0
  %999 = vmatpush.bf16.msra.mxu0 0
  %1000 = vmatpush.bf16.msra.mxu0 0
  %1001 = vmatpush.bf16.msra.mxu0 0
  %1002 = vmatpush.bf16.msra.mxu0 0
  %1003 = vmatpush.bf16.msra.mxu0 0
  %1004 = vmatpush.bf16.msra.mxu0 0
  %1005 = vmatpush.bf16.msra.mxu0 %v977
  %1006 = vmatmul.bf16.gmra.mxu0 %v971
  %v1007 = vpop.f32.mrf.mxu0
  %v1008 = vadd.f32 0.0, %v1007
  %v1009 = vpop.f32.mrf.mxu0
  %1010 = vdwg.mxu0
  %1011 = vmatpush.bf16.msra.mxu0 0
  %1012 = vmatpush.bf16.msra.mxu0 0
  %1013 = vmatpush.bf16.msra.mxu0 0
  %1014 = vmatpush.bf16.msra.mxu0 0
  %1015 = vmatpush.bf16.msra.mxu0 0
  %1016 = vmatpush.bf16.msra.mxu0 0
  %1017 = vmatpush.bf16.msra.mxu0 0
  %1018 = vmatpush.bf16.msra.mxu0 %v980
  %1019 = vmatmul.bf16.gmra.mxu0 %v971
  %v1020 = vpop.f32.mrf.mxu0
  %v1021 = vadd.f32 0.0, %v1020
  %v1022 = vpop.f32.mrf.mxu0
  %1023 = vdwg.mxu0
  %1024 = vmatpush.bf16.msra.mxu0 0
  %1025 = vmatpush.bf16.msra.mxu0 0
  %1026 = vmatpush.bf16.msra.mxu0 0
  %1027 = vmatpush.bf16.msra.mxu0 0
  %1028 = vmatpush.bf16.msra.mxu0 0
  %1029 = vmatpush.bf16.msra.mxu0 0
  %1030 = vmatpush.bf16.msra.mxu0 0
  %1031 = vmatpush.bf16.msra.mxu0 %v983
  %1032 = vmatmul.bf16.gmra.mxu0 %v971
  %v1033 = vpop.f32.mrf.mxu0
  %v1034 = vadd.f32 0.0, %v1033
  %v1035 = vpop.f32.mrf.mxu0
  %1036 = vdwg.mxu0
  %v1037 = vadd.f32 %v932, %v995
  %v1038 = vadd.f32 %v933, %v1008
  %v1039 = vadd.f32 %v934, %v1021
  %v1040 = vadd.f32 %v935, %v1034
  %1041 = vrot.lane.b32.xlu0 %v27, 56
  %v1042 = vpop.permute.xlu0 %1041
  %1043 = vrot.lane.b32.xlu0 %v28, 56
  %v1044 = vpop.permute.xlu0 %1043
  %1045 = vrot.lane.b32.xlu0 %v29, 56
  %v1046 = vpop.permute.xlu0 %1045
  %1047 = vrot.lane.b32.xlu0 %v30, 56
  %v1048 = vpop.permute.xlu0 %1047
  %vm1049 = vcmp.lt.s32.totalorder %v314, 56
  %v1050 = vsel %vm1049, %v1046, %v1048
  %v1051 = vsel %vm1049, %v1044, %v1046
  %v1052 = vsel %vm1049, %v1042, %v1044
  %v1053 = vsel %vm1049, %v1048, %v1042
  %s1054 = scalar_lea.vmem %s5, 7
  %v1055 = vld [vmem:[%s1054] ss:$8 sm:$0xf]
  %v1057 = vperm.slane %v1055, 0
  %v1058 = vperm.slane %v1055, 1
  %v1059 = vperm.slane %v1055, 2
  %v1060 = vperm.slane %v1055, 3
  %v1065 = vmul.f32 %v1053, %v1057
  %v1066 = vmul.f32 %v1052, %v1058
  %v1067 = vmul.f32 %v1051, %v1059
  %v1068 = vmul.f32 %v1050, %v1060
  %s1069 = scalar_lea.vmem %s4, 28
  %v1070 = vld [vmem:[%s1069] sm:$0xf]
  %v1071 = vpack.c.bf16 %v1065, %v1065
  %v1072 = vpack.c.bf16 %v1066, %v1066
  %v1073 = vpack.c.bf16 %v1067, %v1067
  %v1074 = vpack.c.bf16 %v1068, %v1068
  %v1076 = vsel %vm339, %v1070, 0
  %v1079 = vsel %vm50, %v1071, 0
  %v1082 = vsel %vm50, %v1072, 0
  %v1085 = vsel %vm50, %v1073, 0
  %v1088 = vsel %vm50, %v1074, 0
  %1090 = vmatpush.bf16.msra.mxu0 0
  %1091 = vmatpush.bf16.msra.mxu0 0
  %1092 = vmatpush.bf16.msra.mxu0 0
  %1093 = vmatpush.bf16.msra.mxu0 0
  %1094 = vmatpush.bf16.msra.mxu0 0
  %1095 = vmatpush.bf16.msra.mxu0 0
  %1096 = vmatpush.bf16.msra.mxu0 0
  %1097 = vmatpush.bf16.msra.mxu0 %v1079
  %1098 = vmatmul.bf16.gmra.mxu0 %v1076
  %v1099 = vpop.f32.mrf.mxu0
  %v1100 = vadd.f32 0.0, %v1099
  %v1101 = vpop.f32.mrf.mxu0
  %1102 = vdwg.mxu0
  %1103 = vmatpush.bf16.msra.mxu0 0
  %1104 = vmatpush.bf16.msra.mxu0 0
  %1105 = vmatpush.bf16.msra.mxu0 0
  %1106 = vmatpush.bf16.msra.mxu0 0
  %1107 = vmatpush.bf16.msra.mxu0 0
  %1108 = vmatpush.bf16.msra.mxu0 0
  %1109 = vmatpush.bf16.msra.mxu0 0
  %1110 = vmatpush.bf16.msra.mxu0 %v1082
  %1111 = vmatmul.bf16.gmra.mxu0 %v1076
  %v1112 = vpop.f32.mrf.mxu0
  %v1113 = vadd.f32 0.0, %v1112
  %v1114 = vpop.f32.mrf.mxu0
  %1115 = vdwg.mxu0
  %1116 = vmatpush.bf16.msra.mxu0 0
  %1117 = vmatpush.bf16.msra.mxu0 0
  %1118 = vmatpush.bf16.msra.mxu0 0
  %1119 = vmatpush.bf16.msra.mxu0 0
  %1120 = vmatpush.bf16.msra.mxu0 0
  %1121 = vmatpush.bf16.msra.mxu0 0
  %1122 = vmatpush.bf16.msra.mxu0 0
  %1123 = vmatpush.bf16.msra.mxu0 %v1085
  %1124 = vmatmul.bf16.gmra.mxu0 %v1076
  %v1125 = vpop.f32.mrf.mxu0
  %v1126 = vadd.f32 0.0, %v1125
  %v1127 = vpop.f32.mrf.mxu0
  %1128 = vdwg.mxu0
  %1129 = vmatpush.bf16.msra.mxu0 0
  %1130 = vmatpush.bf16.msra.mxu0 0
  %1131 = vmatpush.bf16.msra.mxu0 0
  %1132 = vmatpush.bf16.msra.mxu0 0
  %1133 = vmatpush.bf16.msra.mxu0 0
  %1134 = vmatpush.bf16.msra.mxu0 0
  %1135 = vmatpush.bf16.msra.mxu0 0
  %1136 = vmatpush.bf16.msra.mxu0 %v1088
  %1137 = vmatmul.bf16.gmra.mxu0 %v1076
  %v1138 = vpop.f32.mrf.mxu0
  %v1139 = vadd.f32 0.0, %v1138
  %v1140 = vpop.f32.mrf.mxu0
  %1141 = vdwg.mxu0
  %v1142 = vadd.f32 %v1037, %v1100
  %v1143 = vadd.f32 %v1038, %v1113
  %v1144 = vadd.f32 %v1039, %v1126
  %v1145 = vadd.f32 %v1040, %v1139
  %1146 = vrot.lane.b32.xlu0 %v27, 55
  %v1147 = vpop.permute.xlu0 %1146
  %1148 = vrot.lane.b32.xlu0 %v28, 55
  %v1149 = vpop.permute.xlu0 %1148
  %1150 = vrot.lane.b32.xlu0 %v29, 55
  %v1151 = vpop.permute.xlu0 %1150
  %1152 = vrot.lane.b32.xlu0 %v30, 55
  %v1153 = vpop.permute.xlu0 %1152
  %vm1154 = vcmp.lt.s32.totalorder %v314, 55
  %v1155 = vsel %vm1154, %v1151, %v1153
  %v1156 = vsel %vm1154, %v1149, %v1151
  %v1157 = vsel %vm1154, %v1147, %v1149
  %v1158 = vsel %vm1154, %v1153, %v1147
  %s1159 = scalar_lea.vmem %s5, 32
  %v1160 = vld [vmem:[%s1159] ss:$8 sm:$0xf]
  %v1162 = vperm.slane %v1160, 0
  %v1163 = vperm.slane %v1160, 1
  %v1164 = vperm.slane %v1160, 2
  %v1165 = vperm.slane %v1160, 3
  %v1170 = vmul.f32 %v1158, %v1162
  %v1171 = vmul.f32 %v1157, %v1163
  %v1172 = vmul.f32 %v1156, %v1164
  %v1173 = vmul.f32 %v1155, %v1165
  %s1174 = scalar_lea.vmem %s4, 32
  %v1175 = vld [vmem:[%s1174] sm:$0xf]
  %v1176 = vpack.c.bf16 %v1170, %v1170
  %v1177 = vpack.c.bf16 %v1171, %v1171
  %v1178 = vpack.c.bf16 %v1172, %v1172
  %v1179 = vpack.c.bf16 %v1173, %v1173
  %v1181 = vsel %vm339, %v1175, 0
  %v1184 = vsel %vm50, %v1176, 0
  %v1187 = vsel %vm50, %v1177, 0
  %v1190 = vsel %vm50, %v1178, 0
  %v1193 = vsel %vm50, %v1179, 0
  %1195 = vmatpush.bf16.msra.mxu0 0
  %1196 = vmatpush.bf16.msra.mxu0 0
  %1197 = vmatpush.bf16.msra.mxu0 0
  %1198 = vmatpush.bf16.msra.mxu0 0
  %1199 = vmatpush.bf16.msra.mxu0 0
  %1200 = vmatpush.bf16.msra.mxu0 0
  %1201 = vmatpush.bf16.msra.mxu0 0
  %1202 = vmatpush.bf16.msra.mxu0 %v1184
  %1203 = vmatmul.bf16.gmra.mxu0 %v1181
  %v1204 = vpop.f32.mrf.mxu0
  %v1205 = vadd.f32 0.0, %v1204
  %v1206 = vpop.f32.mrf.mxu0
  %1207 = vdwg.mxu0
  %1208 = vmatpush.bf16.msra.mxu0 0
  %1209 = vmatpush.bf16.msra.mxu0 0
  %1210 = vmatpush.bf16.msra.mxu0 0
  %1211 = vmatpush.bf16.msra.mxu0 0
  %1212 = vmatpush.bf16.msra.mxu0 0
  %1213 = vmatpush.bf16.msra.mxu0 0
  %1214 = vmatpush.bf16.msra.mxu0 0
  %1215 = vmatpush.bf16.msra.mxu0 %v1187
  %1216 = vmatmul.bf16.gmra.mxu0 %v1181
  %v1217 = vpop.f32.mrf.mxu0
  %v1218 = vadd.f32 0.0, %v1217
  %v1219 = vpop.f32.mrf.mxu0
  %1220 = vdwg.mxu0
  %1221 = vmatpush.bf16.msra.mxu0 0
  %1222 = vmatpush.bf16.msra.mxu0 0
  %1223 = vmatpush.bf16.msra.mxu0 0
  %1224 = vmatpush.bf16.msra.mxu0 0
  %1225 = vmatpush.bf16.msra.mxu0 0
  %1226 = vmatpush.bf16.msra.mxu0 0
  %1227 = vmatpush.bf16.msra.mxu0 0
  %1228 = vmatpush.bf16.msra.mxu0 %v1190
  %1229 = vmatmul.bf16.gmra.mxu0 %v1181
  %v1230 = vpop.f32.mrf.mxu0
  %v1231 = vadd.f32 0.0, %v1230
  %v1232 = vpop.f32.mrf.mxu0
  %1233 = vdwg.mxu0
  %1234 = vmatpush.bf16.msra.mxu0 0
  %1235 = vmatpush.bf16.msra.mxu0 0
  %1236 = vmatpush.bf16.msra.mxu0 0
  %1237 = vmatpush.bf16.msra.mxu0 0
  %1238 = vmatpush.bf16.msra.mxu0 0
  %1239 = vmatpush.bf16.msra.mxu0 0
  %1240 = vmatpush.bf16.msra.mxu0 0
  %1241 = vmatpush.bf16.msra.mxu0 %v1193
  %1242 = vmatmul.bf16.gmra.mxu0 %v1181
  %v1243 = vpop.f32.mrf.mxu0
  %v1244 = vadd.f32 0.0, %v1243
  %v1245 = vpop.f32.mrf.mxu0
  %1246 = vdwg.mxu0
  %v1247 = vadd.f32 %v1142, %v1205
  %v1248 = vadd.f32 %v1143, %v1218
  %v1249 = vadd.f32 %v1144, %v1231
  %v1250 = vadd.f32 %v1145, %v1244
  %1251 = vrot.lane.b32.xlu0 %v27, 9
  %v1252 = vpop.permute.xlu0 %1251
  %1253 = vrot.lane.b32.xlu0 %v28, 9
  %v1254 = vpop.permute.xlu0 %1253
  %1255 = vrot.lane.b32.xlu0 %v29, 9
  %v1256 = vpop.permute.xlu0 %1255
  %1257 = vrot.lane.b32.xlu0 %v30, 9
  %v1258 = vpop.permute.xlu0 %1257
  %vm1259 = vcmp.lt.s32.totalorder %v314, 9
  %v1260 = vsel %vm1259, %v1256, %v1258
  %v1261 = vsel %vm1259, %v1254, %v1256
  %v1262 = vsel %vm1259, %v1252, %v1254
  %v1263 = vsel %vm1259, %v1258, %v1252
  %s1264 = scalar_lea.vmem %s5, 33
  %v1265 = vld [vmem:[%s1264] ss:$8 sm:$0xf]
  %v1267 = vperm.slane %v1265, 0
  %v1268 = vperm.slane %v1265, 1
  %v1269 = vperm.slane %v1265, 2
  %v1270 = vperm.slane %v1265, 3
  %v1275 = vmul.f32 %v1263, %v1267
  %v1276 = vmul.f32 %v1262, %v1268
  %v1277 = vmul.f32 %v1261, %v1269
  %v1278 = vmul.f32 %v1260, %v1270
  %s1279 = scalar_lea.vmem %s4, 36
  %v1280 = vld [vmem:[%s1279] sm:$0xf]
  %v1281 = vpack.c.bf16 %v1275, %v1275
  %v1282 = vpack.c.bf16 %v1276, %v1276
  %v1283 = vpack.c.bf16 %v1277, %v1277
  %v1284 = vpack.c.bf16 %v1278, %v1278
  %v1286 = vsel %vm339, %v1280, 0
  %v1289 = vsel %vm50, %v1281, 0
  %v1292 = vsel %vm50, %v1282, 0
  %v1295 = vsel %vm50, %v1283, 0
  %v1298 = vsel %vm50, %v1284, 0
  %1300 = vmatpush.bf16.msra.mxu0 0
  %1301 = vmatpush.bf16.msra.mxu0 0
  %1302 = vmatpush.bf16.msra.mxu0 0
  %1303 = vmatpush.bf16.msra.mxu0 0
  %1304 = vmatpush.bf16.msra.mxu0 0
  %1305 = vmatpush.bf16.msra.mxu0 0
  %1306 = vmatpush.bf16.msra.mxu0 0
  %1307 = vmatpush.bf16.msra.mxu0 %v1289
  %1308 = vmatmul.bf16.gmra.mxu0 %v1286
  %v1309 = vpop.f32.mrf.mxu0
  %v1310 = vadd.f32 0.0, %v1309
  %v1311 = vpop.f32.mrf.mxu0
  %1312 = vdwg.mxu0
  %1313 = vmatpush.bf16.msra.mxu0 0
  %1314 = vmatpush.bf16.msra.mxu0 0
  %1315 = vmatpush.bf16.msra.mxu0 0
  %1316 = vmatpush.bf16.msra.mxu0 0
  %1317 = vmatpush.bf16.msra.mxu0 0
  %1318 = vmatpush.bf16.msra.mxu0 0
  %1319 = vmatpush.bf16.msra.mxu0 0
  %1320 = vmatpush.bf16.msra.mxu0 %v1292
  %1321 = vmatmul.bf16.gmra.mxu0 %v1286
  %v1322 = vpop.f32.mrf.mxu0
  %v1323 = vadd.f32 0.0, %v1322
  %v1324 = vpop.f32.mrf.mxu0
  %1325 = vdwg.mxu0
  %1326 = vmatpush.bf16.msra.mxu0 0
  %1327 = vmatpush.bf16.msra.mxu0 0
  %1328 = vmatpush.bf16.msra.mxu0 0
  %1329 = vmatpush.bf16.msra.mxu0 0
  %1330 = vmatpush.bf16.msra.mxu0 0
  %1331 = vmatpush.bf16.msra.mxu0 0
  %1332 = vmatpush.bf16.msra.mxu0 0
  %1333 = vmatpush.bf16.msra.mxu0 %v1295
  %1334 = vmatmul.bf16.gmra.mxu0 %v1286
  %v1335 = vpop.f32.mrf.mxu0
  %v1336 = vadd.f32 0.0, %v1335
  %v1337 = vpop.f32.mrf.mxu0
  %1338 = vdwg.mxu0
  %1339 = vmatpush.bf16.msra.mxu0 0
  %1340 = vmatpush.bf16.msra.mxu0 0
  %1341 = vmatpush.bf16.msra.mxu0 0
  %1342 = vmatpush.bf16.msra.mxu0 0
  %1343 = vmatpush.bf16.msra.mxu0 0
  %1344 = vmatpush.bf16.msra.mxu0 0
  %1345 = vmatpush.bf16.msra.mxu0 0
  %1346 = vmatpush.bf16.msra.mxu0 %v1298
  %1347 = vmatmul.bf16.gmra.mxu0 %v1286
  %v1348 = vpop.f32.mrf.mxu0
  %v1349 = vadd.f32 0.0, %v1348
  %v1350 = vpop.f32.mrf.mxu0
  %1351 = vdwg.mxu0
  %v1352 = vadd.f32 %v1247, %v1310
  %v1353 = vadd.f32 %v1248, %v1323
  %v1354 = vadd.f32 %v1249, %v1336
  %v1355 = vadd.f32 %v1250, %v1349
  %1356 = vrot.lane.b32.xlu0 %v27, 8
  %v1357 = vpop.permute.xlu0 %1356
  %1358 = vrot.lane.b32.xlu0 %v28, 8
  %v1359 = vpop.permute.xlu0 %1358
  %1360 = vrot.lane.b32.xlu0 %v29, 8
  %v1361 = vpop.permute.xlu0 %1360
  %1362 = vrot.lane.b32.xlu0 %v30, 8
  %v1363 = vpop.permute.xlu0 %1362
  %vm1364 = vcmp.lt.s32.totalorder %v314, 8
  %v1365 = vsel %vm1364, %v1361, %v1363
  %v1366 = vsel %vm1364, %v1359, %v1361
  %v1367 = vsel %vm1364, %v1357, %v1359
  %v1368 = vsel %vm1364, %v1363, %v1357
  %s1369 = scalar_lea.vmem %s5, 34
  %v1370 = vld [vmem:[%s1369] ss:$8 sm:$0xf]
  %v1372 = vperm.slane %v1370, 0
  %v1373 = vperm.slane %v1370, 1
  %v1374 = vperm.slane %v1370, 2
  %v1375 = vperm.slane %v1370, 3
  %v1380 = vmul.f32 %v1368, %v1372
  %v1381 = vmul.f32 %v1367, %v1373
  %v1382 = vmul.f32 %v1366, %v1374
  %v1383 = vmul.f32 %v1365, %v1375
  %s1384 = scalar_lea.vmem %s4, 40
  %v1385 = vld [vmem:[%s1384] sm:$0xf]
  %v1386 = vpack.c.bf16 %v1380, %v1380
  %v1387 = vpack.c.bf16 %v1381, %v1381
  %v1388 = vpack.c.bf16 %v1382, %v1382
  %v1389 = vpack.c.bf16 %v1383, %v1383
  %v1391 = vsel %vm339, %v1385, 0
  %v1394 = vsel %vm50, %v1386, 0
  %v1397 = vsel %vm50, %v1387, 0
  %v1400 = vsel %vm50, %v1388, 0
  %v1403 = vsel %vm50, %v1389, 0
  %1405 = vmatpush.bf16.msra.mxu0 0
  %1406 = vmatpush.bf16.msra.mxu0 0
  %1407 = vmatpush.bf16.msra.mxu0 0
  %1408 = vmatpush.bf16.msra.mxu0 0
  %1409 = vmatpush.bf16.msra.mxu0 0
  %1410 = vmatpush.bf16.msra.mxu0 0
  %1411 = vmatpush.bf16.msra.mxu0 0
  %1412 = vmatpush.bf16.msra.mxu0 %v1394
  %1413 = vmatmul.bf16.gmra.mxu0 %v1391
  %v1414 = vpop.f32.mrf.mxu0
  %v1415 = vadd.f32 0.0, %v1414
  %v1416 = vpop.f32.mrf.mxu0
  %1417 = vdwg.mxu0
  %1418 = vmatpush.bf16.msra.mxu0 0
  %1419 = vmatpush.bf16.msra.mxu0 0
  %1420 = vmatpush.bf16.msra.mxu0 0
  %1421 = vmatpush.bf16.msra.mxu0 0
  %1422 = vmatpush.bf16.msra.mxu0 0
  %1423 = vmatpush.bf16.msra.mxu0 0
  %1424 = vmatpush.bf16.msra.mxu0 0
  %1425 = vmatpush.bf16.msra.mxu0 %v1397
  %1426 = vmatmul.bf16.gmra.mxu0 %v1391
  %v1427 = vpop.f32.mrf.mxu0
  %v1428 = vadd.f32 0.0, %v1427
  %v1429 = vpop.f32.mrf.mxu0
  %1430 = vdwg.mxu0
  %1431 = vmatpush.bf16.msra.mxu0 0
  %1432 = vmatpush.bf16.msra.mxu0 0
  %1433 = vmatpush.bf16.msra.mxu0 0
  %1434 = vmatpush.bf16.msra.mxu0 0
  %1435 = vmatpush.bf16.msra.mxu0 0
  %1436 = vmatpush.bf16.msra.mxu0 0
  %1437 = vmatpush.bf16.msra.mxu0 0
  %1438 = vmatpush.bf16.msra.mxu0 %v1400
  %1439 = vmatmul.bf16.gmra.mxu0 %v1391
  %v1440 = vpop.f32.mrf.mxu0
  %v1441 = vadd.f32 0.0, %v1440
  %v1442 = vpop.f32.mrf.mxu0
  %1443 = vdwg.mxu0
  %1444 = vmatpush.bf16.msra.mxu0 0
  %1445 = vmatpush.bf16.msra.mxu0 0
  %1446 = vmatpush.bf16.msra.mxu0 0
  %1447 = vmatpush.bf16.msra.mxu0 0
  %1448 = vmatpush.bf16.msra.mxu0 0
  %1449 = vmatpush.bf16.msra.mxu0 0
  %1450 = vmatpush.bf16.msra.mxu0 0
  %1451 = vmatpush.bf16.msra.mxu0 %v1403
  %1452 = vmatmul.bf16.gmra.mxu0 %v1391
  %v1453 = vpop.f32.mrf.mxu0
  %v1454 = vadd.f32 0.0, %v1453
  %v1455 = vpop.f32.mrf.mxu0
  %1456 = vdwg.mxu0
  %v1457 = vadd.f32 %v1352, %v1415
  %v1458 = vadd.f32 %v1353, %v1428
  %v1459 = vadd.f32 %v1354, %v1441
  %v1460 = vadd.f32 %v1355, %v1454
  %1461 = vrot.lane.b32.xlu0 %v27, 7
  %v1462 = vpop.permute.xlu0 %1461
  %1463 = vrot.lane.b32.xlu0 %v28, 7
  %v1464 = vpop.permute.xlu0 %1463
  %1465 = vrot.lane.b32.xlu0 %v29, 7
  %v1466 = vpop.permute.xlu0 %1465
  %1467 = vrot.lane.b32.xlu0 %v30, 7
  %v1468 = vpop.permute.xlu0 %1467
  %vm1469 = vcmp.lt.s32.totalorder %v314, 7
  %v1470 = vsel %vm1469, %v1466, %v1468
  %v1471 = vsel %vm1469, %v1464, %v1466
  %v1472 = vsel %vm1469, %v1462, %v1464
  %v1473 = vsel %vm1469, %v1468, %v1462
  %s1474 = scalar_lea.vmem %s5, 35
  %v1475 = vld [vmem:[%s1474] ss:$8 sm:$0xf]
  %v1477 = vperm.slane %v1475, 0
  %v1478 = vperm.slane %v1475, 1
  %v1479 = vperm.slane %v1475, 2
  %v1480 = vperm.slane %v1475, 3
  %v1485 = vmul.f32 %v1473, %v1477
  %v1486 = vmul.f32 %v1472, %v1478
  %v1487 = vmul.f32 %v1471, %v1479
  %v1488 = vmul.f32 %v1470, %v1480
  %s1489 = scalar_lea.vmem %s4, 44
  %v1490 = vld [vmem:[%s1489] sm:$0xf]
  %v1491 = vpack.c.bf16 %v1485, %v1485
  %v1492 = vpack.c.bf16 %v1486, %v1486
  %v1493 = vpack.c.bf16 %v1487, %v1487
  %v1494 = vpack.c.bf16 %v1488, %v1488
  %v1496 = vsel %vm339, %v1490, 0
  %v1499 = vsel %vm50, %v1491, 0
  %v1502 = vsel %vm50, %v1492, 0
  %v1505 = vsel %vm50, %v1493, 0
  %v1508 = vsel %vm50, %v1494, 0
  %1510 = vmatpush.bf16.msra.mxu0 0
  %1511 = vmatpush.bf16.msra.mxu0 0
  %1512 = vmatpush.bf16.msra.mxu0 0
  %1513 = vmatpush.bf16.msra.mxu0 0
  %1514 = vmatpush.bf16.msra.mxu0 0
  %1515 = vmatpush.bf16.msra.mxu0 0
  %1516 = vmatpush.bf16.msra.mxu0 0
  %1517 = vmatpush.bf16.msra.mxu0 %v1499
  %1518 = vmatmul.bf16.gmra.mxu0 %v1496
  %v1519 = vpop.f32.mrf.mxu0
  %v1520 = vadd.f32 0.0, %v1519
  %v1521 = vpop.f32.mrf.mxu0
  %1522 = vdwg.mxu0
  %1523 = vmatpush.bf16.msra.mxu0 0
  %1524 = vmatpush.bf16.msra.mxu0 0
  %1525 = vmatpush.bf16.msra.mxu0 0
  %1526 = vmatpush.bf16.msra.mxu0 0
  %1527 = vmatpush.bf16.msra.mxu0 0
  %1528 = vmatpush.bf16.msra.mxu0 0
  %1529 = vmatpush.bf16.msra.mxu0 0
  %1530 = vmatpush.bf16.msra.mxu0 %v1502
  %1531 = vmatmul.bf16.gmra.mxu0 %v1496
  %v1532 = vpop.f32.mrf.mxu0
  %v1533 = vadd.f32 0.0, %v1532
  %v1534 = vpop.f32.mrf.mxu0
  %1535 = vdwg.mxu0
  %1536 = vmatpush.bf16.msra.mxu0 0
  %1537 = vmatpush.bf16.msra.mxu0 0
  %1538 = vmatpush.bf16.msra.mxu0 0
  %1539 = vmatpush.bf16.msra.mxu0 0
  %1540 = vmatpush.bf16.msra.mxu0 0
  %1541 = vmatpush.bf16.msra.mxu0 0
  %1542 = vmatpush.bf16.msra.mxu0 0
  %1543 = vmatpush.bf16.msra.mxu0 %v1505
  %1544 = vmatmul.bf16.gmra.mxu0 %v1496
  %v1545 = vpop.f32.mrf.mxu0
  %v1546 = vadd.f32 0.0, %v1545
  %v1547 = vpop.f32.mrf.mxu0
  %1548 = vdwg.mxu0
  %1549 = vmatpush.bf16.msra.mxu0 0
  %1550 = vmatpush.bf16.msra.mxu0 0
  %1551 = vmatpush.bf16.msra.mxu0 0
  %1552 = vmatpush.bf16.msra.mxu0 0
  %1553 = vmatpush.bf16.msra.mxu0 0
  %1554 = vmatpush.bf16.msra.mxu0 0
  %1555 = vmatpush.bf16.msra.mxu0 0
  %1556 = vmatpush.bf16.msra.mxu0 %v1508
  %1557 = vmatmul.bf16.gmra.mxu0 %v1496
  %v1558 = vpop.f32.mrf.mxu0
  %v1559 = vadd.f32 0.0, %v1558
  %v1560 = vpop.f32.mrf.mxu0
  %1561 = vdwg.mxu0
  %v1562 = vadd.f32 %v1457, %v1520
  %v1563 = vadd.f32 %v1458, %v1533
  %v1564 = vadd.f32 %v1459, %v1546
  %v1565 = vadd.f32 %v1460, %v1559
  %1566 = vrot.lane.b32.xlu0 %v27, 1
  %v1567 = vpop.permute.xlu0 %1566
  %1568 = vrot.lane.b32.xlu0 %v28, 1
  %v1569 = vpop.permute.xlu0 %1568
  %1570 = vrot.lane.b32.xlu0 %v29, 1
  %v1571 = vpop.permute.xlu0 %1570
  %1572 = vrot.lane.b32.xlu0 %v30, 1
  %v1573 = vpop.permute.xlu0 %1572
  %vm1574 = vcmp.lt.s32.totalorder %v314, 1
  %v1575 = vsel %vm1574, %v1571, %v1573
  %v1576 = vsel %vm1574, %v1569, %v1571
  %v1577 = vsel %vm1574, %v1567, %v1569
  %v1578 = vsel %vm1574, %v1573, %v1567
  %s1579 = scalar_lea.vmem %s5, 36
  %v1580 = vld [vmem:[%s1579] ss:$8 sm:$0xf]
  %v1582 = vperm.slane %v1580, 0
  %v1583 = vperm.slane %v1580, 1
  %v1584 = vperm.slane %v1580, 2
  %v1585 = vperm.slane %v1580, 3
  %v1590 = vmul.f32 %v1578, %v1582
  %v1591 = vmul.f32 %v1577, %v1583
  %v1592 = vmul.f32 %v1576, %v1584
  %v1593 = vmul.f32 %v1575, %v1585
  %s1594 = scalar_lea.vmem %s4, 48
  %v1595 = vld [vmem:[%s1594] sm:$0xf]
  %v1596 = vpack.c.bf16 %v1590, %v1590
  %v1597 = vpack.c.bf16 %v1591, %v1591
  %v1598 = vpack.c.bf16 %v1592, %v1592
  %v1599 = vpack.c.bf16 %v1593, %v1593
  %v1601 = vsel %vm339, %v1595, 0
  %v1604 = vsel %vm50, %v1596, 0
  %v1607 = vsel %vm50, %v1597, 0
  %v1610 = vsel %vm50, %v1598, 0
  %v1613 = vsel %vm50, %v1599, 0
  %1615 = vmatpush.bf16.msra.mxu0 0
  %1616 = vmatpush.bf16.msra.mxu0 0
  %1617 = vmatpush.bf16.msra.mxu0 0
  %1618 = vmatpush.bf16.msra.mxu0 0
  %1619 = vmatpush.bf16.msra.mxu0 0
  %1620 = vmatpush.bf16.msra.mxu0 0
  %1621 = vmatpush.bf16.msra.mxu0 0
  %1622 = vmatpush.bf16.msra.mxu0 %v1604
  %1623 = vmatmul.bf16.gmra.mxu0 %v1601
  %v1624 = vpop.f32.mrf.mxu0
  %v1625 = vadd.f32 0.0, %v1624
  %v1626 = vpop.f32.mrf.mxu0
  %1627 = vdwg.mxu0
  %1628 = vmatpush.bf16.msra.mxu0 0
  %1629 = vmatpush.bf16.msra.mxu0 0
  %1630 = vmatpush.bf16.msra.mxu0 0
  %1631 = vmatpush.bf16.msra.mxu0 0
  %1632 = vmatpush.bf16.msra.mxu0 0
  %1633 = vmatpush.bf16.msra.mxu0 0
  %1634 = vmatpush.bf16.msra.mxu0 0
  %1635 = vmatpush.bf16.msra.mxu0 %v1607
  %1636 = vmatmul.bf16.gmra.mxu0 %v1601
  %v1637 = vpop.f32.mrf.mxu0
  %v1638 = vadd.f32 0.0, %v1637
  %v1639 = vpop.f32.mrf.mxu0
  %1640 = vdwg.mxu0
  %1641 = vmatpush.bf16.msra.mxu0 0
  %1642 = vmatpush.bf16.msra.mxu0 0
  %1643 = vmatpush.bf16.msra.mxu0 0
  %1644 = vmatpush.bf16.msra.mxu0 0
  %1645 = vmatpush.bf16.msra.mxu0 0
  %1646 = vmatpush.bf16.msra.mxu0 0
  %1647 = vmatpush.bf16.msra.mxu0 0
  %1648 = vmatpush.bf16.msra.mxu0 %v1610
  %1649 = vmatmul.bf16.gmra.mxu0 %v1601
  %v1650 = vpop.f32.mrf.mxu0
  %v1651 = vadd.f32 0.0, %v1650
  %v1652 = vpop.f32.mrf.mxu0
  %1653 = vdwg.mxu0
  %1654 = vmatpush.bf16.msra.mxu0 0
  %1655 = vmatpush.bf16.msra.mxu0 0
  %1656 = vmatpush.bf16.msra.mxu0 0
  %1657 = vmatpush.bf16.msra.mxu0 0
  %1658 = vmatpush.bf16.msra.mxu0 0
  %1659 = vmatpush.bf16.msra.mxu0 0
  %1660 = vmatpush.bf16.msra.mxu0 0
  %1661 = vmatpush.bf16.msra.mxu0 %v1613
  %1662 = vmatmul.bf16.gmra.mxu0 %v1601
  %v1663 = vpop.f32.mrf.mxu0
  %v1664 = vadd.f32 0.0, %v1663
  %v1665 = vpop.f32.mrf.mxu0
  %1666 = vdwg.mxu0
  %v1667 = vadd.f32 %v1562, %v1625
  %v1668 = vadd.f32 %v1563, %v1638
  %v1669 = vadd.f32 %v1564, %v1651
  %v1670 = vadd.f32 %v1565, %v1664
  %s1671 = scalar_lea.vmem %s4, 52
  %v1672 = vld [vmem:[%s1671] sm:$0xf]
  %v1673 = vpack.c.bf16 %v27, %v27
  %v1674 = vpack.c.bf16 %v28, %v28
  %v1675 = vpack.c.bf16 %v29, %v29
  %v1676 = vpack.c.bf16 %v30, %v30
  %v1678 = vsel %vm339, %v1672, 0
  %v1681 = vsel %vm50, %v1673, 0
  %v1684 = vsel %vm50, %v1674, 0
  %v1687 = vsel %vm50, %v1675, 0
  %v1690 = vsel %vm50, %v1676, 0
  %1692 = vmatpush.bf16.msra.mxu0 0
  %1693 = vmatpush.bf16.msra.mxu0 0
  %1694 = vmatpush.bf16.msra.mxu0 0
  %1695 = vmatpush.bf16.msra.mxu0 0
  %1696 = vmatpush.bf16.msra.mxu0 0
  %1697 = vmatpush.bf16.msra.mxu0 0
  %1698 = vmatpush.bf16.msra.mxu0 0
  %1699 = vmatpush.bf16.msra.mxu0 %v1681
  %1700 = vmatmul.bf16.gmra.mxu0 %v1678
  %v1701 = vpop.f32.mrf.mxu0
  %v1702 = vadd.f32 0.0, %v1701
  %v1703 = vpop.f32.mrf.mxu0
  %1704 = vdwg.mxu0
  %1705 = vmatpush.bf16.msra.mxu0 0
  %1706 = vmatpush.bf16.msra.mxu0 0
  %1707 = vmatpush.bf16.msra.mxu0 0
  %1708 = vmatpush.bf16.msra.mxu0 0
  %1709 = vmatpush.bf16.msra.mxu0 0
  %1710 = vmatpush.bf16.msra.mxu0 0
  %1711 = vmatpush.bf16.msra.mxu0 0
  %1712 = vmatpush.bf16.msra.mxu0 %v1684
  %1713 = vmatmul.bf16.gmra.mxu0 %v1678
  %v1714 = vpop.f32.mrf.mxu0
  %v1715 = vadd.f32 0.0, %v1714
  %v1716 = vpop.f32.mrf.mxu0
  %1717 = vdwg.mxu0
  %1718 = vmatpush.bf16.msra.mxu0 0
  %1719 = vmatpush.bf16.msra.mxu0 0
  %1720 = vmatpush.bf16.msra.mxu0 0
  %1721 = vmatpush.bf16.msra.mxu0 0
  %1722 = vmatpush.bf16.msra.mxu0 0
  %1723 = vmatpush.bf16.msra.mxu0 0
  %1724 = vmatpush.bf16.msra.mxu0 0
  %1725 = vmatpush.bf16.msra.mxu0 %v1687
  %1726 = vmatmul.bf16.gmra.mxu0 %v1678
  %v1727 = vpop.f32.mrf.mxu0
  %v1728 = vadd.f32 0.0, %v1727
  %v1729 = vpop.f32.mrf.mxu0
  %1730 = vdwg.mxu0
  %1731 = vmatpush.bf16.msra.mxu0 0
  %1732 = vmatpush.bf16.msra.mxu0 0
  %1733 = vmatpush.bf16.msra.mxu0 0
  %1734 = vmatpush.bf16.msra.mxu0 0
  %1735 = vmatpush.bf16.msra.mxu0 0
  %1736 = vmatpush.bf16.msra.mxu0 0
  %1737 = vmatpush.bf16.msra.mxu0 0
  %1738 = vmatpush.bf16.msra.mxu0 %v1690
  %1739 = vmatmul.bf16.gmra.mxu0 %v1678
  %v1740 = vpop.f32.mrf.mxu0
  %v1741 = vadd.f32 0.0, %v1740
  %v1742 = vpop.f32.mrf.mxu0
  %1743 = vdwg.mxu0
  %v1744 = vadd.f32 %v1667, %v1702
  %v1745 = vadd.f32 %v1668, %v1715
  %v1746 = vadd.f32 %v1669, %v1728
  %v1747 = vadd.f32 %v1670, %v1741
  %1748 = vrot.lane.b32.xlu0 %v27, 127
  %v1749 = vpop.permute.xlu0 %1748
  %1750 = vrot.lane.b32.xlu0 %v28, 127
  %v1751 = vpop.permute.xlu0 %1750
  %1752 = vrot.lane.b32.xlu0 %v29, 127
  %v1753 = vpop.permute.xlu0 %1752
  %1754 = vrot.lane.b32.xlu0 %v30, 127
  %v1755 = vpop.permute.xlu0 %1754
  %vm1756 = vcmp.lt.s32.totalorder %v314, 127
  %v1757 = vsel %vm1756, %v1753, %v1755
  %v1758 = vsel %vm1756, %v1751, %v1753
  %v1759 = vsel %vm1756, %v1749, %v1751
  %v1760 = vsel %vm1756, %v1755, %v1749
  %s1761 = scalar_lea.vmem %s5, 38
  %v1762 = vld [vmem:[%s1761] ss:$8 sm:$0xf]
  %v1764 = vperm.slane %v1762, 0
  %v1765 = vperm.slane %v1762, 1
  %v1766 = vperm.slane %v1762, 2
  %v1767 = vperm.slane %v1762, 3
  %v1772 = vmul.f32 %v1759, %v1764
  %v1773 = vmul.f32 %v1758, %v1765
  %v1774 = vmul.f32 %v1757, %v1766
  %v1775 = vmul.f32 %v1760, %v1767
  %s1776 = scalar_lea.vmem %s4, 56
  %v1777 = vld [vmem:[%s1776] sm:$0xf]
  %v1778 = vpack.c.bf16 %v1772, %v1772
  %v1779 = vpack.c.bf16 %v1773, %v1773
  %v1780 = vpack.c.bf16 %v1774, %v1774
  %v1781 = vpack.c.bf16 %v1775, %v1775
  %v1783 = vsel %vm339, %v1777, 0
  %v1786 = vsel %vm50, %v1778, 0
  %v1789 = vsel %vm50, %v1779, 0
  %v1792 = vsel %vm50, %v1780, 0
  %v1795 = vsel %vm50, %v1781, 0
  %1797 = vmatpush.bf16.msra.mxu0 0
  %1798 = vmatpush.bf16.msra.mxu0 0
  %1799 = vmatpush.bf16.msra.mxu0 0
  %1800 = vmatpush.bf16.msra.mxu0 0
  %1801 = vmatpush.bf16.msra.mxu0 0
  %1802 = vmatpush.bf16.msra.mxu0 0
  %1803 = vmatpush.bf16.msra.mxu0 0
  %1804 = vmatpush.bf16.msra.mxu0 %v1786
  %1805 = vmatmul.bf16.gmra.mxu0 %v1783
  %v1806 = vpop.f32.mrf.mxu0
  %v1807 = vadd.f32 0.0, %v1806
  %v1808 = vpop.f32.mrf.mxu0
  %1809 = vdwg.mxu0
  %1810 = vmatpush.bf16.msra.mxu0 0
  %1811 = vmatpush.bf16.msra.mxu0 0
  %1812 = vmatpush.bf16.msra.mxu0 0
  %1813 = vmatpush.bf16.msra.mxu0 0
  %1814 = vmatpush.bf16.msra.mxu0 0
  %1815 = vmatpush.bf16.msra.mxu0 0
  %1816 = vmatpush.bf16.msra.mxu0 0
  %1817 = vmatpush.bf16.msra.mxu0 %v1789
  %1818 = vmatmul.bf16.gmra.mxu0 %v1783
  %v1819 = vpop.f32.mrf.mxu0
  %v1820 = vadd.f32 0.0, %v1819
  %v1821 = vpop.f32.mrf.mxu0
  %1822 = vdwg.mxu0
  %1823 = vmatpush.bf16.msra.mxu0 0
  %1824 = vmatpush.bf16.msra.mxu0 0
  %1825 = vmatpush.bf16.msra.mxu0 0
  %1826 = vmatpush.bf16.msra.mxu0 0
  %1827 = vmatpush.bf16.msra.mxu0 0
  %1828 = vmatpush.bf16.msra.mxu0 0
  %1829 = vmatpush.bf16.msra.mxu0 0
  %1830 = vmatpush.bf16.msra.mxu0 %v1792
  %1831 = vmatmul.bf16.gmra.mxu0 %v1783
  %v1832 = vpop.f32.mrf.mxu0
  %v1833 = vadd.f32 0.0, %v1832
  %v1834 = vpop.f32.mrf.mxu0
  %1835 = vdwg.mxu0
  %1836 = vmatpush.bf16.msra.mxu0 0
  %1837 = vmatpush.bf16.msra.mxu0 0
  %1838 = vmatpush.bf16.msra.mxu0 0
  %1839 = vmatpush.bf16.msra.mxu0 0
  %1840 = vmatpush.bf16.msra.mxu0 0
  %1841 = vmatpush.bf16.msra.mxu0 0
  %1842 = vmatpush.bf16.msra.mxu0 0
  %1843 = vmatpush.bf16.msra.mxu0 %v1795
  %1844 = vmatmul.bf16.gmra.mxu0 %v1783
  %v1845 = vpop.f32.mrf.mxu0
  %v1846 = vadd.f32 0.0, %v1845
  %v1847 = vpop.f32.mrf.mxu0
  %1848 = vdwg.mxu0
  %v1849 = vadd.f32 %v1744, %v1807
  %v1850 = vadd.f32 %v1745, %v1820
  %v1851 = vadd.f32 %v1746, %v1833
  %v1852 = vadd.f32 %v1747, %v1846
  %1853 = vrot.lane.b32.xlu0 %v27, 121
  %v1854 = vpop.permute.xlu0 %1853
  %1855 = vrot.lane.b32.xlu0 %v28, 121
  %v1856 = vpop.permute.xlu0 %1855
  %1857 = vrot.lane.b32.xlu0 %v29, 121
  %v1858 = vpop.permute.xlu0 %1857
  %1859 = vrot.lane.b32.xlu0 %v30, 121
  %v1860 = vpop.permute.xlu0 %1859
  %vm1861 = vcmp.lt.s32.totalorder %v314, 121
  %v1862 = vsel %vm1861, %v1858, %v1860
  %v1863 = vsel %vm1861, %v1856, %v1858
  %v1864 = vsel %vm1861, %v1854, %v1856
  %v1865 = vsel %vm1861, %v1860, %v1854
  %s1866 = scalar_lea.vmem %s5, 39
  %v1867 = vld [vmem:[%s1866] ss:$8 sm:$0xf]
  %v1869 = vperm.slane %v1867, 0
  %v1870 = vperm.slane %v1867, 1
  %v1871 = vperm.slane %v1867, 2
  %v1872 = vperm.slane %v1867, 3
  %v1877 = vmul.f32 %v1864, %v1869
  %v1878 = vmul.f32 %v1863, %v1870
  %v1879 = vmul.f32 %v1862, %v1871
  %v1880 = vmul.f32 %v1865, %v1872
  %s1881 = scalar_lea.vmem %s4, 60
  %v1882 = vld [vmem:[%s1881] sm:$0xf]
  %v1883 = vpack.c.bf16 %v1877, %v1877
  %v1884 = vpack.c.bf16 %v1878, %v1878
  %v1885 = vpack.c.bf16 %v1879, %v1879
  %v1886 = vpack.c.bf16 %v1880, %v1880
  %v1888 = vsel %vm339, %v1882, 0
  %v1891 = vsel %vm50, %v1883, 0
  %v1894 = vsel %vm50, %v1884, 0
  %v1897 = vsel %vm50, %v1885, 0
  %v1900 = vsel %vm50, %v1886, 0
  %1902 = vmatpush.bf16.msra.mxu0 0
  %1903 = vmatpush.bf16.msra.mxu0 0
  %1904 = vmatpush.bf16.msra.mxu0 0
  %1905 = vmatpush.bf16.msra.mxu0 0
  %1906 = vmatpush.bf16.msra.mxu0 0
  %1907 = vmatpush.bf16.msra.mxu0 0
  %1908 = vmatpush.bf16.msra.mxu0 0
  %1909 = vmatpush.bf16.msra.mxu0 %v1891
  %1910 = vmatmul.bf16.gmra.mxu0 %v1888
  %v1911 = vpop.f32.mrf.mxu0
  %v1912 = vadd.f32 0.0, %v1911
  %v1913 = vpop.f32.mrf.mxu0
  %1914 = vdwg.mxu0
  %1915 = vmatpush.bf16.msra.mxu0 0
  %1916 = vmatpush.bf16.msra.mxu0 0
  %1917 = vmatpush.bf16.msra.mxu0 0
  %1918 = vmatpush.bf16.msra.mxu0 0
  %1919 = vmatpush.bf16.msra.mxu0 0
  %1920 = vmatpush.bf16.msra.mxu0 0
  %1921 = vmatpush.bf16.msra.mxu0 0
  %1922 = vmatpush.bf16.msra.mxu0 %v1894
  %1923 = vmatmul.bf16.gmra.mxu0 %v1888
  %v1924 = vpop.f32.mrf.mxu0
  %v1925 = vadd.f32 0.0, %v1924
  %v1926 = vpop.f32.mrf.mxu0
  %1927 = vdwg.mxu0
  %1928 = vmatpush.bf16.msra.mxu0 0
  %1929 = vmatpush.bf16.msra.mxu0 0
  %1930 = vmatpush.bf16.msra.mxu0 0
  %1931 = vmatpush.bf16.msra.mxu0 0
  %1932 = vmatpush.bf16.msra.mxu0 0
  %1933 = vmatpush.bf16.msra.mxu0 0
  %1934 = vmatpush.bf16.msra.mxu0 0
  %1935 = vmatpush.bf16.msra.mxu0 %v1897
  %1936 = vmatmul.bf16.gmra.mxu0 %v1888
  %v1937 = vpop.f32.mrf.mxu0
  %v1938 = vadd.f32 0.0, %v1937
  %v1939 = vpop.f32.mrf.mxu0
  %1940 = vdwg.mxu0
  %1941 = vmatpush.bf16.msra.mxu0 0
  %1942 = vmatpush.bf16.msra.mxu0 0
  %1943 = vmatpush.bf16.msra.mxu0 0
  %1944 = vmatpush.bf16.msra.mxu0 0
  %1945 = vmatpush.bf16.msra.mxu0 0
  %1946 = vmatpush.bf16.msra.mxu0 0
  %1947 = vmatpush.bf16.msra.mxu0 0
  %1948 = vmatpush.bf16.msra.mxu0 %v1900
  %1949 = vmatmul.bf16.gmra.mxu0 %v1888
  %v1950 = vpop.f32.mrf.mxu0
  %v1951 = vadd.f32 0.0, %v1950
  %v1952 = vpop.f32.mrf.mxu0
  %1953 = vdwg.mxu0
  %v1954 = vadd.f32 %v1849, %v1912
  %v1955 = vadd.f32 %v1850, %v1925
  %v1956 = vadd.f32 %v1851, %v1938
  %v1957 = vadd.f32 %v1852, %v1951
  %1958 = vrot.lane.b32.xlu0 %v27, 120
  %v1959 = vpop.permute.xlu0 %1958
  %1960 = vrot.lane.b32.xlu0 %v28, 120
  %v1961 = vpop.permute.xlu0 %1960
  %1962 = vrot.lane.b32.xlu0 %v29, 120
  %v1963 = vpop.permute.xlu0 %1962
  %1964 = vrot.lane.b32.xlu0 %v30, 120
  %v1965 = vpop.permute.xlu0 %1964
  %vm1966 = vcmp.lt.s32.totalorder %v314, 120
  %v1967 = vsel %vm1966, %v1963, %v1965
  %v1968 = vsel %vm1966, %v1961, %v1963
  %v1969 = vsel %vm1966, %v1959, %v1961
  %v1970 = vsel %vm1966, %v1965, %v1959
  %s1971 = scalar_lea.vmem %s5, 64
  %v1972 = vld [vmem:[%s1971] ss:$8 sm:$0xf]
  %v1974 = vperm.slane %v1972, 0
  %v1975 = vperm.slane %v1972, 1
  %v1976 = vperm.slane %v1972, 2
  %v1977 = vperm.slane %v1972, 3
  %v1982 = vmul.f32 %v1969, %v1974
  %v1983 = vmul.f32 %v1968, %v1975
  %v1984 = vmul.f32 %v1967, %v1976
  %v1985 = vmul.f32 %v1970, %v1977
  %s1986 = scalar_lea.vmem %s4, 64
  %v1987 = vld [vmem:[%s1986] sm:$0xf]
  %v1988 = vpack.c.bf16 %v1982, %v1982
  %v1989 = vpack.c.bf16 %v1983, %v1983
  %v1990 = vpack.c.bf16 %v1984, %v1984
  %v1991 = vpack.c.bf16 %v1985, %v1985
  %v1993 = vsel %vm339, %v1987, 0
  %v1996 = vsel %vm50, %v1988, 0
  %v1999 = vsel %vm50, %v1989, 0
  %v2002 = vsel %vm50, %v1990, 0
  %v2005 = vsel %vm50, %v1991, 0
  %2007 = vmatpush.bf16.msra.mxu0 0
  %2008 = vmatpush.bf16.msra.mxu0 0
  %2009 = vmatpush.bf16.msra.mxu0 0
  %2010 = vmatpush.bf16.msra.mxu0 0
  %2011 = vmatpush.bf16.msra.mxu0 0
  %2012 = vmatpush.bf16.msra.mxu0 0
  %2013 = vmatpush.bf16.msra.mxu0 0
  %2014 = vmatpush.bf16.msra.mxu0 %v1996
  %2015 = vmatmul.bf16.gmra.mxu0 %v1993
  %v2016 = vpop.f32.mrf.mxu0
  %v2017 = vadd.f32 0.0, %v2016
  %v2018 = vpop.f32.mrf.mxu0
  %2019 = vdwg.mxu0
  %2020 = vmatpush.bf16.msra.mxu0 0
  %2021 = vmatpush.bf16.msra.mxu0 0
  %2022 = vmatpush.bf16.msra.mxu0 0
  %2023 = vmatpush.bf16.msra.mxu0 0
  %2024 = vmatpush.bf16.msra.mxu0 0
  %2025 = vmatpush.bf16.msra.mxu0 0
  %2026 = vmatpush.bf16.msra.mxu0 0
  %2027 = vmatpush.bf16.msra.mxu0 %v1999
  %2028 = vmatmul.bf16.gmra.mxu0 %v1993
  %v2029 = vpop.f32.mrf.mxu0
  %v2030 = vadd.f32 0.0, %v2029
  %v2031 = vpop.f32.mrf.mxu0
  %2032 = vdwg.mxu0
  %2033 = vmatpush.bf16.msra.mxu0 0
  %2034 = vmatpush.bf16.msra.mxu0 0
  %2035 = vmatpush.bf16.msra.mxu0 0
  %2036 = vmatpush.bf16.msra.mxu0 0
  %2037 = vmatpush.bf16.msra.mxu0 0
  %2038 = vmatpush.bf16.msra.mxu0 0
  %2039 = vmatpush.bf16.msra.mxu0 0
  %2040 = vmatpush.bf16.msra.mxu0 %v2002
  %2041 = vmatmul.bf16.gmra.mxu0 %v1993
  %v2042 = vpop.f32.mrf.mxu0
  %v2043 = vadd.f32 0.0, %v2042
  %v2044 = vpop.f32.mrf.mxu0
  %2045 = vdwg.mxu0
  %2046 = vmatpush.bf16.msra.mxu0 0
  %2047 = vmatpush.bf16.msra.mxu0 0
  %2048 = vmatpush.bf16.msra.mxu0 0
  %2049 = vmatpush.bf16.msra.mxu0 0
  %2050 = vmatpush.bf16.msra.mxu0 0
  %2051 = vmatpush.bf16.msra.mxu0 0
  %2052 = vmatpush.bf16.msra.mxu0 0
  %2053 = vmatpush.bf16.msra.mxu0 %v2005
  %2054 = vmatmul.bf16.gmra.mxu0 %v1993
  %v2055 = vpop.f32.mrf.mxu0
  %v2056 = vadd.f32 0.0, %v2055
  %v2057 = vpop.f32.mrf.mxu0
  %2058 = vdwg.mxu0
  %v2059 = vadd.f32 %v1954, %v2017
  %v2060 = vadd.f32 %v1955, %v2030
  %v2061 = vadd.f32 %v1956, %v2043
  %v2062 = vadd.f32 %v1957, %v2056
  %2063 = vrot.lane.b32.xlu0 %v27, 119
  %v2064 = vpop.permute.xlu0 %2063
  %2065 = vrot.lane.b32.xlu0 %v28, 119
  %v2066 = vpop.permute.xlu0 %2065
  %2067 = vrot.lane.b32.xlu0 %v29, 119
  %v2068 = vpop.permute.xlu0 %2067
  %2069 = vrot.lane.b32.xlu0 %v30, 119
  %v2070 = vpop.permute.xlu0 %2069
  %vm2071 = vcmp.lt.s32.totalorder %v314, 119
  %v2072 = vsel %vm2071, %v2068, %v2070
  %v2073 = vsel %vm2071, %v2066, %v2068
  %v2074 = vsel %vm2071, %v2064, %v2066
  %v2075 = vsel %vm2071, %v2070, %v2064
  %s2076 = scalar_lea.vmem %s5, 65
  %v2077 = vld [vmem:[%s2076] ss:$8 sm:$0xf]
  %v2079 = vperm.slane %v2077, 0
  %v2080 = vperm.slane %v2077, 1
  %v2081 = vperm.slane %v2077, 2
  %v2082 = vperm.slane %v2077, 3
  %v2087 = vmul.f32 %v2074, %v2079
  %v2088 = vmul.f32 %v2073, %v2080
  %v2089 = vmul.f32 %v2072, %v2081
  %v2090 = vmul.f32 %v2075, %v2082
  %s2091 = scalar_lea.vmem %s4, 68
  %v2092 = vld [vmem:[%s2091] sm:$0xf]
  %v2093 = vpack.c.bf16 %v2087, %v2087
  %v2094 = vpack.c.bf16 %v2088, %v2088
  %v2095 = vpack.c.bf16 %v2089, %v2089
  %v2096 = vpack.c.bf16 %v2090, %v2090
  %v2098 = vsel %vm339, %v2092, 0
  %v2101 = vsel %vm50, %v2093, 0
  %v2104 = vsel %vm50, %v2094, 0
  %v2107 = vsel %vm50, %v2095, 0
  %v2110 = vsel %vm50, %v2096, 0
  %2112 = vmatpush.bf16.msra.mxu0 0
  %2113 = vmatpush.bf16.msra.mxu0 0
  %2114 = vmatpush.bf16.msra.mxu0 0
  %2115 = vmatpush.bf16.msra.mxu0 0
  %2116 = vmatpush.bf16.msra.mxu0 0
  %2117 = vmatpush.bf16.msra.mxu0 0
  %2118 = vmatpush.bf16.msra.mxu0 0
  %2119 = vmatpush.bf16.msra.mxu0 %v2101
  %2120 = vmatmul.bf16.gmra.mxu0 %v2098
  %v2121 = vpop.f32.mrf.mxu0
  %v2122 = vadd.f32 0.0, %v2121
  %v2123 = vpop.f32.mrf.mxu0
  %2124 = vdwg.mxu0
  %2125 = vmatpush.bf16.msra.mxu0 0
  %2126 = vmatpush.bf16.msra.mxu0 0
  %2127 = vmatpush.bf16.msra.mxu0 0
  %2128 = vmatpush.bf16.msra.mxu0 0
  %2129 = vmatpush.bf16.msra.mxu0 0
  %2130 = vmatpush.bf16.msra.mxu0 0
  %2131 = vmatpush.bf16.msra.mxu0 0
  %2132 = vmatpush.bf16.msra.mxu0 %v2104
  %2133 = vmatmul.bf16.gmra.mxu0 %v2098
  %v2134 = vpop.f32.mrf.mxu0
  %v2135 = vadd.f32 0.0, %v2134
  %v2136 = vpop.f32.mrf.mxu0
  %2137 = vdwg.mxu0
  %2138 = vmatpush.bf16.msra.mxu0 0
  %2139 = vmatpush.bf16.msra.mxu0 0
  %2140 = vmatpush.bf16.msra.mxu0 0
  %2141 = vmatpush.bf16.msra.mxu0 0
  %2142 = vmatpush.bf16.msra.mxu0 0
  %2143 = vmatpush.bf16.msra.mxu0 0
  %2144 = vmatpush.bf16.msra.mxu0 0
  %2145 = vmatpush.bf16.msra.mxu0 %v2107
  %2146 = vmatmul.bf16.gmra.mxu0 %v2098
  %v2147 = vpop.f32.mrf.mxu0
  %v2148 = vadd.f32 0.0, %v2147
  %v2149 = vpop.f32.mrf.mxu0
  %2150 = vdwg.mxu0
  %2151 = vmatpush.bf16.msra.mxu0 0
  %2152 = vmatpush.bf16.msra.mxu0 0
  %2153 = vmatpush.bf16.msra.mxu0 0
  %2154 = vmatpush.bf16.msra.mxu0 0
  %2155 = vmatpush.bf16.msra.mxu0 0
  %2156 = vmatpush.bf16.msra.mxu0 0
  %2157 = vmatpush.bf16.msra.mxu0 0
  %2158 = vmatpush.bf16.msra.mxu0 %v2110
  %2159 = vmatmul.bf16.gmra.mxu0 %v2098
  %v2160 = vpop.f32.mrf.mxu0
  %v2161 = vadd.f32 0.0, %v2160
  %v2162 = vpop.f32.mrf.mxu0
  %2163 = vdwg.mxu0
  %v2164 = vadd.f32 %v2059, %v2122
  %v2165 = vadd.f32 %v2060, %v2135
  %v2166 = vadd.f32 %v2061, %v2148
  %v2167 = vadd.f32 %v2062, %v2161
  %s2168 = scalar_lea.vmem %s5, 66
  %v2169 = vld [vmem:[%s2168] ss:$8 sm:$0xf]
  %v2171 = vperm.slane %v2169, 0
  %v2172 = vperm.slane %v2169, 1
  %v2173 = vperm.slane %v2169, 2
  %v2174 = vperm.slane %v2169, 3
  %v2179 = vmul.f32 %v318, %v2171
  %v2180 = vmul.f32 %v317, %v2172
  %v2181 = vmul.f32 %v316, %v2173
  %v2182 = vmul.f32 %v319, %v2174
  %s2183 = scalar_lea.vmem %s4, 72
  %v2184 = vld [vmem:[%s2183] sm:$0xf]
  %v2185 = vpack.c.bf16 %v2179, %v2179
  %v2186 = vpack.c.bf16 %v2180, %v2180
  %v2187 = vpack.c.bf16 %v2181, %v2181
  %v2188 = vpack.c.bf16 %v2182, %v2182
  %v2190 = vsel %vm339, %v2184, 0
  %v2193 = vsel %vm50, %v2185, 0
  %v2196 = vsel %vm50, %v2186, 0
  %v2199 = vsel %vm50, %v2187, 0
  %v2202 = vsel %vm50, %v2188, 0
  %2204 = vmatpush.bf16.msra.mxu0 0
  %2205 = vmatpush.bf16.msra.mxu0 0
  %2206 = vmatpush.bf16.msra.mxu0 0
  %2207 = vmatpush.bf16.msra.mxu0 0
  %2208 = vmatpush.bf16.msra.mxu0 0
  %2209 = vmatpush.bf16.msra.mxu0 0
  %2210 = vmatpush.bf16.msra.mxu0 0
  %2211 = vmatpush.bf16.msra.mxu0 %v2193
  %2212 = vmatmul.bf16.gmra.mxu0 %v2190
  %v2213 = vpop.f32.mrf.mxu0
  %v2214 = vadd.f32 0.0, %v2213
  %v2215 = vpop.f32.mrf.mxu0
  %2216 = vdwg.mxu0
  %2217 = vmatpush.bf16.msra.mxu0 0
  %2218 = vmatpush.bf16.msra.mxu0 0
  %2219 = vmatpush.bf16.msra.mxu0 0
  %2220 = vmatpush.bf16.msra.mxu0 0
  %2221 = vmatpush.bf16.msra.mxu0 0
  %2222 = vmatpush.bf16.msra.mxu0 0
  %2223 = vmatpush.bf16.msra.mxu0 0
  %2224 = vmatpush.bf16.msra.mxu0 %v2196
  %2225 = vmatmul.bf16.gmra.mxu0 %v2190
  %v2226 = vpop.f32.mrf.mxu0
  %v2227 = vadd.f32 0.0, %v2226
  %v2228 = vpop.f32.mrf.mxu0
  %2229 = vdwg.mxu0
  %2230 = vmatpush.bf16.msra.mxu0 0
  %2231 = vmatpush.bf16.msra.mxu0 0
  %2232 = vmatpush.bf16.msra.mxu0 0
  %2233 = vmatpush.bf16.msra.mxu0 0
  %2234 = vmatpush.bf16.msra.mxu0 0
  %2235 = vmatpush.bf16.msra.mxu0 0
  %2236 = vmatpush.bf16.msra.mxu0 0
  %2237 = vmatpush.bf16.msra.mxu0 %v2199
  %2238 = vmatmul.bf16.gmra.mxu0 %v2190
  %v2239 = vpop.f32.mrf.mxu0
  %v2240 = vadd.f32 0.0, %v2239
  %v2241 = vpop.f32.mrf.mxu0
  %2242 = vdwg.mxu0
  %2243 = vmatpush.bf16.msra.mxu0 0
  %2244 = vmatpush.bf16.msra.mxu0 0
  %2245 = vmatpush.bf16.msra.mxu0 0
  %2246 = vmatpush.bf16.msra.mxu0 0
  %2247 = vmatpush.bf16.msra.mxu0 0
  %2248 = vmatpush.bf16.msra.mxu0 0
  %2249 = vmatpush.bf16.msra.mxu0 0
  %2250 = vmatpush.bf16.msra.mxu0 %v2202
  %2251 = vmatmul.bf16.gmra.mxu0 %v2190
  %v2252 = vpop.f32.mrf.mxu0
  %v2253 = vadd.f32 0.0, %v2252
  %v2254 = vpop.f32.mrf.mxu0
  %2255 = vdwg.mxu0
  %v2256 = vadd.f32 %v2164, %v2214
  %v2257 = vadd.f32 %v2165, %v2227
  %v2258 = vadd.f32 %v2166, %v2240
  %v2259 = vadd.f32 %v2167, %v2253
  %s2260 = scalar_lea.vmem %s5, 67
  %v2261 = vld [vmem:[%s2260] ss:$8 sm:$0xf]
  %v2263 = vperm.slane %v2261, 0
  %v2264 = vperm.slane %v2261, 1
  %v2265 = vperm.slane %v2261, 2
  %v2266 = vperm.slane %v2261, 3
  %v2271 = vmul.f32 %v422, %v2263
  %v2272 = vmul.f32 %v421, %v2264
  %v2273 = vmul.f32 %v420, %v2265
  %v2274 = vmul.f32 %v423, %v2266
  %s2275 = scalar_lea.vmem %s4, 76
  %v2276 = vld [vmem:[%s2275] sm:$0xf]
  %v2277 = vpack.c.bf16 %v2271, %v2271
  %v2278 = vpack.c.bf16 %v2272, %v2272
  %v2279 = vpack.c.bf16 %v2273, %v2273
  %v2280 = vpack.c.bf16 %v2274, %v2274
  %v2282 = vsel %vm339, %v2276, 0
  %v2285 = vsel %vm50, %v2277, 0
  %v2288 = vsel %vm50, %v2278, 0
  %v2291 = vsel %vm50, %v2279, 0
  %v2294 = vsel %vm50, %v2280, 0
  %2296 = vmatpush.bf16.msra.mxu0 0
  %2297 = vmatpush.bf16.msra.mxu0 0
  %2298 = vmatpush.bf16.msra.mxu0 0
  %2299 = vmatpush.bf16.msra.mxu0 0
  %2300 = vmatpush.bf16.msra.mxu0 0
  %2301 = vmatpush.bf16.msra.mxu0 0
  %2302 = vmatpush.bf16.msra.mxu0 0
  %2303 = vmatpush.bf16.msra.mxu0 %v2285
  %2304 = vmatmul.bf16.gmra.mxu0 %v2282
  %v2305 = vpop.f32.mrf.mxu0
  %v2306 = vadd.f32 0.0, %v2305
  %v2307 = vpop.f32.mrf.mxu0
  %2308 = vdwg.mxu0
  %2309 = vmatpush.bf16.msra.mxu0 0
  %2310 = vmatpush.bf16.msra.mxu0 0
  %2311 = vmatpush.bf16.msra.mxu0 0
  %2312 = vmatpush.bf16.msra.mxu0 0
  %2313 = vmatpush.bf16.msra.mxu0 0
  %2314 = vmatpush.bf16.msra.mxu0 0
  %2315 = vmatpush.bf16.msra.mxu0 0
  %2316 = vmatpush.bf16.msra.mxu0 %v2288
  %2317 = vmatmul.bf16.gmra.mxu0 %v2282
  %v2318 = vpop.f32.mrf.mxu0
  %v2319 = vadd.f32 0.0, %v2318
  %v2320 = vpop.f32.mrf.mxu0
  %2321 = vdwg.mxu0
  %2322 = vmatpush.bf16.msra.mxu0 0
  %2323 = vmatpush.bf16.msra.mxu0 0
  %2324 = vmatpush.bf16.msra.mxu0 0
  %2325 = vmatpush.bf16.msra.mxu0 0
  %2326 = vmatpush.bf16.msra.mxu0 0
  %2327 = vmatpush.bf16.msra.mxu0 0
  %2328 = vmatpush.bf16.msra.mxu0 0
  %2329 = vmatpush.bf16.msra.mxu0 %v2291
  %2330 = vmatmul.bf16.gmra.mxu0 %v2282
  %v2331 = vpop.f32.mrf.mxu0
  %v2332 = vadd.f32 0.0, %v2331
  %v2333 = vpop.f32.mrf.mxu0
  %2334 = vdwg.mxu0
  %2335 = vmatpush.bf16.msra.mxu0 0
  %2336 = vmatpush.bf16.msra.mxu0 0
  %2337 = vmatpush.bf16.msra.mxu0 0
  %2338 = vmatpush.bf16.msra.mxu0 0
  %2339 = vmatpush.bf16.msra.mxu0 0
  %2340 = vmatpush.bf16.msra.mxu0 0
  %2341 = vmatpush.bf16.msra.mxu0 0
  %2342 = vmatpush.bf16.msra.mxu0 %v2294
  %2343 = vmatmul.bf16.gmra.mxu0 %v2282
  %v2344 = vpop.f32.mrf.mxu0
  %v2345 = vadd.f32 0.0, %v2344
  %v2346 = vpop.f32.mrf.mxu0
  %2347 = vdwg.mxu0
  %v2348 = vadd.f32 %v2256, %v2306
  %v2349 = vadd.f32 %v2257, %v2319
  %v2350 = vadd.f32 %v2258, %v2332
  %v2351 = vadd.f32 %v2259, %v2345
  %s2352 = scalar_lea.vmem %s5, 68
  %v2353 = vld [vmem:[%s2352] ss:$8 sm:$0xf]
  %v2355 = vperm.slane %v2353, 0
  %v2356 = vperm.slane %v2353, 1
  %v2357 = vperm.slane %v2353, 2
  %v2358 = vperm.slane %v2353, 3
  %v2363 = vmul.f32 %v527, %v2355
  %v2364 = vmul.f32 %v526, %v2356
  %v2365 = vmul.f32 %v525, %v2357
  %v2366 = vmul.f32 %v528, %v2358
  %s2367 = scalar_lea.vmem %s4, 80
  %v2368 = vld [vmem:[%s2367] sm:$0xf]
  %v2369 = vpack.c.bf16 %v2363, %v2363
  %v2370 = vpack.c.bf16 %v2364, %v2364
  %v2371 = vpack.c.bf16 %v2365, %v2365
  %v2372 = vpack.c.bf16 %v2366, %v2366
  %v2374 = vsel %vm339, %v2368, 0
  %v2377 = vsel %vm50, %v2369, 0
  %v2380 = vsel %vm50, %v2370, 0
  %v2383 = vsel %vm50, %v2371, 0
  %v2386 = vsel %vm50, %v2372, 0
  %2388 = vmatpush.bf16.msra.mxu0 0
  %2389 = vmatpush.bf16.msra.mxu0 0
  %2390 = vmatpush.bf16.msra.mxu0 0
  %2391 = vmatpush.bf16.msra.mxu0 0
  %2392 = vmatpush.bf16.msra.mxu0 0
  %2393 = vmatpush.bf16.msra.mxu0 0
  %2394 = vmatpush.bf16.msra.mxu0 0
  %2395 = vmatpush.bf16.msra.mxu0 %v2377
  %2396 = vmatmul.bf16.gmra.mxu0 %v2374
  %v2397 = vpop.f32.mrf.mxu0
  %v2398 = vadd.f32 0.0, %v2397
  %v2399 = vpop.f32.mrf.mxu0
  %2400 = vdwg.mxu0
  %2401 = vmatpush.bf16.msra.mxu0 0
  %2402 = vmatpush.bf16.msra.mxu0 0
  %2403 = vmatpush.bf16.msra.mxu0 0
  %2404 = vmatpush.bf16.msra.mxu0 0
  %2405 = vmatpush.bf16.msra.mxu0 0
  %2406 = vmatpush.bf16.msra.mxu0 0
  %2407 = vmatpush.bf16.msra.mxu0 0
  %2408 = vmatpush.bf16.msra.mxu0 %v2380
  %2409 = vmatmul.bf16.gmra.mxu0 %v2374
  %v2410 = vpop.f32.mrf.mxu0
  %v2411 = vadd.f32 0.0, %v2410
  %v2412 = vpop.f32.mrf.mxu0
  %2413 = vdwg.mxu0
  %2414 = vmatpush.bf16.msra.mxu0 0
  %2415 = vmatpush.bf16.msra.mxu0 0
  %2416 = vmatpush.bf16.msra.mxu0 0
  %2417 = vmatpush.bf16.msra.mxu0 0
  %2418 = vmatpush.bf16.msra.mxu0 0
  %2419 = vmatpush.bf16.msra.mxu0 0
  %2420 = vmatpush.bf16.msra.mxu0 0
  %2421 = vmatpush.bf16.msra.mxu0 %v2383
  %2422 = vmatmul.bf16.gmra.mxu0 %v2374
  %v2423 = vpop.f32.mrf.mxu0
  %v2424 = vadd.f32 0.0, %v2423
  %v2425 = vpop.f32.mrf.mxu0
  %2426 = vdwg.mxu0
  %2427 = vmatpush.bf16.msra.mxu0 0
  %2428 = vmatpush.bf16.msra.mxu0 0
  %2429 = vmatpush.bf16.msra.mxu0 0
  %2430 = vmatpush.bf16.msra.mxu0 0
  %2431 = vmatpush.bf16.msra.mxu0 0
  %2432 = vmatpush.bf16.msra.mxu0 0
  %2433 = vmatpush.bf16.msra.mxu0 0
  %2434 = vmatpush.bf16.msra.mxu0 %v2386
  %2435 = vmatmul.bf16.gmra.mxu0 %v2374
  %v2436 = vpop.f32.mrf.mxu0
  %v2437 = vadd.f32 0.0, %v2436
  %v2438 = vpop.f32.mrf.mxu0
  %2439 = vdwg.mxu0
  %v2440 = vadd.f32 %v2348, %v2398
  %v2441 = vadd.f32 %v2349, %v2411
  %v2442 = vadd.f32 %v2350, %v2424
  %v2443 = vadd.f32 %v2351, %v2437
  %s2444 = scalar_lea.vmem %s5, 69
  %v2445 = vld [vmem:[%s2444] ss:$8 sm:$0xf]
  %v2447 = vperm.slane %v2445, 0
  %v2448 = vperm.slane %v2445, 1
  %v2449 = vperm.slane %v2445, 2
  %v2450 = vperm.slane %v2445, 3
  %v2455 = vmul.f32 %v632, %v2447
  %v2456 = vmul.f32 %v631, %v2448
  %v2457 = vmul.f32 %v630, %v2449
  %v2458 = vmul.f32 %v633, %v2450
  %s2459 = scalar_lea.vmem %s4, 84
  %v2460 = vld [vmem:[%s2459] sm:$0xf]
  %v2461 = vpack.c.bf16 %v2455, %v2455
  %v2462 = vpack.c.bf16 %v2456, %v2456
  %v2463 = vpack.c.bf16 %v2457, %v2457
  %v2464 = vpack.c.bf16 %v2458, %v2458
  %v2466 = vsel %vm339, %v2460, 0
  %v2469 = vsel %vm50, %v2461, 0
  %v2472 = vsel %vm50, %v2462, 0
  %v2475 = vsel %vm50, %v2463, 0
  %v2478 = vsel %vm50, %v2464, 0
  %2480 = vmatpush.bf16.msra.mxu0 0
  %2481 = vmatpush.bf16.msra.mxu0 0
  %2482 = vmatpush.bf16.msra.mxu0 0
  %2483 = vmatpush.bf16.msra.mxu0 0
  %2484 = vmatpush.bf16.msra.mxu0 0
  %2485 = vmatpush.bf16.msra.mxu0 0
  %2486 = vmatpush.bf16.msra.mxu0 0
  %2487 = vmatpush.bf16.msra.mxu0 %v2469
  %2488 = vmatmul.bf16.gmra.mxu0 %v2466
  %v2489 = vpop.f32.mrf.mxu0
  %v2490 = vadd.f32 0.0, %v2489
  %v2491 = vpop.f32.mrf.mxu0
  %2492 = vdwg.mxu0
  %2493 = vmatpush.bf16.msra.mxu0 0
  %2494 = vmatpush.bf16.msra.mxu0 0
  %2495 = vmatpush.bf16.msra.mxu0 0
  %2496 = vmatpush.bf16.msra.mxu0 0
  %2497 = vmatpush.bf16.msra.mxu0 0
  %2498 = vmatpush.bf16.msra.mxu0 0
  %2499 = vmatpush.bf16.msra.mxu0 0
  %2500 = vmatpush.bf16.msra.mxu0 %v2472
  %2501 = vmatmul.bf16.gmra.mxu0 %v2466
  %v2502 = vpop.f32.mrf.mxu0
  %v2503 = vadd.f32 0.0, %v2502
  %v2504 = vpop.f32.mrf.mxu0
  %2505 = vdwg.mxu0
  %2506 = vmatpush.bf16.msra.mxu0 0
  %2507 = vmatpush.bf16.msra.mxu0 0
  %2508 = vmatpush.bf16.msra.mxu0 0
  %2509 = vmatpush.bf16.msra.mxu0 0
  %2510 = vmatpush.bf16.msra.mxu0 0
  %2511 = vmatpush.bf16.msra.mxu0 0
  %2512 = vmatpush.bf16.msra.mxu0 0
  %2513 = vmatpush.bf16.msra.mxu0 %v2475
  %2514 = vmatmul.bf16.gmra.mxu0 %v2466
  %v2515 = vpop.f32.mrf.mxu0
  %v2516 = vadd.f32 0.0, %v2515
  %v2517 = vpop.f32.mrf.mxu0
  %2518 = vdwg.mxu0
  %2519 = vmatpush.bf16.msra.mxu0 0
  %2520 = vmatpush.bf16.msra.mxu0 0
  %2521 = vmatpush.bf16.msra.mxu0 0
  %2522 = vmatpush.bf16.msra.mxu0 0
  %2523 = vmatpush.bf16.msra.mxu0 0
  %2524 = vmatpush.bf16.msra.mxu0 0
  %2525 = vmatpush.bf16.msra.mxu0 0
  %2526 = vmatpush.bf16.msra.mxu0 %v2478
  %2527 = vmatmul.bf16.gmra.mxu0 %v2466
  %v2528 = vpop.f32.mrf.mxu0
  %v2529 = vadd.f32 0.0, %v2528
  %v2530 = vpop.f32.mrf.mxu0
  %2531 = vdwg.mxu0
  %v2532 = vadd.f32 %v2440, %v2490
  %v2533 = vadd.f32 %v2441, %v2503
  %v2534 = vadd.f32 %v2442, %v2516
  %v2535 = vadd.f32 %v2443, %v2529
  %s2536 = scalar_lea.vmem %s5, 70
  %v2537 = vld [vmem:[%s2536] ss:$8 sm:$0xf]
  %v2539 = vperm.slane %v2537, 0
  %v2540 = vperm.slane %v2537, 1
  %v2541 = vperm.slane %v2537, 2
  %v2542 = vperm.slane %v2537, 3
  %v2547 = vmul.f32 %v737, %v2539
  %v2548 = vmul.f32 %v736, %v2540
  %v2549 = vmul.f32 %v735, %v2541
  %v2550 = vmul.f32 %v738, %v2542
  %s2551 = scalar_lea.vmem %s4, 88
  %v2552 = vld [vmem:[%s2551] sm:$0xf]
  %v2553 = vpack.c.bf16 %v2547, %v2547
  %v2554 = vpack.c.bf16 %v2548, %v2548
  %v2555 = vpack.c.bf16 %v2549, %v2549
  %v2556 = vpack.c.bf16 %v2550, %v2550
  %v2558 = vsel %vm339, %v2552, 0
  %v2561 = vsel %vm50, %v2553, 0
  %v2564 = vsel %vm50, %v2554, 0
  %v2567 = vsel %vm50, %v2555, 0
  %v2570 = vsel %vm50, %v2556, 0
  %2572 = vmatpush.bf16.msra.mxu0 0
  %2573 = vmatpush.bf16.msra.mxu0 0
  %2574 = vmatpush.bf16.msra.mxu0 0
  %2575 = vmatpush.bf16.msra.mxu0 0
  %2576 = vmatpush.bf16.msra.mxu0 0
  %2577 = vmatpush.bf16.msra.mxu0 0
  %2578 = vmatpush.bf16.msra.mxu0 0
  %2579 = vmatpush.bf16.msra.mxu0 %v2561
  %2580 = vmatmul.bf16.gmra.mxu0 %v2558
  %v2581 = vpop.f32.mrf.mxu0
  %v2582 = vadd.f32 0.0, %v2581
  %v2583 = vpop.f32.mrf.mxu0
  %2584 = vdwg.mxu0
  %2585 = vmatpush.bf16.msra.mxu0 0
  %2586 = vmatpush.bf16.msra.mxu0 0
  %2587 = vmatpush.bf16.msra.mxu0 0
  %2588 = vmatpush.bf16.msra.mxu0 0
  %2589 = vmatpush.bf16.msra.mxu0 0
  %2590 = vmatpush.bf16.msra.mxu0 0
  %2591 = vmatpush.bf16.msra.mxu0 0
  %2592 = vmatpush.bf16.msra.mxu0 %v2564
  %2593 = vmatmul.bf16.gmra.mxu0 %v2558
  %v2594 = vpop.f32.mrf.mxu0
  %v2595 = vadd.f32 0.0, %v2594
  %v2596 = vpop.f32.mrf.mxu0
  %2597 = vdwg.mxu0
  %2598 = vmatpush.bf16.msra.mxu0 0
  %2599 = vmatpush.bf16.msra.mxu0 0
  %2600 = vmatpush.bf16.msra.mxu0 0
  %2601 = vmatpush.bf16.msra.mxu0 0
  %2602 = vmatpush.bf16.msra.mxu0 0
  %2603 = vmatpush.bf16.msra.mxu0 0
  %2604 = vmatpush.bf16.msra.mxu0 0
  %2605 = vmatpush.bf16.msra.mxu0 %v2567
  %2606 = vmatmul.bf16.gmra.mxu0 %v2558
  %v2607 = vpop.f32.mrf.mxu0
  %v2608 = vadd.f32 0.0, %v2607
  %v2609 = vpop.f32.mrf.mxu0
  %2610 = vdwg.mxu0
  %2611 = vmatpush.bf16.msra.mxu0 0
  %2612 = vmatpush.bf16.msra.mxu0 0
  %2613 = vmatpush.bf16.msra.mxu0 0
  %2614 = vmatpush.bf16.msra.mxu0 0
  %2615 = vmatpush.bf16.msra.mxu0 0
  %2616 = vmatpush.bf16.msra.mxu0 0
  %2617 = vmatpush.bf16.msra.mxu0 0
  %2618 = vmatpush.bf16.msra.mxu0 %v2570
  %2619 = vmatmul.bf16.gmra.mxu0 %v2558
  %v2620 = vpop.f32.mrf.mxu0
  %v2621 = vadd.f32 0.0, %v2620
  %v2622 = vpop.f32.mrf.mxu0
  %2623 = vdwg.mxu0
  %v2624 = vadd.f32 %v2532, %v2582
  %v2625 = vadd.f32 %v2533, %v2595
  %v2626 = vadd.f32 %v2534, %v2608
  %v2627 = vadd.f32 %v2535, %v2621
  %s2628 = scalar_lea.vmem %s5, 71
  %v2629 = vld [vmem:[%s2628] ss:$8 sm:$0xf]
  %v2631 = vperm.slane %v2629, 0
  %v2632 = vperm.slane %v2629, 1
  %v2633 = vperm.slane %v2629, 2
  %v2634 = vperm.slane %v2629, 3
  %v2639 = vmul.f32 %v842, %v2631
  %v2640 = vmul.f32 %v841, %v2632
  %v2641 = vmul.f32 %v840, %v2633
  %v2642 = vmul.f32 %v843, %v2634
  %s2643 = scalar_lea.vmem %s4, 92
  %v2644 = vld [vmem:[%s2643] sm:$0xf]
  %v2645 = vpack.c.bf16 %v2639, %v2639
  %v2646 = vpack.c.bf16 %v2640, %v2640
  %v2647 = vpack.c.bf16 %v2641, %v2641
  %v2648 = vpack.c.bf16 %v2642, %v2642
  %v2650 = vsel %vm339, %v2644, 0
  %v2653 = vsel %vm50, %v2645, 0
  %v2656 = vsel %vm50, %v2646, 0
  %v2659 = vsel %vm50, %v2647, 0
  %v2662 = vsel %vm50, %v2648, 0
  %2664 = vmatpush.bf16.msra.mxu0 0
  %2665 = vmatpush.bf16.msra.mxu0 0
  %2666 = vmatpush.bf16.msra.mxu0 0
  %2667 = vmatpush.bf16.msra.mxu0 0
  %2668 = vmatpush.bf16.msra.mxu0 0
  %2669 = vmatpush.bf16.msra.mxu0 0
  %2670 = vmatpush.bf16.msra.mxu0 0
  %2671 = vmatpush.bf16.msra.mxu0 %v2653
  %2672 = vmatmul.bf16.gmra.mxu0 %v2650
  %v2673 = vpop.f32.mrf.mxu0
  %v2674 = vadd.f32 0.0, %v2673
  %v2675 = vpop.f32.mrf.mxu0
  %2676 = vdwg.mxu0
  %2677 = vmatpush.bf16.msra.mxu0 0
  %2678 = vmatpush.bf16.msra.mxu0 0
  %2679 = vmatpush.bf16.msra.mxu0 0
  %2680 = vmatpush.bf16.msra.mxu0 0
  %2681 = vmatpush.bf16.msra.mxu0 0
  %2682 = vmatpush.bf16.msra.mxu0 0
  %2683 = vmatpush.bf16.msra.mxu0 0
  %2684 = vmatpush.bf16.msra.mxu0 %v2656
  %2685 = vmatmul.bf16.gmra.mxu0 %v2650
  %v2686 = vpop.f32.mrf.mxu0
  %v2687 = vadd.f32 0.0, %v2686
  %v2688 = vpop.f32.mrf.mxu0
  %2689 = vdwg.mxu0
  %2690 = vmatpush.bf16.msra.mxu0 0
  %2691 = vmatpush.bf16.msra.mxu0 0
  %2692 = vmatpush.bf16.msra.mxu0 0
  %2693 = vmatpush.bf16.msra.mxu0 0
  %2694 = vmatpush.bf16.msra.mxu0 0
  %2695 = vmatpush.bf16.msra.mxu0 0
  %2696 = vmatpush.bf16.msra.mxu0 0
  %2697 = vmatpush.bf16.msra.mxu0 %v2659
  %2698 = vmatmul.bf16.gmra.mxu0 %v2650
  %v2699 = vpop.f32.mrf.mxu0
  %v2700 = vadd.f32 0.0, %v2699
  %v2701 = vpop.f32.mrf.mxu0
  %2702 = vdwg.mxu0
  %2703 = vmatpush.bf16.msra.mxu0 0
  %2704 = vmatpush.bf16.msra.mxu0 0
  %2705 = vmatpush.bf16.msra.mxu0 0
  %2706 = vmatpush.bf16.msra.mxu0 0
  %2707 = vmatpush.bf16.msra.mxu0 0
  %2708 = vmatpush.bf16.msra.mxu0 0
  %2709 = vmatpush.bf16.msra.mxu0 0
  %2710 = vmatpush.bf16.msra.mxu0 %v2662
  %2711 = vmatmul.bf16.gmra.mxu0 %v2650
  %v2712 = vpop.f32.mrf.mxu0
  %v2713 = vadd.f32 0.0, %v2712
  %v2714 = vpop.f32.mrf.mxu0
  %2715 = vdwg.mxu0
  %v2716 = vadd.f32 %v2624, %v2674
  %v2717 = vadd.f32 %v2625, %v2687
  %v2718 = vadd.f32 %v2626, %v2700
  %v2719 = vadd.f32 %v2627, %v2713
  %s2720 = scalar_lea.vmem %s5, 96
  %v2721 = vld [vmem:[%s2720] ss:$8 sm:$0xf]
  %v2723 = vperm.slane %v2721, 0
  %v2724 = vperm.slane %v2721, 1
  %v2725 = vperm.slane %v2721, 2
  %v2726 = vperm.slane %v2721, 3
  %v2731 = vmul.f32 %v947, %v2723
  %v2732 = vmul.f32 %v946, %v2724
  %v2733 = vmul.f32 %v945, %v2725
  %v2734 = vmul.f32 %v948, %v2726
  %s2735 = scalar_lea.vmem %s4, 96
  %v2736 = vld [vmem:[%s2735] sm:$0xf]
  %v2737 = vpack.c.bf16 %v2731, %v2731
  %v2738 = vpack.c.bf16 %v2732, %v2732
  %v2739 = vpack.c.bf16 %v2733, %v2733
  %v2740 = vpack.c.bf16 %v2734, %v2734
  %v2742 = vsel %vm339, %v2736, 0
  %v2745 = vsel %vm50, %v2737, 0
  %v2748 = vsel %vm50, %v2738, 0
  %v2751 = vsel %vm50, %v2739, 0
  %v2754 = vsel %vm50, %v2740, 0
  %2756 = vmatpush.bf16.msra.mxu0 0
  %2757 = vmatpush.bf16.msra.mxu0 0
  %2758 = vmatpush.bf16.msra.mxu0 0
  %2759 = vmatpush.bf16.msra.mxu0 0
  %2760 = vmatpush.bf16.msra.mxu0 0
  %2761 = vmatpush.bf16.msra.mxu0 0
  %2762 = vmatpush.bf16.msra.mxu0 0
  %2763 = vmatpush.bf16.msra.mxu0 %v2745
  %2764 = vmatmul.bf16.gmra.mxu0 %v2742
  %v2765 = vpop.f32.mrf.mxu0
  %v2766 = vadd.f32 0.0, %v2765
  %v2767 = vpop.f32.mrf.mxu0
  %2768 = vdwg.mxu0
  %2769 = vmatpush.bf16.msra.mxu0 0
  %2770 = vmatpush.bf16.msra.mxu0 0
  %2771 = vmatpush.bf16.msra.mxu0 0
  %2772 = vmatpush.bf16.msra.mxu0 0
  %2773 = vmatpush.bf16.msra.mxu0 0
  %2774 = vmatpush.bf16.msra.mxu0 0
  %2775 = vmatpush.bf16.msra.mxu0 0
  %2776 = vmatpush.bf16.msra.mxu0 %v2748
  %2777 = vmatmul.bf16.gmra.mxu0 %v2742
  %v2778 = vpop.f32.mrf.mxu0
  %v2779 = vadd.f32 0.0, %v2778
  %v2780 = vpop.f32.mrf.mxu0
  %2781 = vdwg.mxu0
  %2782 = vmatpush.bf16.msra.mxu0 0
  %2783 = vmatpush.bf16.msra.mxu0 0
  %2784 = vmatpush.bf16.msra.mxu0 0
  %2785 = vmatpush.bf16.msra.mxu0 0
  %2786 = vmatpush.bf16.msra.mxu0 0
  %2787 = vmatpush.bf16.msra.mxu0 0
  %2788 = vmatpush.bf16.msra.mxu0 0
  %2789 = vmatpush.bf16.msra.mxu0 %v2751
  %2790 = vmatmul.bf16.gmra.mxu0 %v2742
  %v2791 = vpop.f32.mrf.mxu0
  %v2792 = vadd.f32 0.0, %v2791
  %v2793 = vpop.f32.mrf.mxu0
  %2794 = vdwg.mxu0
  %2795 = vmatpush.bf16.msra.mxu0 0
  %2796 = vmatpush.bf16.msra.mxu0 0
  %2797 = vmatpush.bf16.msra.mxu0 0
  %2798 = vmatpush.bf16.msra.mxu0 0
  %2799 = vmatpush.bf16.msra.mxu0 0
  %2800 = vmatpush.bf16.msra.mxu0 0
  %2801 = vmatpush.bf16.msra.mxu0 0
  %2802 = vmatpush.bf16.msra.mxu0 %v2754
  %2803 = vmatmul.bf16.gmra.mxu0 %v2742
  %v2804 = vpop.f32.mrf.mxu0
  %v2805 = vadd.f32 0.0, %v2804
  %v2806 = vpop.f32.mrf.mxu0
  %2807 = vdwg.mxu0
  %v2808 = vadd.f32 %v2716, %v2766
  %v2809 = vadd.f32 %v2717, %v2779
  %v2810 = vadd.f32 %v2718, %v2792
  %v2811 = vadd.f32 %v2719, %v2805
  %s2812 = scalar_lea.vmem %s5, 97
  %v2813 = vld [vmem:[%s2812] ss:$8 sm:$0xf]
  %v2815 = vperm.slane %v2813, 0
  %v2816 = vperm.slane %v2813, 1
  %v2817 = vperm.slane %v2813, 2
  %v2818 = vperm.slane %v2813, 3
  %v2823 = vmul.f32 %v1052, %v2815
  %v2824 = vmul.f32 %v1051, %v2816
  %v2825 = vmul.f32 %v1050, %v2817
  %v2826 = vmul.f32 %v1053, %v2818
  %s2827 = scalar_lea.vmem %s4, 100
  %v2828 = vld [vmem:[%s2827] sm:$0xf]
  %v2829 = vpack.c.bf16 %v2823, %v2823
  %v2830 = vpack.c.bf16 %v2824, %v2824
  %v2831 = vpack.c.bf16 %v2825, %v2825
  %v2832 = vpack.c.bf16 %v2826, %v2826
  %v2834 = vsel %vm339, %v2828, 0
  %v2837 = vsel %vm50, %v2829, 0
  %v2840 = vsel %vm50, %v2830, 0
  %v2843 = vsel %vm50, %v2831, 0
  %v2846 = vsel %vm50, %v2832, 0
  %2848 = vmatpush.bf16.msra.mxu0 0
  %2849 = vmatpush.bf16.msra.mxu0 0
  %2850 = vmatpush.bf16.msra.mxu0 0
  %2851 = vmatpush.bf16.msra.mxu0 0
  %2852 = vmatpush.bf16.msra.mxu0 0
  %2853 = vmatpush.bf16.msra.mxu0 0
  %2854 = vmatpush.bf16.msra.mxu0 0
  %2855 = vmatpush.bf16.msra.mxu0 %v2837
  %2856 = vmatmul.bf16.gmra.mxu0 %v2834
  %v2857 = vpop.f32.mrf.mxu0
  %v2858 = vadd.f32 0.0, %v2857
  %v2859 = vpop.f32.mrf.mxu0
  %2860 = vdwg.mxu0
  %2861 = vmatpush.bf16.msra.mxu0 0
  %2862 = vmatpush.bf16.msra.mxu0 0
  %2863 = vmatpush.bf16.msra.mxu0 0
  %2864 = vmatpush.bf16.msra.mxu0 0
  %2865 = vmatpush.bf16.msra.mxu0 0
  %2866 = vmatpush.bf16.msra.mxu0 0
  %2867 = vmatpush.bf16.msra.mxu0 0
  %2868 = vmatpush.bf16.msra.mxu0 %v2840
  %2869 = vmatmul.bf16.gmra.mxu0 %v2834
  %v2870 = vpop.f32.mrf.mxu0
  %v2871 = vadd.f32 0.0, %v2870
  %v2872 = vpop.f32.mrf.mxu0
  %2873 = vdwg.mxu0
  %2874 = vmatpush.bf16.msra.mxu0 0
  %2875 = vmatpush.bf16.msra.mxu0 0
  %2876 = vmatpush.bf16.msra.mxu0 0
  %2877 = vmatpush.bf16.msra.mxu0 0
  %2878 = vmatpush.bf16.msra.mxu0 0
  %2879 = vmatpush.bf16.msra.mxu0 0
  %2880 = vmatpush.bf16.msra.mxu0 0
  %2881 = vmatpush.bf16.msra.mxu0 %v2843
  %2882 = vmatmul.bf16.gmra.mxu0 %v2834
  %v2883 = vpop.f32.mrf.mxu0
  %v2884 = vadd.f32 0.0, %v2883
  %v2885 = vpop.f32.mrf.mxu0
  %2886 = vdwg.mxu0
  %2887 = vmatpush.bf16.msra.mxu0 0
  %2888 = vmatpush.bf16.msra.mxu0 0
  %2889 = vmatpush.bf16.msra.mxu0 0
  %2890 = vmatpush.bf16.msra.mxu0 0
  %2891 = vmatpush.bf16.msra.mxu0 0
  %2892 = vmatpush.bf16.msra.mxu0 0
  %2893 = vmatpush.bf16.msra.mxu0 0
  %2894 = vmatpush.bf16.msra.mxu0 %v2846
  %2895 = vmatmul.bf16.gmra.mxu0 %v2834
  %v2896 = vpop.f32.mrf.mxu0
  %v2897 = vadd.f32 0.0, %v2896
  %v2898 = vpop.f32.mrf.mxu0
  %2899 = vdwg.mxu0
  %v2900 = vadd.f32 %v2808, %v2858
  %v2901 = vadd.f32 %v2809, %v2871
  %v2902 = vadd.f32 %v2810, %v2884
  %v2903 = vadd.f32 %v2811, %v2897
  %s2904 = scalar_lea.vmem %s5, 98
  %v2905 = vld [vmem:[%s2904] ss:$8 sm:$0xf]
  %v2907 = vperm.slane %v2905, 0
  %v2908 = vperm.slane %v2905, 1
  %v2909 = vperm.slane %v2905, 2
  %v2910 = vperm.slane %v2905, 3
  %v2915 = vmul.f32 %v1157, %v2907
  %v2916 = vmul.f32 %v1156, %v2908
  %v2917 = vmul.f32 %v1155, %v2909
  %v2918 = vmul.f32 %v1158, %v2910
  %s2919 = scalar_lea.vmem %s4, 104
  %v2920 = vld [vmem:[%s2919] sm:$0xf]
  %v2921 = vpack.c.bf16 %v2915, %v2915
  %v2922 = vpack.c.bf16 %v2916, %v2916
  %v2923 = vpack.c.bf16 %v2917, %v2917
  %v2924 = vpack.c.bf16 %v2918, %v2918
  %v2926 = vsel %vm339, %v2920, 0
  %v2929 = vsel %vm50, %v2921, 0
  %v2932 = vsel %vm50, %v2922, 0
  %v2935 = vsel %vm50, %v2923, 0
  %v2938 = vsel %vm50, %v2924, 0
  %2940 = vmatpush.bf16.msra.mxu0 0
  %2941 = vmatpush.bf16.msra.mxu0 0
  %2942 = vmatpush.bf16.msra.mxu0 0
  %2943 = vmatpush.bf16.msra.mxu0 0
  %2944 = vmatpush.bf16.msra.mxu0 0
  %2945 = vmatpush.bf16.msra.mxu0 0
  %2946 = vmatpush.bf16.msra.mxu0 0
  %2947 = vmatpush.bf16.msra.mxu0 %v2929
  %2948 = vmatmul.bf16.gmra.mxu0 %v2926
  %v2949 = vpop.f32.mrf.mxu0
  %v2950 = vadd.f32 0.0, %v2949
  %v2951 = vpop.f32.mrf.mxu0
  %2952 = vdwg.mxu0
  %2953 = vmatpush.bf16.msra.mxu0 0
  %2954 = vmatpush.bf16.msra.mxu0 0
  %2955 = vmatpush.bf16.msra.mxu0 0
  %2956 = vmatpush.bf16.msra.mxu0 0
  %2957 = vmatpush.bf16.msra.mxu0 0
  %2958 = vmatpush.bf16.msra.mxu0 0
  %2959 = vmatpush.bf16.msra.mxu0 0
  %2960 = vmatpush.bf16.msra.mxu0 %v2932
  %2961 = vmatmul.bf16.gmra.mxu0 %v2926
  %v2962 = vpop.f32.mrf.mxu0
  %v2963 = vadd.f32 0.0, %v2962
  %v2964 = vpop.f32.mrf.mxu0
  %2965 = vdwg.mxu0
  %2966 = vmatpush.bf16.msra.mxu0 0
  %2967 = vmatpush.bf16.msra.mxu0 0
  %2968 = vmatpush.bf16.msra.mxu0 0
  %2969 = vmatpush.bf16.msra.mxu0 0
  %2970 = vmatpush.bf16.msra.mxu0 0
  %2971 = vmatpush.bf16.msra.mxu0 0
  %2972 = vmatpush.bf16.msra.mxu0 0
  %2973 = vmatpush.bf16.msra.mxu0 %v2935
  %2974 = vmatmul.bf16.gmra.mxu0 %v2926
  %v2975 = vpop.f32.mrf.mxu0
  %v2976 = vadd.f32 0.0, %v2975
  %v2977 = vpop.f32.mrf.mxu0
  %2978 = vdwg.mxu0
  %2979 = vmatpush.bf16.msra.mxu0 0
  %2980 = vmatpush.bf16.msra.mxu0 0
  %2981 = vmatpush.bf16.msra.mxu0 0
  %2982 = vmatpush.bf16.msra.mxu0 0
  %2983 = vmatpush.bf16.msra.mxu0 0
  %2984 = vmatpush.bf16.msra.mxu0 0
  %2985 = vmatpush.bf16.msra.mxu0 0
  %2986 = vmatpush.bf16.msra.mxu0 %v2938
  %2987 = vmatmul.bf16.gmra.mxu0 %v2926
  %v2988 = vpop.f32.mrf.mxu0
  %v2989 = vadd.f32 0.0, %v2988
  %v2990 = vpop.f32.mrf.mxu0
  %2991 = vdwg.mxu0
  %v2992 = vadd.f32 %v2900, %v2950
  %v2993 = vadd.f32 %v2901, %v2963
  %v2994 = vadd.f32 %v2902, %v2976
  %v2995 = vadd.f32 %v2903, %v2989
  %2996 = vst [vmem:[%s7] sm:$0xff] %v2992
  %2997 = vst [vmem:[%s7 + $0x8] sm:$0xff] %v2993
  %2998 = vst [vmem:[%s7 + $0x10] sm:$0xff] %v2994
  %2999 = vst [vmem:[%s7 + $0x18] sm:$0xff] %v2995
  // Predicated region
  $region30: #{fully_con3d_forward.1} parent=0 // pred_check
    _
  $region31: #{fully_con3d_forward.1} parent=0 // pred_check_branch
    %3001 = sbr.rel (0) target = $region33
  $region32: #{fully_con3d_forward.1} parent=0 // pred_region
    _
  $region33: #{fully_con3d_forward.1} parent=0 // pred_fallthru
    _
  // Predicated region
  $region34: #{fully_con3d_forward.1} parent=0 // pred_check
    _
  $region35: #{fully_con3d_forward.1} parent=0 // pred_check_branch
    %3003 = sbr.rel (0) target = $region37
  $region36: #{fully_con3d_forward.1} parent=0 // pred_region
    _
  $region37: #{fully_con3d_forward.1} parent=0 // pred_fallthru
    _

</llo_original>
